<compile_context>
chip_gen: v7x
topology: tpu7x:2x2x1
jax: 0.10.0
libtpu: 0.0.40
codegen_flags: <defaults>
</compile_context>

<pallas_src>
import jax
import jax.numpy as jnp
from jax.experimental import pallas as pl
from jax.experimental.pallas import tpu as pltpu

EPS = 1e-5  # PyTorch GroupNorm default eps


def _make_kernel(H, W, Cin, Cout):
    WCin, WCout = W * Cin, W * Cout
    HI = jax.lax.Precision.HIGHEST

    def kernel(x_ref, w1_ref, w2_ref, wres_ref, prm_ref, g_ref, gt_ref, ss_ref,
               out_ref):
        x = x_ref[0]                                          # (H, W*Cin)
        row_ids = jax.lax.broadcasted_iota(jnp.int32, (H, WCout), 0)
        gfw = g_ref[...]                                      # (W*Cout, groups) * 1/n_grp
        gbk = gt_ref[...]                                     # (groups, W*Cout)

        def conv3(lhs, w_ref):
            # 'SAME' 3x3 conv = three banded matmuls (kx taps + W padding are
            # folded into the bands).  The ky=0 / ky=2 row taps are re-aligned
            # with XLU rolls; the wrapped row of each rolled term is zeroed,
            # which implements the H zero-padding.
            a = jnp.dot(lhs, w_ref[0], preferred_element_type=jnp.float32)
            b = jnp.dot(lhs, w_ref[1], preferred_element_type=jnp.float32)
            c = jnp.dot(lhs, w_ref[2], preferred_element_type=jnp.float32)
            a = jnp.where(row_ids == 0, 0.0, pltpu.roll(a, shift=1, axis=0))
            c = jnp.where(row_ids == H - 1, 0.0,
                          pltpu.roll(c, shift=H - 1, axis=0))   # == roll by -1
            return a + b + c

        def groupnorm(h, gamma, beta):
            # Centered two-pass variance (do NOT regress to E[x^2]-E[x]^2).
            # Group stats via skinny indicator matmuls, pinned to HIGHEST
            # precision so the sums are effectively exact f32.
            s1 = jnp.sum(h, axis=0, keepdims=True)             # (1, W*Cout)
            m = jnp.dot(jnp.dot(s1, gfw, precision=HI,
                                preferred_element_type=jnp.float32),
                        gbk, precision=HI,
                        preferred_element_type=jnp.float32)    # group mean per lane
            d = h - m
            s2 = jnp.sum(d * d, axis=0, keepdims=True)
            v = jnp.dot(jnp.dot(s2, gfw, precision=HI,
                                preferred_element_type=jnp.float32),
                        gbk, precision=HI,
                        preferred_element_type=jnp.float32)    # group var per lane
            return d * (jax.lax.rsqrt(v + EPS) * gamma) + beta

        # ---- block1: conv3x3 -> GroupNorm -> x*(scale+1)+shift -> SiLU ----
        h = conv3(x, w1_ref) + prm_ref[0:1, :]
        h = groupnorm(h, prm_ref[1:2, :], prm_ref[2:3, :])
        ss = ss_ref[0]                                        # (2, W*Cout)
        h = h * (ss[0:1, :] + 1.0) + ss[1:2, :]
        h = h * jax.nn.sigmoid(h)                             # SiLU

        # ---- residual 1x1 conv: block-diagonal band, reuses the x slab ----
        res = jnp.dot(x, wres_ref[...],
                      preferred_element_type=jnp.float32) + prm_ref[6:7, :]

        # ---- block2: conv3x3 -> GroupNorm -> SiLU ----
        h2 = conv3(h, w2_ref) + prm_ref[3:4, :]
        h2 = groupnorm(h2, prm_ref[4:5, :], prm_ref[5:6, :])
        h2 = h2 * jax.nn.sigmoid(h2)

        # Lane-dense output store: (1, H, W*Cout), W*Cout a multiple of 128 at
        # the test shape -> fully unmasked vst.
        out_ref[...] = (h2 + res).reshape(1, H, WCout)

    return kernel


def _conv3x3_band(w_oihw, W):
    """torch (Cout, Cin, 3, 3) -> (3, W*Cin, W*Cout) banded matrices.

    Band[ky][p*Cin+ci, x*Cout+co] = w[co, ci, ky, p-x+1] if 0 <= p-x+1 < 3 else 0,
    so that sum_ky row_shift(ky)(lane-packed x @ Band[ky]) is the 'SAME' 3x3
    convolution, lane-packed as (H, W*Cout).  kx taps and W zero-padding are
    folded into the band (handled by omission).
    """
    Cout, Cin, KH, KW = w_oihw.shape
    w_t = jnp.transpose(w_oihw, (2, 3, 1, 0)).astype(jnp.float32)  # (ky, kx, Cin, Cout)
    p = jnp.arange(W)
    x = jnp.arange(W)
    kx = jnp.arange(KW)
    sel = (p[None, :, None] == x[None, None, :] + kx[:, None, None] - 1)
    sel = sel.astype(jnp.float32)                                  # (KW, W, W)
    band = jnp.einsum('dpx,edio->epixo', sel, w_t,
                      precision=jax.lax.Precision.HIGHEST)         # (KH, W, Cin, W, Cout)
    return band.reshape(KH, W * Cin, W * Cout)


def resnet_block_forward(x_nchw, time_emb, params, *, groups):
    N, Cin, H, W = x_nchw.shape
    Cout = params["b1"].shape[0]
    WCin, WCout = W * Cin, W * Cout
    cpg = Cout // groups

    # ---- glue: time-embedding MLP, lane packing, band construction ----
    t = jax.nn.silu(time_emb) @ params["mlp_w"] + params["mlp_b"]    # (N, 2*Cout)
    row = lambda v: jnp.tile(v.astype(jnp.float32).reshape(1, -1), (1, W))
    ss = jnp.stack([jnp.tile(t[:, :Cout], (1, W)),                   # scale
                    jnp.tile(t[:, Cout:], (1, W))], axis=1)          # shift -> (N, 2, W*Cout)

    # NCHW -> lane-packed (N, H, W*Cin); no H padding (handled by rolls in-kernel).
    x_pk = jnp.transpose(x_nchw, (0, 2, 3, 1)).reshape(N, H, WCin)

    w1 = _conv3x3_band(params["w1"], W)                              # (3, W*Cin,  W*Cout)
    w2 = _conv3x3_band(params["w2"], W)                              # (3, W*Cout, W*Cout)
    wres = jnp.kron(jnp.eye(W, dtype=jnp.float32),
                    params["wres"][:, :, 0, 0].T.astype(jnp.float32))  # (W*Cin, W*Cout)

    # Skinny group indicator: (W*Cout, groups) with 1/elements-per-group folded
    # in, and its transpose for the broadcast-back.
    gid = jnp.tile(jnp.arange(Cout) // cpg, W)                       # (W*Cout,)
    g_ind = (gid[:, None] == jnp.arange(groups)[None, :]).astype(jnp.float32)
    g_fwd = g_ind / float(cpg * H * W)                               # (W*Cout, groups)
    g_bck = g_ind.T                                                  # (groups, W*Cout)

    # Consolidated per-channel rows (one DMA instead of seven):
    # 0=b1 1=g1 2=be1 3=b2 4=g2 5=be2 6=bres 7=pad
    prm = jnp.concatenate([
        row(params["b1"]), row(params["g1"]), row(params["be1"]),
        row(params["b2"]), row(params["g2"]), row(params["be2"]),
        row(params["bres"]), jnp.zeros((1, WCout), jnp.float32)], axis=0)  # (8, W*Cout)

    kernel = _make_kernel(H, W, Cin, Cout)

    def cspec(shape):
        nd = len(shape)
        return pl.BlockSpec(shape, lambda n, _nd=nd: (0,) * _nd)

    out_pk = pl.pallas_call(
        kernel,
        out_shape=jax.ShapeDtypeStruct((N, H, WCout), jnp.float32),
        grid=(N,),
        in_specs=[
            pl.BlockSpec((1, H, WCin), lambda n: (n, 0, 0)),   # x (lane-packed)
            cspec((3, WCin, WCout)),                           # conv1 bands
            cspec((3, WCout, WCout)),                          # conv2 bands
            cspec((WCin, WCout)),                              # residual 1x1 band
            cspec((8, WCout)),                                 # consolidated param rows
            cspec((WCout, groups)),                            # group indicator (scaled)
            cspec((groups, WCout)),                            # group broadcast-back
            pl.BlockSpec((1, 2, WCout), lambda n: (n, 0, 0)),  # scale/shift (per batch)
        ],
        out_specs=pl.BlockSpec((1, H, WCout), lambda n: (n, 0, 0)),
        compiler_params=pltpu.CompilerParams(
            # batch elements are fully independent -> shard across v7x's 2 TCs
            dimension_semantics=("parallel",)),
    )(x_pk, w1, w2, wres, prm, g_fwd, g_bck, ss)

    # lane-packed (N, H, W*Cout) -> NCHW (contiguous reshape + boundary transpose)
    return jnp.transpose(out_pk.reshape(N, H, W, Cout), (0, 3, 1, 2))


# ------------------------ pure-JAX reference (NCHW) -------------------------
def ref_forward(x, time_emb, params, groups):
    Cout = params["b1"].shape[0]
    t = jax.nn.silu(time_emb) @ params["mlp_w"] + params["mlp_b"]
    scale, shift = t[:, :Cout], t[:, Cout:]

    def conv(x, w, b):
        y = jax.lax.conv_general_dilated(
            x, w, (1, 1), "SAME", dimension_numbers=("NCHW", "OIHW", "NCHW"))
        return y + b[None, :, None, None]

    def gn(x, gamma, beta):
        N, C, H, W = x.shape
        xg = x.reshape(N, groups, C // groups, H, W)
        m = xg.mean(axis=(2, 3, 4), keepdims=True)
        v = xg.var(axis=(2, 3, 4), keepdims=True)
        xn = ((xg - m) / jnp.sqrt(v + EPS)).reshape(N, C, H, W)
        return xn * gamma[None, :, None, None] + beta[None, :, None, None]

    h = conv(x, params["w1"], params["b1"])
    h = gn(h, params["g1"], params["be1"])
    h = h * (scale[:, :, None, None] + 1.0) + shift[:, :, None, None]
    h = jax.nn.silu(h)
    h = conv(h, params["w2"], params["b2"])
    h = gn(h, params["g2"], params["be2"])
    h = jax.nn.silu(h)
    res = conv(x, params["wres"], params["bres"])
    return h + res


if __name__ == "__main__":
    N, Cin, Cout, H, W = 2, 4, 8, 16, 16
    groups = 4
    t_dim = 16

    key = jax.random.PRNGKey(0)
    ks = jax.random.split(key, 14)
    nrm = lambda k, s, sc=0.1: sc * jax.random.normal(k, s, jnp.float32)

    params = {
        "w1":    nrm(ks[0], (Cout, Cin, 3, 3)),
        "b1":    nrm(ks[1], (Cout,)),
        "g1":    1.0 + nrm(ks[2], (Cout,)),
        "be1":   nrm(ks[3], (Cout,)),
        "w2":    nrm(ks[4], (Cout, Cout, 3, 3)),
        "b2":    nrm(ks[5], (Cout,)),
        "g2":    1.0 + nrm(ks[6], (Cout,)),
        "be2":   nrm(ks[7], (Cout,)),
        "wres":  nrm(ks[8], (Cout, Cin, 1, 1)),
        "bres":  nrm(ks[9], (Cout,)),
        "mlp_w": nrm(ks[10], (t_dim, 2 * Cout)),
        "mlp_b": nrm(ks[11], (2 * Cout,)),
    }

    x = jax.random.normal(ks[12], (N, Cin, H, W), jnp.float32)
    time_emb = jax.random.normal(ks[13], (N, t_dim), jnp.float32)

    out = resnet_block_forward(x, time_emb, params, groups=groups)
    out = jax.block_until_ready(out)

    ref = jax.block_until_ready(ref_forward(x, time_emb, params, groups))
    assert out.shape == (N, Cout, H, W), out.shape
    assert jnp.allclose(out, ref, rtol=1e-3, atol=1e-3), float(
        jnp.max(jnp.abs(out - ref)))

    print("KERNEL_OK")
</pallas_src>

<mosaic_0001>
module attributes {stable_mosaic.version = 11 : i64} {
  func.func @kernel(%arg0: i32, %arg1: memref<1x16x64xf32, #tpu.memory_space<vmem>>, %arg2: memref<3x64x128xf32, #tpu.memory_space<vmem>>, %arg3: memref<3x128x128xf32, #tpu.memory_space<vmem>>, %arg4: memref<64x128xf32, #tpu.memory_space<vmem>>, %arg5: memref<8x128xf32, #tpu.memory_space<vmem>>, %arg6: memref<128x4xf32, #tpu.memory_space<vmem>>, %arg7: memref<4x128xf32, #tpu.memory_space<vmem>>, %arg8: memref<1x2x128xf32, #tpu.memory_space<vmem>>, %arg9: memref<1x16x128xf32, #tpu.memory_space<vmem>>) attributes {dimension_semantics = [#tpu.dimension_semantics<parallel>], iteration_bounds = array<i64: 2>, scalar_prefetch = 0 : i64, scratch_operands = 0 : i64, tpu.core_type = #tpu.core_type<tc>, window_params = [{transform_indices = @transform_0, window_bounds = array<i64: 1, 16, 64>}, {pipeline_mode = #tpu.pipeline_mode<synchronous>, transform_indices = @transform_1, window_bounds = array<i64: 3, 64, 128>}, {pipeline_mode = #tpu.pipeline_mode<synchronous>, transform_indices = @transform_2, window_bounds = array<i64: 3, 128, 128>}, {pipeline_mode = #tpu.pipeline_mode<synchronous>, transform_indices = @transform_3, window_bounds = array<i64: 64, 128>}, {pipeline_mode = #tpu.pipeline_mode<synchronous>, transform_indices = @transform_4, window_bounds = array<i64: 8, 128>}, {pipeline_mode = #tpu.pipeline_mode<synchronous>, transform_indices = @transform_5, window_bounds = array<i64: 128, 4>}, {pipeline_mode = #tpu.pipeline_mode<synchronous>, transform_indices = @transform_6, window_bounds = array<i64: 4, 128>}, {transform_indices = @transform_7, window_bounds = array<i64: 1, 2, 128>}, {transform_indices = @transform_8, window_bounds = array<i64: 1, 16, 128>}]} {
    %c0 = arith.constant 0 : index
    %c0_0 = arith.constant 0 : index
    %c0_1 = arith.constant 0 : index
    %0 = vector.load %arg1[%c0, %c0_0, %c0_1] : memref<1x16x64xf32, #tpu.memory_space<vmem>>, vector<1x16x64xf32>
    %1 = vector.shape_cast %0 : vector<1x16x64xf32> to vector<16x64xf32>
    %2 = tpu.iota {dimensions = array<i32: 0>} : vector<16x128xi32>
    %c0_2 = arith.constant 0 : index
    %c0_3 = arith.constant 0 : index
    %3 = vector.load %arg6[%c0_2, %c0_3] : memref<128x4xf32, #tpu.memory_space<vmem>>, vector<128x4xf32>
    %c0_4 = arith.constant 0 : index
    %c0_5 = arith.constant 0 : index
    %4 = vector.load %arg7[%c0_4, %c0_5] : memref<4x128xf32, #tpu.memory_space<vmem>>, vector<4x128xf32>
    %c0_6 = arith.constant 0 : index
    %c0_7 = arith.constant 0 : index
    %c0_8 = arith.constant 0 : index
    %5 = vector.load %arg2[%c0_6, %c0_7, %c0_8] : memref<3x64x128xf32, #tpu.memory_space<vmem>>, vector<1x64x128xf32>
    %6 = vector.shape_cast %5 : vector<1x64x128xf32> to vector<64x128xf32>
    %cst = arith.constant dense<0.000000e+00> : vector<16x128xf32>
    %7 = tpu.matmul %1, %6, %cst {dimension_numbers = #tpu.dot_dimension_numbers<[1], [0], [0], [1], [0, 0, 1, 1], [], []>} : vector<16x64xf32>, vector<64x128xf32>, vector<16x128xf32> -> vector<16x128xf32>
    %c1 = arith.constant 1 : index
    %c0_9 = arith.constant 0 : index
    %c0_10 = arith.constant 0 : index
    %8 = vector.load %arg2[%c1, %c0_9, %c0_10] : memref<3x64x128xf32, #tpu.memory_space<vmem>>, vector<1x64x128xf32>
    %9 = vector.shape_cast %8 : vector<1x64x128xf32> to vector<64x128xf32>
    %cst_11 = arith.constant dense<0.000000e+00> : vector<16x128xf32>
    %10 = tpu.matmul %1, %9, %cst_11 {dimension_numbers = #tpu.dot_dimension_numbers<[1], [0], [0], [1], [0, 0, 1, 1], [], []>} : vector<16x64xf32>, vector<64x128xf32>, vector<16x128xf32> -> vector<16x128xf32>
    %c2 = arith.constant 2 : index
    %c0_12 = arith.constant 0 : index
    %c0_13 = arith.constant 0 : index
    %11 = vector.load %arg2[%c2, %c0_12, %c0_13] : memref<3x64x128xf32, #tpu.memory_space<vmem>>, vector<1x64x128xf32>
    %12 = vector.shape_cast %11 : vector<1x64x128xf32> to vector<64x128xf32>
    %cst_14 = arith.constant dense<0.000000e+00> : vector<16x128xf32>
    %13 = tpu.matmul %1, %12, %cst_14 {dimension_numbers = #tpu.dot_dimension_numbers<[1], [0], [0], [1], [0, 0, 1, 1], [], []>} : vector<16x64xf32>, vector<64x128xf32>, vector<16x128xf32> -> vector<16x128xf32>
    %c0_i32 = arith.constant 0 : i32
    %14 = vector.broadcast %c0_i32 : i32 to vector<16x128xi32>
    %15 = arith.cmpi eq, %2, %14 : vector<16x128xi32>
    %c1_i32 = arith.constant 1 : i32
    %16 = tpu.dynamic_rotate %7 by %c1_i32 dim 0 : vector<16x128xf32>, i32 -> vector<16x128xf32>
    %cst_15 = arith.constant 0.000000e+00 : f32
    %17 = vector.broadcast %cst_15 : f32 to vector<16x128xf32>
    %18 = arith.select %15, %17, %16 : vector<16x128xi1>, vector<16x128xf32>
    %c15_i32 = arith.constant 15 : i32
    %19 = vector.broadcast %c15_i32 : i32 to vector<16x128xi32>
    %20 = arith.cmpi eq, %2, %19 : vector<16x128xi32>
    %c15_i32_16 = arith.constant 15 : i32
    %21 = tpu.dynamic_rotate %13 by %c15_i32_16 dim 0 : vector<16x128xf32>, i32 -> vector<16x128xf32>
    %cst_17 = arith.constant 0.000000e+00 : f32
    %22 = vector.broadcast %cst_17 : f32 to vector<16x128xf32>
    %23 = arith.select %20, %22, %21 : vector<16x128xi1>, vector<16x128xf32>
    %24 = arith.addf %18, %10 : vector<16x128xf32>
    %25 = arith.addf %24, %23 : vector<16x128xf32>
    %c0_18 = arith.constant 0 : index
    %c0_19 = arith.constant 0 : index
    %26 = vector.load %arg5[%c0_18, %c0_19] : memref<8x128xf32, #tpu.memory_space<vmem>>, vector<1x128xf32>
    %27 = vector.broadcast %26 : vector<1x128xf32> to vector<16x128xf32>
    %28 = arith.addf %25, %27 : vector<16x128xf32>
    %c1_20 = arith.constant 1 : index
    %c0_21 = arith.constant 0 : index
    %29 = vector.load %arg5[%c1_20, %c0_21] : memref<8x128xf32, #tpu.memory_space<vmem>>, vector<1x128xf32>
    %c2_22 = arith.constant 2 : index
    %c0_23 = arith.constant 0 : index
    %30 = vector.load %arg5[%c2_22, %c0_23] : memref<8x128xf32, #tpu.memory_space<vmem>>, vector<1x128xf32>
    %cst_24 = arith.constant dense<0.000000e+00> : vector<128xf32>
    %31 = vector.multi_reduction <add>, %28, %cst_24 [0] : vector<16x128xf32> to vector<128xf32>
    %32 = vector.shape_cast %31 : vector<128xf32> to vector<1x128xf32>
    %cst_25 = arith.constant dense<0.000000e+00> : vector<1x4xf32>
    %33 = tpu.matmul %32, %3, %cst_25 {dimension_numbers = #tpu.dot_dimension_numbers<[1], [0], [0], [1], [0, 0, 1, 1], [], []>, precision = #tpu.contract_precision<fp32>} : vector<1x128xf32>, vector<128x4xf32>, vector<1x4xf32> -> vector<1x4xf32>
    %cst_26 = arith.constant dense<0.000000e+00> : vector<1x128xf32>
    %34 = tpu.matmul %33, %4, %cst_26 {dimension_numbers = #tpu.dot_dimension_numbers<[1], [0], [0], [1], [0, 0, 1, 1], [], []>, precision = #tpu.contract_precision<fp32>} : vector<1x4xf32>, vector<4x128xf32>, vector<1x128xf32> -> vector<1x128xf32>
    %35 = vector.broadcast %34 : vector<1x128xf32> to vector<16x128xf32>
    %36 = arith.subf %28, %35 : vector<16x128xf32>
    %37 = arith.mulf %36, %36 : vector<16x128xf32>
    %cst_27 = arith.constant dense<0.000000e+00> : vector<128xf32>
    %38 = vector.multi_reduction <add>, %37, %cst_27 [0] : vector<16x128xf32> to vector<128xf32>
    %39 = vector.shape_cast %38 : vector<128xf32> to vector<1x128xf32>
    %cst_28 = arith.constant dense<0.000000e+00> : vector<1x4xf32>
    %40 = tpu.matmul %39, %3, %cst_28 {dimension_numbers = #tpu.dot_dimension_numbers<[1], [0], [0], [1], [0, 0, 1, 1], [], []>, precision = #tpu.contract_precision<fp32>} : vector<1x128xf32>, vector<128x4xf32>, vector<1x4xf32> -> vector<1x4xf32>
    %cst_29 = arith.constant dense<0.000000e+00> : vector<1x128xf32>
    %41 = tpu.matmul %40, %4, %cst_29 {dimension_numbers = #tpu.dot_dimension_numbers<[1], [0], [0], [1], [0, 0, 1, 1], [], []>, precision = #tpu.contract_precision<fp32>} : vector<1x4xf32>, vector<4x128xf32>, vector<1x128xf32> -> vector<1x128xf32>
    %cst_30 = arith.constant 9.99999974E-6 : f32
    %42 = vector.broadcast %cst_30 : f32 to vector<1x128xf32>
    %43 = arith.addf %41, %42 : vector<1x128xf32>
    %44 = math.rsqrt %43 : vector<1x128xf32>
    %45 = arith.mulf %44, %29 : vector<1x128xf32>
    %46 = vector.broadcast %45 : vector<1x128xf32> to vector<16x128xf32>
    %47 = arith.mulf %36, %46 : vector<16x128xf32>
    %48 = vector.broadcast %30 : vector<1x128xf32> to vector<16x128xf32>
    %49 = arith.addf %47, %48 : vector<16x128xf32>
    %c0_31 = arith.constant 0 : index
    %c0_32 = arith.constant 0 : index
    %c0_33 = arith.constant 0 : index
    %50 = vector.load %arg8[%c0_31, %c0_32, %c0_33] : memref<1x2x128xf32, #tpu.memory_space<vmem>>, vector<1x2x128xf32>
    %51 = vector.shape_cast %50 : vector<1x2x128xf32> to vector<2x128xf32>
    %52 = vector.extract_strided_slice %51 {offsets = [0, 0], sizes = [1, 128], strides = [1, 1]} : vector<2x128xf32> to vector<1x128xf32>
    %cst_34 = arith.constant 1.000000e+00 : f32
    %53 = vector.broadcast %cst_34 : f32 to vector<1x128xf32>
    %54 = arith.addf %52, %53 : vector<1x128xf32>
    %55 = vector.broadcast %54 : vector<1x128xf32> to vector<16x128xf32>
    %56 = arith.mulf %49, %55 : vector<16x128xf32>
    %57 = vector.extract_strided_slice %51 {offsets = [1, 0], sizes = [1, 128], strides = [1, 1]} : vector<2x128xf32> to vector<1x128xf32>
    %58 = vector.broadcast %57 : vector<1x128xf32> to vector<16x128xf32>
    %59 = arith.addf %56, %58 : vector<16x128xf32>
    %60 = arith.negf %59 : vector<16x128xf32>
    %61 = math.exp %60 : vector<16x128xf32>
    %cst_35 = arith.constant 1.000000e+00 : f32
    %62 = vector.broadcast %cst_35 : f32 to vector<16x128xf32>
    %63 = arith.addf %62, %61 : vector<16x128xf32>
    %64 = arith.divf %62, %63 : vector<16x128xf32>
    %65 = arith.mulf %59, %64 : vector<16x128xf32>
    %c0_36 = arith.constant 0 : index
    %c0_37 = arith.constant 0 : index
    %66 = vector.load %arg4[%c0_36, %c0_37] : memref<64x128xf32, #tpu.memory_space<vmem>>, vector<64x128xf32>
    %cst_38 = arith.constant dense<0.000000e+00> : vector<16x128xf32>
    %67 = tpu.matmul %1, %66, %cst_38 {dimension_numbers = #tpu.dot_dimension_numbers<[1], [0], [0], [1], [0, 0, 1, 1], [], []>} : vector<16x64xf32>, vector<64x128xf32>, vector<16x128xf32> -> vector<16x128xf32>
    %c6 = arith.constant 6 : index
    %c0_39 = arith.constant 0 : index
    %68 = vector.load %arg5[%c6, %c0_39] : memref<8x128xf32, #tpu.memory_space<vmem>>, vector<1x128xf32>
    %69 = vector.broadcast %68 : vector<1x128xf32> to vector<16x128xf32>
    %70 = arith.addf %67, %69 : vector<16x128xf32>
    %c0_40 = arith.constant 0 : index
    %c0_41 = arith.constant 0 : index
    %c0_42 = arith.constant 0 : index
    %71 = vector.load %arg3[%c0_40, %c0_41, %c0_42] : memref<3x128x128xf32, #tpu.memory_space<vmem>>, vector<1x128x128xf32>
    %72 = vector.shape_cast %71 : vector<1x128x128xf32> to vector<128x128xf32>
    %cst_43 = arith.constant dense<0.000000e+00> : vector<16x128xf32>
    %73 = tpu.matmul %65, %72, %cst_43 {dimension_numbers = #tpu.dot_dimension_numbers<[1], [0], [0], [1], [0, 0, 1, 1], [], []>} : vector<16x128xf32>, vector<128x128xf32>, vector<16x128xf32> -> vector<16x128xf32>
    %c1_44 = arith.constant 1 : index
    %c0_45 = arith.constant 0 : index
    %c0_46 = arith.constant 0 : index
    %74 = vector.load %arg3[%c1_44, %c0_45, %c0_46] : memref<3x128x128xf32, #tpu.memory_space<vmem>>, vector<1x128x128xf32>
    %75 = vector.shape_cast %74 : vector<1x128x128xf32> to vector<128x128xf32>
    %cst_47 = arith.constant dense<0.000000e+00> : vector<16x128xf32>
    %76 = tpu.matmul %65, %75, %cst_47 {dimension_numbers = #tpu.dot_dimension_numbers<[1], [0], [0], [1], [0, 0, 1, 1], [], []>} : vector<16x128xf32>, vector<128x128xf32>, vector<16x128xf32> -> vector<16x128xf32>
    %c2_48 = arith.constant 2 : index
    %c0_49 = arith.constant 0 : index
    %c0_50 = arith.constant 0 : index
    %77 = vector.load %arg3[%c2_48, %c0_49, %c0_50] : memref<3x128x128xf32, #tpu.memory_space<vmem>>, vector<1x128x128xf32>
    %78 = vector.shape_cast %77 : vector<1x128x128xf32> to vector<128x128xf32>
    %cst_51 = arith.constant dense<0.000000e+00> : vector<16x128xf32>
    %79 = tpu.matmul %65, %78, %cst_51 {dimension_numbers = #tpu.dot_dimension_numbers<[1], [0], [0], [1], [0, 0, 1, 1], [], []>} : vector<16x128xf32>, vector<128x128xf32>, vector<16x128xf32> -> vector<16x128xf32>
    %c0_i32_52 = arith.constant 0 : i32
    %80 = vector.broadcast %c0_i32_52 : i32 to vector<16x128xi32>
    %81 = arith.cmpi eq, %2, %80 : vector<16x128xi32>
    %c1_i32_53 = arith.constant 1 : i32
    %82 = tpu.dynamic_rotate %73 by %c1_i32_53 dim 0 : vector<16x128xf32>, i32 -> vector<16x128xf32>
    %cst_54 = arith.constant 0.000000e+00 : f32
    %83 = vector.broadcast %cst_54 : f32 to vector<16x128xf32>
    %84 = arith.select %81, %83, %82 : vector<16x128xi1>, vector<16x128xf32>
    %c15_i32_55 = arith.constant 15 : i32
    %85 = vector.broadcast %c15_i32_55 : i32 to vector<16x128xi32>
    %86 = arith.cmpi eq, %2, %85 : vector<16x128xi32>
    %c15_i32_56 = arith.constant 15 : i32
    %87 = tpu.dynamic_rotate %79 by %c15_i32_56 dim 0 : vector<16x128xf32>, i32 -> vector<16x128xf32>
    %cst_57 = arith.constant 0.000000e+00 : f32
    %88 = vector.broadcast %cst_57 : f32 to vector<16x128xf32>
    %89 = arith.select %86, %88, %87 : vector<16x128xi1>, vector<16x128xf32>
    %90 = arith.addf %84, %76 : vector<16x128xf32>
    %91 = arith.addf %90, %89 : vector<16x128xf32>
    %c3 = arith.constant 3 : index
    %c0_58 = arith.constant 0 : index
    %92 = vector.load %arg5[%c3, %c0_58] : memref<8x128xf32, #tpu.memory_space<vmem>>, vector<1x128xf32>
    %93 = vector.broadcast %92 : vector<1x128xf32> to vector<16x128xf32>
    %94 = arith.addf %91, %93 : vector<16x128xf32>
    %c4 = arith.constant 4 : index
    %c0_59 = arith.constant 0 : index
    %95 = vector.load %arg5[%c4, %c0_59] : memref<8x128xf32, #tpu.memory_space<vmem>>, vector<1x128xf32>
    %c5 = arith.constant 5 : index
    %c0_60 = arith.constant 0 : index
    %96 = vector.load %arg5[%c5, %c0_60] : memref<8x128xf32, #tpu.memory_space<vmem>>, vector<1x128xf32>
    %cst_61 = arith.constant dense<0.000000e+00> : vector<128xf32>
    %97 = vector.multi_reduction <add>, %94, %cst_61 [0] : vector<16x128xf32> to vector<128xf32>
    %98 = vector.shape_cast %97 : vector<128xf32> to vector<1x128xf32>
    %cst_62 = arith.constant dense<0.000000e+00> : vector<1x4xf32>
    %99 = tpu.matmul %98, %3, %cst_62 {dimension_numbers = #tpu.dot_dimension_numbers<[1], [0], [0], [1], [0, 0, 1, 1], [], []>, precision = #tpu.contract_precision<fp32>} : vector<1x128xf32>, vector<128x4xf32>, vector<1x4xf32> -> vector<1x4xf32>
    %cst_63 = arith.constant dense<0.000000e+00> : vector<1x128xf32>
    %100 = tpu.matmul %99, %4, %cst_63 {dimension_numbers = #tpu.dot_dimension_numbers<[1], [0], [0], [1], [0, 0, 1, 1], [], []>, precision = #tpu.contract_precision<fp32>} : vector<1x4xf32>, vector<4x128xf32>, vector<1x128xf32> -> vector<1x128xf32>
    %101 = vector.broadcast %100 : vector<1x128xf32> to vector<16x128xf32>
    %102 = arith.subf %94, %101 : vector<16x128xf32>
    %103 = arith.mulf %102, %102 : vector<16x128xf32>
    %cst_64 = arith.constant dense<0.000000e+00> : vector<128xf32>
    %104 = vector.multi_reduction <add>, %103, %cst_64 [0] : vector<16x128xf32> to vector<128xf32>
    %105 = vector.shape_cast %104 : vector<128xf32> to vector<1x128xf32>
    %cst_65 = arith.constant dense<0.000000e+00> : vector<1x4xf32>
    %106 = tpu.matmul %105, %3, %cst_65 {dimension_numbers = #tpu.dot_dimension_numbers<[1], [0], [0], [1], [0, 0, 1, 1], [], []>, precision = #tpu.contract_precision<fp32>} : vector<1x128xf32>, vector<128x4xf32>, vector<1x4xf32> -> vector<1x4xf32>
    %cst_66 = arith.constant dense<0.000000e+00> : vector<1x128xf32>
    %107 = tpu.matmul %106, %4, %cst_66 {dimension_numbers = #tpu.dot_dimension_numbers<[1], [0], [0], [1], [0, 0, 1, 1], [], []>, precision = #tpu.contract_precision<fp32>} : vector<1x4xf32>, vector<4x128xf32>, vector<1x128xf32> -> vector<1x128xf32>
    %cst_67 = arith.constant 9.99999974E-6 : f32
    %108 = vector.broadcast %cst_67 : f32 to vector<1x128xf32>
    %109 = arith.addf %107, %108 : vector<1x128xf32>
    %110 = math.rsqrt %109 : vector<1x128xf32>
    %111 = arith.mulf %110, %95 : vector<1x128xf32>
    %112 = vector.broadcast %111 : vector<1x128xf32> to vector<16x128xf32>
    %113 = arith.mulf %102, %112 : vector<16x128xf32>
    %114 = vector.broadcast %96 : vector<1x128xf32> to vector<16x128xf32>
    %115 = arith.addf %113, %114 : vector<16x128xf32>
    %116 = arith.negf %115 : vector<16x128xf32>
    %117 = math.exp %116 : vector<16x128xf32>
    %cst_68 = arith.constant 1.000000e+00 : f32
    %118 = vector.broadcast %cst_68 : f32 to vector<16x128xf32>
    %119 = arith.addf %118, %117 : vector<16x128xf32>
    %120 = arith.divf %118, %119 : vector<16x128xf32>
    %121 = arith.mulf %115, %120 : vector<16x128xf32>
    %122 = arith.addf %121, %70 : vector<16x128xf32>
    %123 = vector.shape_cast %122 : vector<16x128xf32> to vector<1x16x128xf32>
    %c0_69 = arith.constant 0 : index
    %c0_70 = arith.constant 0 : index
    %c0_71 = arith.constant 0 : index
    %124 = vector.load %arg9[%c0_69, %c0_70, %c0_71] : memref<1x16x128xf32, #tpu.memory_space<vmem>>, vector<1x16x128xf32>
    tpu.vector_store %arg9[%c0_69, %c0_70, %c0_71], %123 {strides = array<i32>} : memref<1x16x128xf32, #tpu.memory_space<vmem>>, vector<1x16x128xf32>,
    return
  }
  func.func @transform_0(%arg0: i32) -> (i32, i32, i32) {
    %c0_i32 = arith.constant 0 : i32
    %c0_i32_0 = arith.constant 0 : i32
    %c0_i32_1 = arith.constant 0 : i32
    return %arg0, %c0_i32, %c0_i32_0 : i32, i32, i32
  }
  func.func @transform_1(%arg0: i32) -> (i32, i32, i32) {
    %c0_i32 = arith.constant 0 : i32
    %c0_i32_0 = arith.constant 0 : i32
    %c0_i32_1 = arith.constant 0 : i32
    %c0_i32_2 = arith.constant 0 : i32
    return %c0_i32, %c0_i32_0, %c0_i32_1 : i32, i32, i32
  }
  func.func @transform_2(%arg0: i32) -> (i32, i32, i32) {
    %c0_i32 = arith.constant 0 : i32
    %c0_i32_0 = arith.constant 0 : i32
    %c0_i32_1 = arith.constant 0 : i32
    %c0_i32_2 = arith.constant 0 : i32
    return %c0_i32, %c0_i32_0, %c0_i32_1 : i32, i32, i32
  }
  func.func @transform_3(%arg0: i32) -> (i32, i32) {
    %c0_i32 = arith.constant 0 : i32
    %c0_i32_0 = arith.constant 0 : i32
    %c0_i32_1 = arith.constant 0 : i32
    return %c0_i32, %c0_i32_0 : i32, i32
  }
  func.func @transform_4(%arg0: i32) -> (i32, i32) {
    %c0_i32 = arith.constant 0 : i32
    %c0_i32_0 = arith.constant 0 : i32
    %c0_i32_1 = arith.constant 0 : i32
    return %c0_i32, %c0_i32_0 : i32, i32
  }
  func.func @transform_5(%arg0: i32) -> (i32, i32) {
    %c0_i32 = arith.constant 0 : i32
    %c0_i32_0 = arith.constant 0 : i32
    %c0_i32_1 = arith.constant 0 : i32
    return %c0_i32, %c0_i32_0 : i32, i32
  }
  func.func @transform_6(%arg0: i32) -> (i32, i32) {
    %c0_i32 = arith.constant 0 : i32
    %c0_i32_0 = arith.constant 0 : i32
    %c0_i32_1 = arith.constant 0 : i32
    return %c0_i32, %c0_i32_0 : i32, i32
  }
  func.func @transform_7(%arg0: i32) -> (i32, i32, i32) {
    %c0_i32 = arith.constant 0 : i32
    %c0_i32_0 = arith.constant 0 : i32
    %c0_i32_1 = arith.constant 0 : i32
    return %arg0, %c0_i32, %c0_i32_0 : i32, i32, i32
  }
  func.func @transform_8(%arg0: i32) -> (i32, i32, i32) {
    %c0_i32 = arith.constant 0 : i32
    %c0_i32_0 = arith.constant 0 : i32
    %c0_i32_1 = arith.constant 0 : i32
    return %arg0, %c0_i32, %c0_i32_0 : i32, i32, i32
  }
}

</mosaic_0001>

<llo_original>
// kernel: tpu_custom_call.1
$region0: #{tpu_custom_call.1}
  #allocation0 [shape = 'u32[]', space=smem, size = 0x4, offset = 0x4, fixed_abs, tag = 'smem constant byte address 0x4 - core index']
  #allocation1 [shape = 'u32[144,128]{1,0:T(1,128)}', space=vmem, size = 0x12000, scoped, tag = 'internal scratch']
  %s0 = inlined_call_operand.vmem [shape: f32[2,16,64], index: 0, kind: input, shape index: {}]
  %s1 = inlined_call_operand.hbm [shape: f32[3,64,128], index: 1, kind: input, shape index: {}]
  %s2 = inlined_call_operand.hbm [shape: f32[3,128,128], index: 2, kind: input, shape index: {}]
  %s3 = inlined_call_operand.vmem [shape: f32[64,128], index: 3, kind: input, shape index: {}]
  %s4 = inlined_call_operand.vmem [shape: f32[8,128], index: 4, kind: input, shape index: {}]
  %s5 = inlined_call_operand.vmem [shape: f32[128,4], index: 5, kind: input, shape index: {}]
  %s6 = inlined_call_operand.vmem [shape: f32[4,128], index: 6, kind: input, shape index: {}]
  %s7 = inlined_call_operand.vmem [shape: f32[2,2,128], index: 7, kind: input, shape index: {}]
  %s8 = inlined_call_operand.hbm [shape: f32[2,16,128], index: 8, kind: output, shape index: {}]
  %s9 = sld [smem:[#allocation0]]
  $region73: #{tpu_custom_call.1} parent=0
    _
  %s11 = ssub.s32 1, %s9
  %s12 = scalar_select 0, %s11, %s9
  $region1: #{tpu_custom_call.1} parent=0
    #allocation2 [shape = 'u8[98304]{0}', space=vmem, size = 0x18000, scoped, tag = 'input window, operand 1, single buffered']
    #allocation3 [shape = 's32[2]{0}', space=sflag, size = 0x8, scoped, tag = 'scoped memory for tpu_custom_call.1']
    #allocation4 [shape = 's32[2]{0}', space=sflag, size = 0x8, scoped, tag = 'scoped memory for tpu_custom_call.1']
    #allocation5 [shape = 'u8[196608]{0}', space=vmem, size = 0x30000, scoped, tag = 'input window, operand 2, single buffered']
    #allocation6 [shape = 's32[1]{0}', space=sflag, size = 0x4, scoped, tag = 'scoped memory for tpu_custom_call.1']
    #allocation7 [shape = 'u8[16384]{0}', space=vmem, size = 0x4000, scoped, tag = 'output window, operand 0']
    %13 = vsyncpa [#allocation3], 0
    %14 = vsyncpa [#allocation6], 0
    %15 = vsyncpa [#allocation4], 0
    %s16 = scalar_lea.sflag [#allocation4], 1
    %17 = vsyncpa %s16, 0
    loop: start=0, step=1, limit=4
    $region2: #{tpu_custom_call.1} parent=1 // loop_pre_header
      _
    $region3: #{tpu_custom_call.1} parent=1 // loop_header
      %s19 = sphi 0, %s23
      %p20 = scmp.ge.s32.totalorder %s19, 4
      %s29 = sphi 0, %s31
      %s32 = sphi 0, %s29
      %s33 = sphi 0, %s32
      %s49 = sphi 0, %s33
      %s53 = sphi 0, %s53
      %s55 = sphi 0, %s53
      %s56 = sphi 0, %s55
      %s70 = sphi 0, %s56
      %s74 = sphi 0, %s74
      %s76 = sphi 0, %s74
      %s77 = sphi 0, %s76
      %s91 = sphi 0, %s77
      %s95 = sphi 0, %s95
      %s97 = sphi 0, %s95
      %s98 = sphi 0, %s97
      %s112 = sphi 0, %s98
      %s116 = sphi 0, %s116
      %s118 = sphi 0, %s116
      %s119 = sphi 0, %s118
      %s133 = sphi 0, %s119
      %s137 = sphi 0, %s137
      %s139 = sphi 0, %s137
      %s140 = sphi 0, %s139
      %s154 = sphi 0, %s140
      %s158 = sphi 0, %s158
      %s160 = sphi 0, %s158
      %s161 = sphi 0, %s160
      %s175 = sphi 0, %s161
      %s181 = sphi 0, %s183
      %s184 = sphi 0, %s181
      %s185 = sphi 0, %s184
      %s201 = sphi 0, %s185
      %s207 = sphi 0, %s209
      %s210 = sphi 0, %s207
      %s211 = sphi 0, %s210
      %s227 = sphi 0, %s211
    $region4: #{tpu_custom_call.1} parent=1 // loop_header_branch
      %22 = sbr.rel (%p20) target = $region8
    $region5: #{tpu_custom_call.1} parent=1 // loop_body
      %s24 = ssub.s32 %s19, 1
      %s25 = ssub.s32 %s19, 2
      %s26 = sadd.s32 %s19, 1
      %s27 = ssub.s32 %s19, %s26
      %p28 = scmp.eq.s32.totalorder %s27, 0
      %s30 = sadd.s32 %s29, 1
      %s31 = scalar_select %p28, %s29, %s30
      %p34 = pneg %p28
      %p35 = scmp.eq.s32.totalorder %s19, 1
      %p36 = por %p34, %p35
      %p37 = scmp.ne.s32.totalorder %s29, %s32
      %p38 = scmp.eq.s32.totalorder %s19, 0
      %p39 = por %p37, %p38
      %p40 = scmp.ne.s32.totalorder %s29, %s32
      %p41 = scmp.eq.s32.totalorder %s24, 1
      %p42 = por %p40, %p41
      %p43 = scmp.ne.s32.totalorder %s32, %s33
      %p44 = scmp.eq.s32.totalorder %s24, 0
      %p45 = por %p43, %p44
      %p46 = scmp.ne.s32.totalorder %s32, %s33
      %p47 = scmp.eq.s32.totalorder %s25, 1
      %p48 = por %p46, %p47
      %p50 = scmp.ne.s32.totalorder %s33, %s49
      %p51 = scmp.eq.s32.totalorder %s25, 0
      %p52 = por %p50, %p51
      %s54 = sadd.s32 %s53, 1
      %p57 = scmp.eq.s32.totalorder %s19, 1
      %p58 = scmp.ne.s32.totalorder %s53, %s55
      %p59 = scmp.eq.s32.totalorder %s19, 0
      %p60 = por %p58, %p59
      %p61 = scmp.ne.s32.totalorder %s53, %s55
      %p62 = scmp.eq.s32.totalorder %s24, 1
      %p63 = por %p61, %p62
      %p64 = scmp.ne.s32.totalorder %s55, %s56
      %p65 = scmp.eq.s32.totalorder %s24, 0
      %p66 = por %p64, %p65
      %p67 = scmp.ne.s32.totalorder %s55, %s56
      %p68 = scmp.eq.s32.totalorder %s25, 1
      %p69 = por %p67, %p68
      %p71 = scmp.ne.s32.totalorder %s56, %s70
      %p72 = scmp.eq.s32.totalorder %s25, 0
      %p73 = por %p71, %p72
      %s75 = sadd.s32 %s74, 1
      %p78 = scmp.eq.s32.totalorder %s19, 1
      %p79 = scmp.ne.s32.totalorder %s74, %s76
      %p80 = scmp.eq.s32.totalorder %s19, 0
      %p81 = por %p79, %p80
      %p82 = scmp.ne.s32.totalorder %s74, %s76
      %p83 = scmp.eq.s32.totalorder %s24, 1
      %p84 = por %p82, %p83
      %p85 = scmp.ne.s32.totalorder %s76, %s77
      %p86 = scmp.eq.s32.totalorder %s24, 0
      %p87 = por %p85, %p86
      %p88 = scmp.ne.s32.totalorder %s76, %s77
      %p89 = scmp.eq.s32.totalorder %s25, 1
      %p90 = por %p88, %p89
      %p92 = scmp.ne.s32.totalorder %s77, %s91
      %p93 = scmp.eq.s32.totalorder %s25, 0
      %p94 = por %p92, %p93
      %s96 = sadd.s32 %s95, 1
      %p99 = scmp.eq.s32.totalorder %s19, 1
      %p100 = scmp.ne.s32.totalorder %s95, %s97
      %p101 = scmp.eq.s32.totalorder %s19, 0
      %p102 = por %p100, %p101
      %p103 = scmp.ne.s32.totalorder %s95, %s97
      %p104 = scmp.eq.s32.totalorder %s24, 1
      %p105 = por %p103, %p104
      %p106 = scmp.ne.s32.totalorder %s97, %s98
      %p107 = scmp.eq.s32.totalorder %s24, 0
      %p108 = por %p106, %p107
      %p109 = scmp.ne.s32.totalorder %s97, %s98
      %p110 = scmp.eq.s32.totalorder %s25, 1
      %p111 = por %p109, %p110
      %p113 = scmp.ne.s32.totalorder %s98, %s112
      %p114 = scmp.eq.s32.totalorder %s25, 0
      %p115 = por %p113, %p114
      %s117 = sadd.s32 %s116, 1
      %p120 = scmp.eq.s32.totalorder %s19, 1
      %p121 = scmp.ne.s32.totalorder %s116, %s118
      %p122 = scmp.eq.s32.totalorder %s19, 0
      %p123 = por %p121, %p122
      %p124 = scmp.ne.s32.totalorder %s116, %s118
      %p125 = scmp.eq.s32.totalorder %s24, 1
      %p126 = por %p124, %p125
      %p127 = scmp.ne.s32.totalorder %s118, %s119
      %p128 = scmp.eq.s32.totalorder %s24, 0
      %p129 = por %p127, %p128
      %p130 = scmp.ne.s32.totalorder %s118, %s119
      %p131 = scmp.eq.s32.totalorder %s25, 1
      %p132 = por %p130, %p131
      %p134 = scmp.ne.s32.totalorder %s119, %s133
      %p135 = scmp.eq.s32.totalorder %s25, 0
      %p136 = por %p134, %p135
      %s138 = sadd.s32 %s137, 1
      %p141 = scmp.eq.s32.totalorder %s19, 1
      %p142 = scmp.ne.s32.totalorder %s137, %s139
      %p143 = scmp.eq.s32.totalorder %s19, 0
      %p144 = por %p142, %p143
      %p145 = scmp.ne.s32.totalorder %s137, %s139
      %p146 = scmp.eq.s32.totalorder %s24, 1
      %p147 = por %p145, %p146
      %p148 = scmp.ne.s32.totalorder %s139, %s140
      %p149 = scmp.eq.s32.totalorder %s24, 0
      %p150 = por %p148, %p149
      %p151 = scmp.ne.s32.totalorder %s139, %s140
      %p152 = scmp.eq.s32.totalorder %s25, 1
      %p153 = por %p151, %p152
      %p155 = scmp.ne.s32.totalorder %s140, %s154
      %p156 = scmp.eq.s32.totalorder %s25, 0
      %p157 = por %p155, %p156
      %s159 = sadd.s32 %s158, 1
      %p162 = scmp.eq.s32.totalorder %s19, 1
      %p163 = scmp.ne.s32.totalorder %s158, %s160
      %p164 = scmp.eq.s32.totalorder %s19, 0
      %p165 = por %p163, %p164
      %p166 = scmp.ne.s32.totalorder %s158, %s160
      %p167 = scmp.eq.s32.totalorder %s24, 1
      %p168 = por %p166, %p167
      %p169 = scmp.ne.s32.totalorder %s160, %s161
      %p170 = scmp.eq.s32.totalorder %s24, 0
      %p171 = por %p169, %p170
      %p172 = scmp.ne.s32.totalorder %s160, %s161
      %p173 = scmp.eq.s32.totalorder %s25, 1
      %p174 = por %p172, %p173
      %p176 = scmp.ne.s32.totalorder %s161, %s175
      %p177 = scmp.eq.s32.totalorder %s25, 0
      %p178 = por %p176, %p177
      %s179 = ssub.s32 %s19, %s26
      %p180 = scmp.eq.s32.totalorder %s179, 0
      %s182 = sadd.s32 %s181, 1
      %s183 = scalar_select %p180, %s181, %s182
      %p186 = pneg %p180
      %p187 = scmp.eq.s32.totalorder %s19, 1
      %p188 = por %p186, %p187
      %p189 = scmp.ne.s32.totalorder %s181, %s184
      %p190 = scmp.eq.s32.totalorder %s19, 0
      %p191 = por %p189, %p190
      %p192 = scmp.ne.s32.totalorder %s181, %s184
      %p193 = scmp.eq.s32.totalorder %s24, 1
      %p194 = por %p192, %p193
      %p195 = scmp.ne.s32.totalorder %s184, %s185
      %p196 = scmp.eq.s32.totalorder %s24, 0
      %p197 = por %p195, %p196
      %p198 = scmp.ne.s32.totalorder %s184, %s185
      %p199 = scmp.eq.s32.totalorder %s25, 1
      %p200 = por %p198, %p199
      %p202 = scmp.ne.s32.totalorder %s185, %s201
      %p203 = scmp.eq.s32.totalorder %s25, 0
      %p204 = por %p202, %p203
      %s205 = ssub.s32 %s19, %s26
      %p206 = scmp.eq.s32.totalorder %s205, 0
      %s208 = sadd.s32 %s207, 1
      %s209 = scalar_select %p206, %s207, %s208
      %p212 = pneg %p206
      %p213 = scmp.eq.s32.totalorder %s19, 1
      %p214 = por %p212, %p213
      %p215 = scmp.ne.s32.totalorder %s207, %s210
      %p216 = scmp.eq.s32.totalorder %s19, 0
      %p217 = por %p215, %p216
      %p218 = scmp.ne.s32.totalorder %s207, %s210
      %p219 = scmp.eq.s32.totalorder %s24, 1
      %p220 = por %p218, %p219
      %p221 = scmp.ne.s32.totalorder %s210, %s211
      %p222 = scmp.eq.s32.totalorder %s24, 0
      %p223 = por %p221, %p222
      %p224 = scmp.ne.s32.totalorder %s210, %s211
      %p225 = scmp.eq.s32.totalorder %s25, 1
      %p226 = por %p224, %p225
      %p228 = scmp.ne.s32.totalorder %s211, %s227
      %p229 = scmp.eq.s32.totalorder %s25, 0
      %p230 = por %p228, %p229
      %p231 = scmp.le.s32.totalorder 1, %s19
      %p232 = scmp.lt.s32.totalorder %s19, 3
      %p233 = pnand %p231, %p232
      %p234 = pneg %p233
      // Predicated region
      $region9: #{tpu_custom_call.1} parent=5 // pred_check
        _
      $region10: #{tpu_custom_call.1} parent=5 // pred_check_branch
        %236 = sbr.rel (%p233) target = $region12
      $region11: #{tpu_custom_call.1} parent=5 // pred_region
        %s237 = ssub.s32 %s19, 1
        // Predicated region
        $region13: #{tpu_custom_call.1} parent=11 // pred_check
          %p238 = pneg %p66
        $region14: #{tpu_custom_call.1} parent=11 // pred_check_branch
          %240 = sbr.rel (%p238) target = $region16
        $region15: #{tpu_custom_call.1} parent=11 // pred_region
          %s242 = ssub.s32 3072, 3072
          %243 = vsyncadd [#allocation3], %s242
          %s244 = sshll.u32 [#allocation2], 4
          %s245 = int_to_ptr.vmem [resolvable:$true] %s244
          %250 = dma.hbm_to_vmem [thread:$0]  %s1, 3072, %s245, [#allocation3], 128, 128, 8
        $region16: #{tpu_custom_call.1} parent=11 // pred_fallthru
          _
        // Predicated region
        $region17: #{tpu_custom_call.1} parent=11 // pred_check
          %p251 = pneg %p87
        $region18: #{tpu_custom_call.1} parent=11 // pred_check_branch
          %253 = sbr.rel (%p251) target = $region20
        $region19: #{tpu_custom_call.1} parent=11 // pred_region
          %s255 = ssub.s32 6144, 6144
          %256 = vsyncadd [#allocation6], %s255
          %s257 = sshll.u32 [#allocation5], 4
          %s258 = int_to_ptr.vmem [resolvable:$true] %s257
          %263 = dma.hbm_to_vmem [thread:$0]  %s2, 6144, %s258, [#allocation6], 128, 128, 8
        $region20: #{tpu_custom_call.1} parent=11 // pred_fallthru
          _
        // Predicated region
        $region21: #{tpu_custom_call.1} parent=11 // pred_check
          %p264 = pneg %p108
        $region22: #{tpu_custom_call.1} parent=11 // pred_check_branch
          %266 = sbr.rel (%p264) target = $region24
        $region23: #{tpu_custom_call.1} parent=11 // pred_region
          _
        $region24: #{tpu_custom_call.1} parent=11 // pred_fallthru
          _
        // Predicated region
        $region25: #{tpu_custom_call.1} parent=11 // pred_check
          %p267 = pneg %p129
        $region26: #{tpu_custom_call.1} parent=11 // pred_check_branch
          %269 = sbr.rel (%p267) target = $region28
        $region27: #{tpu_custom_call.1} parent=11 // pred_region
          _
        $region28: #{tpu_custom_call.1} parent=11 // pred_fallthru
          _
        // Predicated region
        $region29: #{tpu_custom_call.1} parent=11 // pred_check
          %p270 = pneg %p150
        $region30: #{tpu_custom_call.1} parent=11 // pred_check_branch
          %272 = sbr.rel (%p270) target = $region32
        $region31: #{tpu_custom_call.1} parent=11 // pred_region
          _
        $region32: #{tpu_custom_call.1} parent=11 // pred_fallthru
          _
        // Predicated region
        $region33: #{tpu_custom_call.1} parent=11 // pred_check
          %p273 = pneg %p171
        $region34: #{tpu_custom_call.1} parent=11 // pred_check_branch
          %275 = sbr.rel (%p273) target = $region36
        $region35: #{tpu_custom_call.1} parent=11 // pred_region
          _
        $region36: #{tpu_custom_call.1} parent=11 // pred_fallthru
          _
      $region12: #{tpu_custom_call.1} parent=5 // pred_fallthru
        _
      %p276 = scmp.lt.s32.totalorder %s19, 2
      // Predicated region
      $region37: #{tpu_custom_call.1} parent=5 // pred_check
        %p277 = pneg %p276
      $region38: #{tpu_custom_call.1} parent=5 // pred_check_branch
        %279 = sbr.rel (%p277) target = $region40
      $region39: #{tpu_custom_call.1} parent=5 // pred_region
        // Predicated region
        $region41: #{tpu_custom_call.1} parent=39 // pred_check
          %p280 = pneg %p39
        $region42: #{tpu_custom_call.1} parent=39 // pred_check_branch
          %282 = sbr.rel (%p280) target = $region44
        $region43: #{tpu_custom_call.1} parent=39 // pred_region
          %p283 = scmp.lt.s32.totalorder %s19, 1
          %s284 = scalar_select %p283, %s19, 1
          %s285 = smul.addr %s284, 2
          %s286 = smul.addr %s285, 8
          %s287 = scalar_lea.vmem %s0, %s286
        $region44: #{tpu_custom_call.1} parent=39 // pred_fallthru
          _
        // Predicated region
        $region45: #{tpu_custom_call.1} parent=39 // pred_check
          %p288 = pneg %p191
        $region46: #{tpu_custom_call.1} parent=39 // pred_check_branch
          %290 = sbr.rel (%p288) target = $region48
        $region47: #{tpu_custom_call.1} parent=39 // pred_region
          %p291 = scmp.lt.s32.totalorder %s19, 1
          %s292 = scalar_select %p291, %s19, 1
          %s293 = smul.addr %s292, 2
          %s294 = scalar_lea.vmem %s7, %s293
        $region48: #{tpu_custom_call.1} parent=39 // pred_fallthru
          _
      $region40: #{tpu_custom_call.1} parent=5 // pred_fallthru
        _
      %p295 = scmp.le.s32.totalorder 1, %s19
      %p296 = scmp.lt.s32.totalorder %s19, 3
      %p297 = pnand %p295, %p296
      %p298 = pneg %p297
      // Predicated region
      $region49: #{tpu_custom_call.1} parent=5 // pred_check
        _
      $region50: #{tpu_custom_call.1} parent=5 // pred_check_branch
        %300 = sbr.rel (%p297) target = $region52
      $region51: #{tpu_custom_call.1} parent=5 // pred_region
        %s301 = ssub.s32 %s19, 1
        // Predicated region
        $region53: #{tpu_custom_call.1} parent=51 // pred_check
          %p302 = pneg %p66
        $region54: #{tpu_custom_call.1} parent=51 // pred_check_branch
          %304 = sbr.rel (%p302) target = $region56
        $region55: #{tpu_custom_call.1} parent=51 // pred_region
          %305 = dma.done [#allocation3], 3072
        $region56: #{tpu_custom_call.1} parent=51 // pred_fallthru
          _
        // Predicated region
        $region57: #{tpu_custom_call.1} parent=51 // pred_check
          %p306 = pneg %p87
        $region58: #{tpu_custom_call.1} parent=51 // pred_check_branch
          %308 = sbr.rel (%p306) target = $region60
        $region59: #{tpu_custom_call.1} parent=51 // pred_region
          %309 = dma.done [#allocation6], 6144
        $region60: #{tpu_custom_call.1} parent=51 // pred_fallthru
          _
        %p310 = scmp.lt.s32.totalorder %s24, 1
        %s311 = scalar_select %p310, %s24, 1
        %s312 = smul.addr %s311, 2
        %s313 = smul.addr %s312, 8
        %s314 = scalar_lea.vmem %s0, %s313
        %p315 = pneg %p45
        %p316 = pneg %p42
        %p317 = pneg %p66
        %p318 = pneg %p63
        %p319 = pneg %p87
        %p320 = pneg %p84
        %p321 = pneg %p108
        %p322 = pneg %p105
        %p323 = pneg %p129
        %p324 = pneg %p126
        %p325 = pneg %p150
        %p326 = pneg %p147
        %p327 = pneg %p171
        %p328 = pneg %p168
        %p329 = scmp.lt.s32.totalorder %s24, 1
        %s330 = scalar_select %p329, %s24, 1
        %s331 = smul.addr %s330, 2
        %s332 = scalar_lea.vmem %s7, %s331
        %p333 = pneg %p197
        %p334 = pneg %p194
        %p335 = pneg %p223
        %p336 = pneg %p220
        %s337 = sand.u32 %s210, 1
        %s338 = scalar_lea.sflag [#allocation4], %s337
        %s339 = sand.u32 %s210, 1
        %s340 = smul.addr %s339, 16
        %s341 = scalar_lea.vmem [#allocation7], %s340
        %p342 = scmp.lt.s32.totalorder %s24, 1
        %s343 = scalar_select %p342, %s24, 1
        %s344 = smul.addr %s343, 2
        %s345 = smul.addr %s344, 8
        %s346 = scalar_lea.vmem %s0, %s345
        %p347 = scmp.lt.s32.totalorder %s24, 1
        %s348 = scalar_select %p347, %s24, 1
        %s349 = smul.addr %s348, 2
        %s350 = scalar_lea.vmem %s7, %s349
        %v351 = vld [vmem:[%s346] sm:$0xff]
        %v352 = vld [vmem:[%s346 + $0x8] sm:$0xff]
        %v353 = vlaneseq
        %v354 = vshrl.u32 %v353, 7
        %v355 = vadd.s32 %v354, 8
        %v356 = vld [vmem:[%s5] sm:$0xff]
        %v357 = vld [vmem:[%s5 + $0x8] sm:$0xff]
        %v358 = vld [vmem:[%s5 + $0x10] sm:$0xff]
        %v359 = vld [vmem:[%s5 + $0x18] sm:$0xff]
        %v360 = vld [vmem:[%s5 + $0x20] sm:$0xff]
        %v361 = vld [vmem:[%s5 + $0x28] sm:$0xff]
        %v362 = vld [vmem:[%s5 + $0x30] sm:$0xff]
        %v363 = vld [vmem:[%s5 + $0x38] sm:$0xff]
        %v364 = vld [vmem:[%s5 + $0x40] sm:$0xff]
        %v365 = vld [vmem:[%s5 + $0x48] sm:$0xff]
        %v366 = vld [vmem:[%s5 + $0x50] sm:$0xff]
        %v367 = vld [vmem:[%s5 + $0x58] sm:$0xff]
        %v368 = vld [vmem:[%s5 + $0x60] sm:$0xff]
        %v369 = vld [vmem:[%s5 + $0x68] sm:$0xff]
        %v370 = vld [vmem:[%s5 + $0x70] sm:$0xff]
        %v371 = vld [vmem:[%s5 + $0x78] sm:$0xff]
        %v372 = vld [vmem:[%s6] sm:$0xf]
        %v373 = vld [vmem:[#allocation2] sm:$0xff]
        %v374 = vld [vmem:[#allocation2 + $0x8] sm:$0xff]
        %v375 = vld [vmem:[#allocation2 + $0x10] sm:$0xff]
        %v376 = vld [vmem:[#allocation2 + $0x18] sm:$0xff]
        %v377 = vld [vmem:[#allocation2 + $0x20] sm:$0xff]
        %v378 = vld [vmem:[#allocation2 + $0x28] sm:$0xff]
        %v379 = vld [vmem:[#allocation2 + $0x30] sm:$0xff]
        %v380 = vld [vmem:[#allocation2 + $0x38] sm:$0xff]
        %vm381 = vcmask 523264
        %v383 = vsel %vm381, %v351, 0
        %v386 = vsel %vm381, %v352, 0
        %388 = vmatprep.subr.mxu0 0.0
        %389 = vmatpush1.msra.mxu0 %v373
        %390 = vmatprep.subr.mxu0 0.0
        %391 = vmatpush1.msra.mxu0 %v374
        %392 = vmatprep.subr.mxu0 0.0
        %393 = vmatpush1.msra.mxu0 %v375
        %394 = vmatprep.subr.mxu0 0.0
        %395 = vmatpush1.msra.mxu0 %v376
        %396 = vmatprep.subr.mxu0 0.0
        %397 = vmatpush1.msra.mxu0 %v377
        %398 = vmatprep.subr.mxu0 0.0
        %399 = vmatpush1.msra.mxu0 %v378
        %400 = vmatprep.subr.mxu0 0.0
        %401 = vmatpush1.msra.mxu0 %v379
        %402 = vmatprep.subr.mxu0 0.0
        %403 = vmatpush1.msra.mxu0 %v380
        %404 = vmatprep.subr.mxu0 0.0
        %405 = vmatpush1.msra.mxu0 0.0
        %406 = vmatprep.subr.mxu0 0.0
        %407 = vmatpush1.msra.mxu0 0.0
        %408 = vmatprep.subr.mxu0 0.0
        %409 = vmatpush1.msra.mxu0 0.0
        %410 = vmatprep.subr.mxu0 0.0
        %411 = vmatpush1.msra.mxu0 0.0
        %412 = vmatprep.subr.mxu0 0.0
        %413 = vmatpush1.msra.mxu0 0.0
        %414 = vmatprep.subr.mxu0 0.0
        %415 = vmatpush1.msra.mxu0 0.0
        %416 = vmatprep.subr.mxu0 0.0
        %417 = vmatpush1.msra.mxu0 0.0
        %418 = vmatprep.subr.mxu0 0.0
        %419 = vmatpush1.msra.mxu0 0.0
        %420 = vmatprep.subr.mxu0 0.0
        %421 = vmatpush1.msra.mxu0 0.0
        %422 = vmatprep.subr.mxu0 0.0
        %423 = vmatpush1.msra.mxu0 0.0
        %424 = vmatprep.subr.mxu0 0.0
        %425 = vmatpush1.msra.mxu0 0.0
        %426 = vmatprep.subr.mxu0 0.0
        %427 = vmatpush1.msra.mxu0 0.0
        %428 = vmatprep.subr.mxu0 0.0
        %429 = vmatpush1.msra.mxu0 0.0
        %430 = vmatprep.subr.mxu0 0.0
        %431 = vmatpush1.msra.mxu0 0.0
        %432 = vmatprep.subr.mxu0 0.0
        %433 = vmatpush1.msra.mxu0 0.0
        %434 = vmatprep.subr.mxu0 0.0
        %435 = vmatpush1.msra.mxu0 0.0
        %436 = vmatprep.subr.mxu0 0.0
        %437 = vmatpush1.msra.mxu0 0.0
        %438 = vmatprep.subr.mxu0 0.0
        %439 = vmatpush1.msra.mxu0 0.0
        %440 = vmatprep.subr.mxu0 0.0
        %441 = vmatpush1.msra.mxu0 0.0
        %442 = vmatprep.subr.mxu0 0.0
        %443 = vmatpush1.msra.mxu0 0.0
        %444 = vmatprep.subr.mxu0 0.0
        %445 = vmatpush1.msra.mxu0 0.0
        %446 = vmatprep.subr.mxu0 0.0
        %447 = vmatpush1.msra.mxu0 0.0
        %448 = vmatprep.subr.mxu0 0.0
        %449 = vmatpush1.msra.mxu0 0.0
        %450 = vmatprep.subr.mxu0 0.0
        %451 = vmatpush1.msra.mxu0 0.0
        %452 = vmatprep.mubr.f32.mxu0 0.0
        %453 = vmatmul.mubr.f32.gmra.mrb[0].mxu0 %v383
        %v454 = vpop.f32.mrb[0].mxu0
        %v455 = vadd.f32 0.0, %v454
        %v456 = vpop.f32.mrb[0].mxu0
        %457 = vmatprep.mubr.f32.mxu0 0.0
        %458 = vmatmul.mubr.f32.gmra.mrb[0].mxu0 %v386
        %v459 = vpop.f32.mrb[0].mxu0
        %v460 = vadd.f32 0.0, %v459
        %v461 = vpop.f32.mrb[0].mxu0
        %462 = vdwg.mxu0
        %s463 = scalar_lea.vmem [#allocation2], 64
        %v464 = vld [vmem:[%s463] sm:$0xff]
        %v465 = vld [vmem:[%s463 + $0x8] sm:$0xff]
        %v466 = vld [vmem:[%s463 + $0x10] sm:$0xff]
        %v467 = vld [vmem:[%s463 + $0x18] sm:$0xff]
        %v468 = vld [vmem:[%s463 + $0x20] sm:$0xff]
        %v469 = vld [vmem:[%s463 + $0x28] sm:$0xff]
        %v470 = vld [vmem:[%s463 + $0x30] sm:$0xff]
        %v471 = vld [vmem:[%s463 + $0x38] sm:$0xff]
        %472 = vmatprep.subr.mxu0 0.0
        %473 = vmatpush1.msra.mxu0 %v464
        %474 = vmatprep.subr.mxu0 0.0
        %475 = vmatpush1.msra.mxu0 %v465
        %476 = vmatprep.subr.mxu0 0.0
        %477 = vmatpush1.msra.mxu0 %v466
        %478 = vmatprep.subr.mxu0 0.0
        %479 = vmatpush1.msra.mxu0 %v467
        %480 = vmatprep.subr.mxu0 0.0
        %481 = vmatpush1.msra.mxu0 %v468
        %482 = vmatprep.subr.mxu0 0.0
        %483 = vmatpush1.msra.mxu0 %v469
        %484 = vmatprep.subr.mxu0 0.0
        %485 = vmatpush1.msra.mxu0 %v470
        %486 = vmatprep.subr.mxu0 0.0
        %487 = vmatpush1.msra.mxu0 %v471
        %488 = vmatprep.subr.mxu0 0.0
        %489 = vmatpush1.msra.mxu0 0.0
        %490 = vmatprep.subr.mxu0 0.0
        %491 = vmatpush1.msra.mxu0 0.0
        %492 = vmatprep.subr.mxu0 0.0
        %493 = vmatpush1.msra.mxu0 0.0
        %494 = vmatprep.subr.mxu0 0.0
        %495 = vmatpush1.msra.mxu0 0.0
        %496 = vmatprep.subr.mxu0 0.0
        %497 = vmatpush1.msra.mxu0 0.0
        %498 = vmatprep.subr.mxu0 0.0
        %499 = vmatpush1.msra.mxu0 0.0
        %500 = vmatprep.subr.mxu0 0.0
        %501 = vmatpush1.msra.mxu0 0.0
        %502 = vmatprep.subr.mxu0 0.0
        %503 = vmatpush1.msra.mxu0 0.0
        %504 = vmatprep.subr.mxu0 0.0
        %505 = vmatpush1.msra.mxu0 0.0
        %506 = vmatprep.subr.mxu0 0.0
        %507 = vmatpush1.msra.mxu0 0.0
        %508 = vmatprep.subr.mxu0 0.0
        %509 = vmatpush1.msra.mxu0 0.0
        %510 = vmatprep.subr.mxu0 0.0
        %511 = vmatpush1.msra.mxu0 0.0
        %512 = vmatprep.subr.mxu0 0.0
        %513 = vmatpush1.msra.mxu0 0.0
        %514 = vmatprep.subr.mxu0 0.0
        %515 = vmatpush1.msra.mxu0 0.0
        %516 = vmatprep.subr.mxu0 0.0
        %517 = vmatpush1.msra.mxu0 0.0
        %518 = vmatprep.subr.mxu0 0.0
        %519 = vmatpush1.msra.mxu0 0.0
        %520 = vmatprep.subr.mxu0 0.0
        %521 = vmatpush1.msra.mxu0 0.0
        %522 = vmatprep.subr.mxu0 0.0
        %523 = vmatpush1.msra.mxu0 0.0
        %524 = vmatprep.subr.mxu0 0.0
        %525 = vmatpush1.msra.mxu0 0.0
        %526 = vmatprep.subr.mxu0 0.0
        %527 = vmatpush1.msra.mxu0 0.0
        %528 = vmatprep.subr.mxu0 0.0
        %529 = vmatpush1.msra.mxu0 0.0
        %530 = vmatprep.subr.mxu0 0.0
        %531 = vmatpush1.msra.mxu0 0.0
        %532 = vmatprep.subr.mxu0 0.0
        %533 = vmatpush1.msra.mxu0 0.0
        %534 = vmatprep.subr.mxu0 0.0
        %535 = vmatpush1.msra.mxu0 0.0
        %536 = vmatprep.mubr.f32.mxu0 0.0
        %537 = vmatmul.mubr.f32.gmra.mrb[0].mxu0 %v383
        %v538 = vpop.f32.mrb[0].mxu0
        %v539 = vadd.f32 0.0, %v538
        %v540 = vpop.f32.mrb[0].mxu0
        %541 = vmatprep.mubr.f32.mxu0 0.0
        %542 = vmatmul.mubr.f32.gmra.mrb[0].mxu0 %v386
        %v543 = vpop.f32.mrb[0].mxu0
        %v544 = vadd.f32 0.0, %v543
        %v545 = vpop.f32.mrb[0].mxu0
        %546 = vdwg.mxu0
        %s547 = scalar_lea.vmem [#allocation2], 128
        %v548 = vld [vmem:[%s547] sm:$0xff]
        %v549 = vld [vmem:[%s547 + $0x8] sm:$0xff]
        %v550 = vld [vmem:[%s547 + $0x10] sm:$0xff]
        %v551 = vld [vmem:[%s547 + $0x18] sm:$0xff]
        %v552 = vld [vmem:[%s547 + $0x20] sm:$0xff]
        %v553 = vld [vmem:[%s547 + $0x28] sm:$0xff]
        %v554 = vld [vmem:[%s547 + $0x30] sm:$0xff]
        %v555 = vld [vmem:[%s547 + $0x38] sm:$0xff]
        %556 = vmatprep.subr.mxu0 0.0
        %557 = vmatpush1.msra.mxu0 %v548
        %558 = vmatprep.subr.mxu0 0.0
        %559 = vmatpush1.msra.mxu0 %v549
        %560 = vmatprep.subr.mxu0 0.0
        %561 = vmatpush1.msra.mxu0 %v550
        %562 = vmatprep.subr.mxu0 0.0
        %563 = vmatpush1.msra.mxu0 %v551
        %564 = vmatprep.subr.mxu0 0.0
        %565 = vmatpush1.msra.mxu0 %v552
        %566 = vmatprep.subr.mxu0 0.0
        %567 = vmatpush1.msra.mxu0 %v553
        %568 = vmatprep.subr.mxu0 0.0
        %569 = vmatpush1.msra.mxu0 %v554
        %570 = vmatprep.subr.mxu0 0.0
        %571 = vmatpush1.msra.mxu0 %v555
        %572 = vmatprep.subr.mxu0 0.0
        %573 = vmatpush1.msra.mxu0 0.0
        %574 = vmatprep.subr.mxu0 0.0
        %575 = vmatpush1.msra.mxu0 0.0
        %576 = vmatprep.subr.mxu0 0.0
        %577 = vmatpush1.msra.mxu0 0.0
        %578 = vmatprep.subr.mxu0 0.0
        %579 = vmatpush1.msra.mxu0 0.0
        %580 = vmatprep.subr.mxu0 0.0
        %581 = vmatpush1.msra.mxu0 0.0
        %582 = vmatprep.subr.mxu0 0.0
        %583 = vmatpush1.msra.mxu0 0.0
        %584 = vmatprep.subr.mxu0 0.0
        %585 = vmatpush1.msra.mxu0 0.0
        %586 = vmatprep.subr.mxu0 0.0
        %587 = vmatpush1.msra.mxu0 0.0
        %588 = vmatprep.subr.mxu0 0.0
        %589 = vmatpush1.msra.mxu0 0.0
        %590 = vmatprep.subr.mxu0 0.0
        %591 = vmatpush1.msra.mxu0 0.0
        %592 = vmatprep.subr.mxu0 0.0
        %593 = vmatpush1.msra.mxu0 0.0
        %594 = vmatprep.subr.mxu0 0.0
        %595 = vmatpush1.msra.mxu0 0.0
        %596 = vmatprep.subr.mxu0 0.0
        %597 = vmatpush1.msra.mxu0 0.0
        %598 = vmatprep.subr.mxu0 0.0
        %599 = vmatpush1.msra.mxu0 0.0
        %600 = vmatprep.subr.mxu0 0.0
        %601 = vmatpush1.msra.mxu0 0.0
        %602 = vmatprep.subr.mxu0 0.0
        %603 = vmatpush1.msra.mxu0 0.0
        %604 = vmatprep.subr.mxu0 0.0
        %605 = vmatpush1.msra.mxu0 0.0
        %606 = vmatprep.subr.mxu0 0.0
        %607 = vmatpush1.msra.mxu0 0.0
        %608 = vmatprep.subr.mxu0 0.0
        %609 = vmatpush1.msra.mxu0 0.0
        %610 = vmatprep.subr.mxu0 0.0
        %611 = vmatpush1.msra.mxu0 0.0
        %612 = vmatprep.subr.mxu0 0.0
        %613 = vmatpush1.msra.mxu0 0.0
        %614 = vmatprep.subr.mxu0 0.0
        %615 = vmatpush1.msra.mxu0 0.0
        %616 = vmatprep.subr.mxu0 0.0
        %617 = vmatpush1.msra.mxu0 0.0
        %618 = vmatprep.subr.mxu0 0.0
        %619 = vmatpush1.msra.mxu0 0.0
        %620 = vmatprep.mubr.f32.mxu0 0.0
        %621 = vmatmul.mubr.f32.gmra.mrb[0].mxu0 %v383
        %v622 = vpop.f32.mrb[0].mxu0
        %v623 = vadd.f32 0.0, %v622
        %v624 = vpop.f32.mrb[0].mxu0
        %625 = vmatprep.mubr.f32.mxu0 0.0
        %626 = vmatmul.mubr.f32.gmra.mrb[0].mxu0 %v386
        %v627 = vpop.f32.mrb[0].mxu0
        %v628 = vadd.f32 0.0, %v627
        %v629 = vpop.f32.mrb[0].mxu0
        %630 = vdwg.mxu0
        %vm631 = vcmp.eq.s32.totalorder %v354, 0
        %vm632 = vcmp.eq.s32.totalorder %v355, 0
        %v633 = vrot.slane %v455, 7
        %v634 = vrot.slane %v460, 7
        %vm635 = vcmp.lt.s32.totalorder %v354, 1
        %v636 = vsel %vm635, %v633, %v634
        %v637 = vsel %vm635, %v634, %v633
        %v638 = vsel %vm631, 0.0, %v637
        %v639 = vsel %vm632, 0.0, %v636
        %vm640 = vcmp.eq.s32.totalorder %v354, 15
        %vm641 = vcmp.eq.s32.totalorder %v355, 15
        %v642 = vrot.slane %v623, 1
        %v643 = vrot.slane %v628, 1
        %vm644 = vcmp.lt.s32.totalorder %v354, 7
        %v645 = vsel %vm644, %v642, %v643
        %v646 = vsel %vm644, %v643, %v642
        %v647 = vsel %vm640, 0.0, %v645
        %v648 = vsel %vm641, 0.0, %v646
        %v649 = vadd.f32 %v638, %v539
        %v650 = vadd.f32 %v639, %v544
        %v651 = vadd.f32 %v649, %v647
        %v652 = vadd.f32 %v650, %v648
        %v653 = vld [vmem:[%s4] sm:$0x1]
        %v654 = vlaneseq
        %v655 = vshrl.u32 %v654, 7
        %v656 = vsub.s32 0, %v655
        %v657 = vrot.slane %v653, %v656
        %v658 = vadd.f32 %v651, %v657
        %v659 = vadd.f32 %v652, %v657
        %v660 = vld [vmem:[%s4 + $0x1] sm:$0x1]
        %v661 = vld [vmem:[%s4 + $0x2] sm:$0x1]
        %v662 = vadd.f32 %v658, %v659
        %v663 = vrot.slane %v662, 4
        %v664 = vadd.f32 %v662, %v663
        %v665 = vrot.slane %v664, 2
        %v666 = vadd.f32 %v664, %v665
        %v667 = vrot.slane %v666, 1
        %v668 = vadd.f32 %v666, %v667
        %669 = vmatprep.subr.mxu0 0.0
        %v670 = vand.u32 %v356, 4294901760
        %671 = vmatpush1.msra.mxu0 %v670
        %672 = vmatprep.subr.mxu0 0.0
        %v673 = vand.u32 %v357, 4294901760
        %674 = vmatpush1.msra.mxu0 %v673
        %675 = vmatprep.subr.mxu0 0.0
        %v676 = vand.u32 %v358, 4294901760
        %677 = vmatpush1.msra.mxu0 %v676
        %678 = vmatprep.subr.mxu0 0.0
        %v679 = vand.u32 %v359, 4294901760
        %680 = vmatpush1.msra.mxu0 %v679
        %681 = vmatprep.subr.mxu0 0.0
        %v682 = vand.u32 %v360, 4294901760
        %683 = vmatpush1.msra.mxu0 %v682
        %684 = vmatprep.subr.mxu0 0.0
        %v685 = vand.u32 %v361, 4294901760
        %686 = vmatpush1.msra.mxu0 %v685
        %687 = vmatprep.subr.mxu0 0.0
        %v688 = vand.u32 %v362, 4294901760
        %689 = vmatpush1.msra.mxu0 %v688
        %690 = vmatprep.subr.mxu0 0.0
        %v691 = vand.u32 %v363, 4294901760
        %692 = vmatpush1.msra.mxu0 %v691
        %693 = vmatprep.subr.mxu0 0.0
        %v694 = vand.u32 %v364, 4294901760
        %695 = vmatpush1.msra.mxu0 %v694
        %696 = vmatprep.subr.mxu0 0.0
        %v697 = vand.u32 %v365, 4294901760
        %698 = vmatpush1.msra.mxu0 %v697
        %699 = vmatprep.subr.mxu0 0.0
        %v700 = vand.u32 %v366, 4294901760
        %701 = vmatpush1.msra.mxu0 %v700
        %702 = vmatprep.subr.mxu0 0.0
        %v703 = vand.u32 %v367, 4294901760
        %704 = vmatpush1.msra.mxu0 %v703
        %705 = vmatprep.subr.mxu0 0.0
        %v706 = vand.u32 %v368, 4294901760
        %707 = vmatpush1.msra.mxu0 %v706
        %708 = vmatprep.subr.mxu0 0.0
        %v709 = vand.u32 %v369, 4294901760
        %710 = vmatpush1.msra.mxu0 %v709
        %711 = vmatprep.subr.mxu0 0.0
        %v712 = vand.u32 %v370, 4294901760
        %713 = vmatpush1.msra.mxu0 %v712
        %714 = vmatprep.subr.mxu0 0.0
        %v715 = vand.u32 %v371, 4294901760
        %716 = vmatpush1.msra.mxu0 %v715
        %717 = vmatprep.subr.mxu0 0.0
        %718 = vmatpush1.msra.mxu0 0.0
        %719 = vmatprep.subr.mxu0 0.0
        %720 = vmatpush1.msra.mxu0 0.0
        %721 = vmatprep.subr.mxu0 0.0
        %722 = vmatpush1.msra.mxu0 0.0
        %723 = vmatprep.subr.mxu0 0.0
        %724 = vmatpush1.msra.mxu0 0.0
        %725 = vmatprep.subr.mxu0 0.0
        %726 = vmatpush1.msra.mxu0 0.0
        %727 = vmatprep.subr.mxu0 0.0
        %728 = vmatpush1.msra.mxu0 0.0
        %729 = vmatprep.subr.mxu0 0.0
        %730 = vmatpush1.msra.mxu0 0.0
        %731 = vmatprep.subr.mxu0 0.0
        %732 = vmatpush1.msra.mxu0 0.0
        %733 = vmatprep.subr.mxu0 0.0
        %734 = vmatpush1.msra.mxu0 0.0
        %735 = vmatprep.subr.mxu0 0.0
        %736 = vmatpush1.msra.mxu0 0.0
        %737 = vmatprep.subr.mxu0 0.0
        %738 = vmatpush1.msra.mxu0 0.0
        %739 = vmatprep.subr.mxu0 0.0
        %740 = vmatpush1.msra.mxu0 0.0
        %741 = vmatprep.subr.mxu0 0.0
        %742 = vmatpush1.msra.mxu0 0.0
        %743 = vmatprep.subr.mxu0 0.0
        %744 = vmatpush1.msra.mxu0 0.0
        %745 = vmatprep.subr.mxu0 0.0
        %746 = vmatpush1.msra.mxu0 0.0
        %747 = vmatprep.subr.mxu0 0.0
        %748 = vmatpush1.msra.mxu0 0.0
        %749 = vmatprep.mubr.f32.mxu0 0.0
        %v750 = vand.u32 %v668, 4294901760
        %v751 = vsub.f32 %v668, %v750
        %v752 = vand.u32 %v751, 4294901760
        %v753 = vsub.f32 %v751, %v752
        %v754 = vand.u32 %v753, 4294901760
        %755 = vmatmul.mubr.f32.gmra.mrb[0].mxu0 %v754
        %v756 = vpop.f32.mrb[0].mxu0
        %v757 = vadd.f32 0.0, %v756
        %v758 = vpop.f32.mrb[0].mxu0
        %759 = vdwg.mxu0
        %760 = vmatprep.subr.mxu0 0.0
        %v761 = vand.u32 %v356, 4294901760
        %v762 = vsub.f32 %v356, %v761
        %v763 = vand.u32 %v762, 4294901760
        %v764 = vsub.f32 %v762, %v763
        %v765 = vand.u32 %v764, 4294901760
        %766 = vmatpush1.msra.mxu0 %v765
        %767 = vmatprep.subr.mxu0 0.0
        %v768 = vand.u32 %v357, 4294901760
        %v769 = vsub.f32 %v357, %v768
        %v770 = vand.u32 %v769, 4294901760
        %v771 = vsub.f32 %v769, %v770
        %v772 = vand.u32 %v771, 4294901760
        %773 = vmatpush1.msra.mxu0 %v772
        %774 = vmatprep.subr.mxu0 0.0
        %v775 = vand.u32 %v358, 4294901760
        %v776 = vsub.f32 %v358, %v775
        %v777 = vand.u32 %v776, 4294901760
        %v778 = vsub.f32 %v776, %v777
        %v779 = vand.u32 %v778, 4294901760
        %780 = vmatpush1.msra.mxu0 %v779
        %781 = vmatprep.subr.mxu0 0.0
        %v782 = vand.u32 %v359, 4294901760
        %v783 = vsub.f32 %v359, %v782
        %v784 = vand.u32 %v783, 4294901760
        %v785 = vsub.f32 %v783, %v784
        %v786 = vand.u32 %v785, 4294901760
        %787 = vmatpush1.msra.mxu0 %v786
        %788 = vmatprep.subr.mxu0 0.0
        %v789 = vand.u32 %v360, 4294901760
        %v790 = vsub.f32 %v360, %v789
        %v791 = vand.u32 %v790, 4294901760
        %v792 = vsub.f32 %v790, %v791
        %v793 = vand.u32 %v792, 4294901760
        %794 = vmatpush1.msra.mxu0 %v793
        %795 = vmatprep.subr.mxu0 0.0
        %v796 = vand.u32 %v361, 4294901760
        %v797 = vsub.f32 %v361, %v796
        %v798 = vand.u32 %v797, 4294901760
        %v799 = vsub.f32 %v797, %v798
        %v800 = vand.u32 %v799, 4294901760
        %801 = vmatpush1.msra.mxu0 %v800
        %802 = vmatprep.subr.mxu0 0.0
        %v803 = vand.u32 %v362, 4294901760
        %v804 = vsub.f32 %v362, %v803
        %v805 = vand.u32 %v804, 4294901760
        %v806 = vsub.f32 %v804, %v805
        %v807 = vand.u32 %v806, 4294901760
        %808 = vmatpush1.msra.mxu0 %v807
        %809 = vmatprep.subr.mxu0 0.0
        %v810 = vand.u32 %v363, 4294901760
        %v811 = vsub.f32 %v363, %v810
        %v812 = vand.u32 %v811, 4294901760
        %v813 = vsub.f32 %v811, %v812
        %v814 = vand.u32 %v813, 4294901760
        %815 = vmatpush1.msra.mxu0 %v814
        %816 = vmatprep.subr.mxu0 0.0
        %v817 = vand.u32 %v364, 4294901760
        %v818 = vsub.f32 %v364, %v817
        %v819 = vand.u32 %v818, 4294901760
        %v820 = vsub.f32 %v818, %v819
        %v821 = vand.u32 %v820, 4294901760
        %822 = vmatpush1.msra.mxu0 %v821
        %823 = vmatprep.subr.mxu0 0.0
        %v824 = vand.u32 %v365, 4294901760
        %v825 = vsub.f32 %v365, %v824
        %v826 = vand.u32 %v825, 4294901760
        %v827 = vsub.f32 %v825, %v826
        %v828 = vand.u32 %v827, 4294901760
        %829 = vmatpush1.msra.mxu0 %v828
        %830 = vmatprep.subr.mxu0 0.0
        %v831 = vand.u32 %v366, 4294901760
        %v832 = vsub.f32 %v366, %v831
        %v833 = vand.u32 %v832, 4294901760
        %v834 = vsub.f32 %v832, %v833
        %v835 = vand.u32 %v834, 4294901760
        %836 = vmatpush1.msra.mxu0 %v835
        %837 = vmatprep.subr.mxu0 0.0
        %v838 = vand.u32 %v367, 4294901760
        %v839 = vsub.f32 %v367, %v838
        %v840 = vand.u32 %v839, 4294901760
        %v841 = vsub.f32 %v839, %v840
        %v842 = vand.u32 %v841, 4294901760
        %843 = vmatpush1.msra.mxu0 %v842
        %844 = vmatprep.subr.mxu0 0.0
        %v845 = vand.u32 %v368, 4294901760
        %v846 = vsub.f32 %v368, %v845
        %v847 = vand.u32 %v846, 4294901760
        %v848 = vsub.f32 %v846, %v847
        %v849 = vand.u32 %v848, 4294901760
        %850 = vmatpush1.msra.mxu0 %v849
        %851 = vmatprep.subr.mxu0 0.0
        %v852 = vand.u32 %v369, 4294901760
        %v853 = vsub.f32 %v369, %v852
        %v854 = vand.u32 %v853, 4294901760
        %v855 = vsub.f32 %v853, %v854
        %v856 = vand.u32 %v855, 4294901760
        %857 = vmatpush1.msra.mxu0 %v856
        %858 = vmatprep.subr.mxu0 0.0
        %v859 = vand.u32 %v370, 4294901760
        %v860 = vsub.f32 %v370, %v859
        %v861 = vand.u32 %v860, 4294901760
        %v862 = vsub.f32 %v860, %v861
        %v863 = vand.u32 %v862, 4294901760
        %864 = vmatpush1.msra.mxu0 %v863
        %865 = vmatprep.subr.mxu0 0.0
        %v866 = vand.u32 %v371, 4294901760
        %v867 = vsub.f32 %v371, %v866
        %v868 = vand.u32 %v867, 4294901760
        %v869 = vsub.f32 %v867, %v868
        %v870 = vand.u32 %v869, 4294901760
        %871 = vmatpush1.msra.mxu0 %v870
        %872 = vmatprep.subr.mxu0 0.0
        %873 = vmatpush1.msra.mxu0 0.0
        %874 = vmatprep.subr.mxu0 0.0
        %875 = vmatpush1.msra.mxu0 0.0
        %876 = vmatprep.subr.mxu0 0.0
        %877 = vmatpush1.msra.mxu0 0.0
        %878 = vmatprep.subr.mxu0 0.0
        %879 = vmatpush1.msra.mxu0 0.0
        %880 = vmatprep.subr.mxu0 0.0
        %881 = vmatpush1.msra.mxu0 0.0
        %882 = vmatprep.subr.mxu0 0.0
        %883 = vmatpush1.msra.mxu0 0.0
        %884 = vmatprep.subr.mxu0 0.0
        %885 = vmatpush1.msra.mxu0 0.0
        %886 = vmatprep.subr.mxu0 0.0
        %887 = vmatpush1.msra.mxu0 0.0
        %888 = vmatprep.subr.mxu0 0.0
        %889 = vmatpush1.msra.mxu0 0.0
        %890 = vmatprep.subr.mxu0 0.0
        %891 = vmatpush1.msra.mxu0 0.0
        %892 = vmatprep.subr.mxu0 0.0
        %893 = vmatpush1.msra.mxu0 0.0
        %894 = vmatprep.subr.mxu0 0.0
        %895 = vmatpush1.msra.mxu0 0.0
        %896 = vmatprep.subr.mxu0 0.0
        %897 = vmatpush1.msra.mxu0 0.0
        %898 = vmatprep.subr.mxu0 0.0
        %899 = vmatpush1.msra.mxu0 0.0
        %900 = vmatprep.subr.mxu0 0.0
        %901 = vmatpush1.msra.mxu0 0.0
        %902 = vmatprep.subr.mxu0 0.0
        %903 = vmatpush1.msra.mxu0 0.0
        %904 = vmatprep.mubr.f32.mxu0 0.0
        %v905 = vand.u32 %v668, 4294901760
        %906 = vmatmul.mubr.f32.gmra.mrb[0].mxu0 %v905
        %v907 = vpop.f32.mrb[0].mxu0
        %v908 = vadd.f32 %v757, %v907
        %v909 = vpop.f32.mrb[0].mxu0
        %910 = vdwg.mxu0
        %911 = vmatprep.subr.mxu0 0.0
        %v912 = vand.u32 %v356, 4294901760
        %v913 = vsub.f32 %v356, %v912
        %914 = vmatpush1.msra.mxu0 %v913
        %915 = vmatprep.subr.mxu0 0.0
        %v916 = vand.u32 %v357, 4294901760
        %v917 = vsub.f32 %v357, %v916
        %918 = vmatpush1.msra.mxu0 %v917
        %919 = vmatprep.subr.mxu0 0.0
        %v920 = vand.u32 %v358, 4294901760
        %v921 = vsub.f32 %v358, %v920
        %922 = vmatpush1.msra.mxu0 %v921
        %923 = vmatprep.subr.mxu0 0.0
        %v924 = vand.u32 %v359, 4294901760
        %v925 = vsub.f32 %v359, %v924
        %926 = vmatpush1.msra.mxu0 %v925
        %927 = vmatprep.subr.mxu0 0.0
        %v928 = vand.u32 %v360, 4294901760
        %v929 = vsub.f32 %v360, %v928
        %930 = vmatpush1.msra.mxu0 %v929
        %931 = vmatprep.subr.mxu0 0.0
        %v932 = vand.u32 %v361, 4294901760
        %v933 = vsub.f32 %v361, %v932
        %934 = vmatpush1.msra.mxu0 %v933
        %935 = vmatprep.subr.mxu0 0.0
        %v936 = vand.u32 %v362, 4294901760
        %v937 = vsub.f32 %v362, %v936
        %938 = vmatpush1.msra.mxu0 %v937
        %939 = vmatprep.subr.mxu0 0.0
        %v940 = vand.u32 %v363, 4294901760
        %v941 = vsub.f32 %v363, %v940
        %942 = vmatpush1.msra.mxu0 %v941
        %943 = vmatprep.subr.mxu0 0.0
        %v944 = vand.u32 %v364, 4294901760
        %v945 = vsub.f32 %v364, %v944
        %946 = vmatpush1.msra.mxu0 %v945
        %947 = vmatprep.subr.mxu0 0.0
        %v948 = vand.u32 %v365, 4294901760
        %v949 = vsub.f32 %v365, %v948
        %950 = vmatpush1.msra.mxu0 %v949
        %951 = vmatprep.subr.mxu0 0.0
        %v952 = vand.u32 %v366, 4294901760
        %v953 = vsub.f32 %v366, %v952
        %954 = vmatpush1.msra.mxu0 %v953
        %955 = vmatprep.subr.mxu0 0.0
        %v956 = vand.u32 %v367, 4294901760
        %v957 = vsub.f32 %v367, %v956
        %958 = vmatpush1.msra.mxu0 %v957
        %959 = vmatprep.subr.mxu0 0.0
        %v960 = vand.u32 %v368, 4294901760
        %v961 = vsub.f32 %v368, %v960
        %962 = vmatpush1.msra.mxu0 %v961
        %963 = vmatprep.subr.mxu0 0.0
        %v964 = vand.u32 %v369, 4294901760
        %v965 = vsub.f32 %v369, %v964
        %966 = vmatpush1.msra.mxu0 %v965
        %967 = vmatprep.subr.mxu0 0.0
        %v968 = vand.u32 %v370, 4294901760
        %v969 = vsub.f32 %v370, %v968
        %970 = vmatpush1.msra.mxu0 %v969
        %971 = vmatprep.subr.mxu0 0.0
        %v972 = vand.u32 %v371, 4294901760
        %v973 = vsub.f32 %v371, %v972
        %974 = vmatpush1.msra.mxu0 %v973
        %975 = vmatprep.subr.mxu0 0.0
        %976 = vmatpush1.msra.mxu0 0.0
        %977 = vmatprep.subr.mxu0 0.0
        %978 = vmatpush1.msra.mxu0 0.0
        %979 = vmatprep.subr.mxu0 0.0
        %980 = vmatpush1.msra.mxu0 0.0
        %981 = vmatprep.subr.mxu0 0.0
        %982 = vmatpush1.msra.mxu0 0.0
        %983 = vmatprep.subr.mxu0 0.0
        %984 = vmatpush1.msra.mxu0 0.0
        %985 = vmatprep.subr.mxu0 0.0
        %986 = vmatpush1.msra.mxu0 0.0
        %987 = vmatprep.subr.mxu0 0.0
        %988 = vmatpush1.msra.mxu0 0.0
        %989 = vmatprep.subr.mxu0 0.0
        %990 = vmatpush1.msra.mxu0 0.0
        %991 = vmatprep.subr.mxu0 0.0
        %992 = vmatpush1.msra.mxu0 0.0
        %993 = vmatprep.subr.mxu0 0.0
        %994 = vmatpush1.msra.mxu0 0.0
        %995 = vmatprep.subr.mxu0 0.0
        %996 = vmatpush1.msra.mxu0 0.0
        %997 = vmatprep.subr.mxu0 0.0
        %998 = vmatpush1.msra.mxu0 0.0
        %999 = vmatprep.subr.mxu0 0.0
        %1000 = vmatpush1.msra.mxu0 0.0
        %1001 = vmatprep.subr.mxu0 0.0
        %1002 = vmatpush1.msra.mxu0 0.0
        %1003 = vmatprep.subr.mxu0 0.0
        %1004 = vmatpush1.msra.mxu0 0.0
        %1005 = vmatprep.subr.mxu0 0.0
        %1006 = vmatpush1.msra.mxu0 0.0
        %1007 = vmatprep.mubr.f32.mxu0 0.0
        %v1008 = vand.u32 %v668, 4294901760
        %v1009 = vsub.f32 %v668, %v1008
        %1010 = vmatmul.mubr.f32.gmra.mrb[0].mxu0 %v1009
        %v1011 = vpop.f32.mrb[0].mxu0
        %v1012 = vadd.f32 %v908, %v1011
        %v1013 = vpop.f32.mrb[0].mxu0
        %1014 = vdwg.mxu0
        %1015 = vmatprep.subr.mxu0 0.0
        %v1016 = vand.u32 %v356, 4294901760
        %1017 = vmatpush1.msra.mxu0 %v1016
        %1018 = vmatprep.subr.mxu0 0.0
        %v1019 = vand.u32 %v357, 4294901760
        %1020 = vmatpush1.msra.mxu0 %v1019
        %1021 = vmatprep.subr.mxu0 0.0
        %v1022 = vand.u32 %v358, 4294901760
        %1023 = vmatpush1.msra.mxu0 %v1022
        %1024 = vmatprep.subr.mxu0 0.0
        %v1025 = vand.u32 %v359, 4294901760
        %1026 = vmatpush1.msra.mxu0 %v1025
        %1027 = vmatprep.subr.mxu0 0.0
        %v1028 = vand.u32 %v360, 4294901760
        %1029 = vmatpush1.msra.mxu0 %v1028
        %1030 = vmatprep.subr.mxu0 0.0
        %v1031 = vand.u32 %v361, 4294901760
        %1032 = vmatpush1.msra.mxu0 %v1031
        %1033 = vmatprep.subr.mxu0 0.0
        %v1034 = vand.u32 %v362, 4294901760
        %1035 = vmatpush1.msra.mxu0 %v1034
        %1036 = vmatprep.subr.mxu0 0.0
        %v1037 = vand.u32 %v363, 4294901760
        %1038 = vmatpush1.msra.mxu0 %v1037
        %1039 = vmatprep.subr.mxu0 0.0
        %v1040 = vand.u32 %v364, 4294901760
        %1041 = vmatpush1.msra.mxu0 %v1040
        %1042 = vmatprep.subr.mxu0 0.0
        %v1043 = vand.u32 %v365, 4294901760
        %1044 = vmatpush1.msra.mxu0 %v1043
        %1045 = vmatprep.subr.mxu0 0.0
        %v1046 = vand.u32 %v366, 4294901760
        %1047 = vmatpush1.msra.mxu0 %v1046
        %1048 = vmatprep.subr.mxu0 0.0
        %v1049 = vand.u32 %v367, 4294901760
        %1050 = vmatpush1.msra.mxu0 %v1049
        %1051 = vmatprep.subr.mxu0 0.0
        %v1052 = vand.u32 %v368, 4294901760
        %1053 = vmatpush1.msra.mxu0 %v1052
        %1054 = vmatprep.subr.mxu0 0.0
        %v1055 = vand.u32 %v369, 4294901760
        %1056 = vmatpush1.msra.mxu0 %v1055
        %1057 = vmatprep.subr.mxu0 0.0
        %v1058 = vand.u32 %v370, 4294901760
        %1059 = vmatpush1.msra.mxu0 %v1058
        %1060 = vmatprep.subr.mxu0 0.0
        %v1061 = vand.u32 %v371, 4294901760
        %1062 = vmatpush1.msra.mxu0 %v1061
        %1063 = vmatprep.subr.mxu0 0.0
        %1064 = vmatpush1.msra.mxu0 0.0
        %1065 = vmatprep.subr.mxu0 0.0
        %1066 = vmatpush1.msra.mxu0 0.0
        %1067 = vmatprep.subr.mxu0 0.0
        %1068 = vmatpush1.msra.mxu0 0.0
        %1069 = vmatprep.subr.mxu0 0.0
        %1070 = vmatpush1.msra.mxu0 0.0
        %1071 = vmatprep.subr.mxu0 0.0
        %1072 = vmatpush1.msra.mxu0 0.0
        %1073 = vmatprep.subr.mxu0 0.0
        %1074 = vmatpush1.msra.mxu0 0.0
        %1075 = vmatprep.subr.mxu0 0.0
        %1076 = vmatpush1.msra.mxu0 0.0
        %1077 = vmatprep.subr.mxu0 0.0
        %1078 = vmatpush1.msra.mxu0 0.0
        %1079 = vmatprep.subr.mxu0 0.0
        %1080 = vmatpush1.msra.mxu0 0.0
        %1081 = vmatprep.subr.mxu0 0.0
        %1082 = vmatpush1.msra.mxu0 0.0
        %1083 = vmatprep.subr.mxu0 0.0
        %1084 = vmatpush1.msra.mxu0 0.0
        %1085 = vmatprep.subr.mxu0 0.0
        %1086 = vmatpush1.msra.mxu0 0.0
        %1087 = vmatprep.subr.mxu0 0.0
        %1088 = vmatpush1.msra.mxu0 0.0
        %1089 = vmatprep.subr.mxu0 0.0
        %1090 = vmatpush1.msra.mxu0 0.0
        %1091 = vmatprep.subr.mxu0 0.0
        %1092 = vmatpush1.msra.mxu0 0.0
        %1093 = vmatprep.subr.mxu0 0.0
        %1094 = vmatpush1.msra.mxu0 0.0
        %1095 = vmatprep.mubr.f32.mxu0 0.0
        %v1096 = vand.u32 %v668, 4294901760
        %v1097 = vsub.f32 %v668, %v1096
        %v1098 = vand.u32 %v1097, 4294901760
        %1099 = vmatmul.mubr.f32.gmra.mrb[0].mxu0 %v1098
        %v1100 = vpop.f32.mrb[0].mxu0
        %v1101 = vadd.f32 %v1012, %v1100
        %v1102 = vpop.f32.mrb[0].mxu0
        %1103 = vdwg.mxu0
        %1104 = vmatprep.subr.mxu0 0.0
        %v1105 = vand.u32 %v356, 4294901760
        %v1106 = vsub.f32 %v356, %v1105
        %v1107 = vand.u32 %v1106, 4294901760
        %1108 = vmatpush1.msra.mxu0 %v1107
        %1109 = vmatprep.subr.mxu0 0.0
        %v1110 = vand.u32 %v357, 4294901760
        %v1111 = vsub.f32 %v357, %v1110
        %v1112 = vand.u32 %v1111, 4294901760
        %1113 = vmatpush1.msra.mxu0 %v1112
        %1114 = vmatprep.subr.mxu0 0.0
        %v1115 = vand.u32 %v358, 4294901760
        %v1116 = vsub.f32 %v358, %v1115
        %v1117 = vand.u32 %v1116, 4294901760
        %1118 = vmatpush1.msra.mxu0 %v1117
        %1119 = vmatprep.subr.mxu0 0.0
        %v1120 = vand.u32 %v359, 4294901760
        %v1121 = vsub.f32 %v359, %v1120
        %v1122 = vand.u32 %v1121, 4294901760
        %1123 = vmatpush1.msra.mxu0 %v1122
        %1124 = vmatprep.subr.mxu0 0.0
        %v1125 = vand.u32 %v360, 4294901760
        %v1126 = vsub.f32 %v360, %v1125
        %v1127 = vand.u32 %v1126, 4294901760
        %1128 = vmatpush1.msra.mxu0 %v1127
        %1129 = vmatprep.subr.mxu0 0.0
        %v1130 = vand.u32 %v361, 4294901760
        %v1131 = vsub.f32 %v361, %v1130
        %v1132 = vand.u32 %v1131, 4294901760
        %1133 = vmatpush1.msra.mxu0 %v1132
        %1134 = vmatprep.subr.mxu0 0.0
        %v1135 = vand.u32 %v362, 4294901760
        %v1136 = vsub.f32 %v362, %v1135
        %v1137 = vand.u32 %v1136, 4294901760
        %1138 = vmatpush1.msra.mxu0 %v1137
        %1139 = vmatprep.subr.mxu0 0.0
        %v1140 = vand.u32 %v363, 4294901760
        %v1141 = vsub.f32 %v363, %v1140
        %v1142 = vand.u32 %v1141, 4294901760
        %1143 = vmatpush1.msra.mxu0 %v1142
        %1144 = vmatprep.subr.mxu0 0.0
        %v1145 = vand.u32 %v364, 4294901760
        %v1146 = vsub.f32 %v364, %v1145
        %v1147 = vand.u32 %v1146, 4294901760
        %1148 = vmatpush1.msra.mxu0 %v1147
        %1149 = vmatprep.subr.mxu0 0.0
        %v1150 = vand.u32 %v365, 4294901760
        %v1151 = vsub.f32 %v365, %v1150
        %v1152 = vand.u32 %v1151, 4294901760
        %1153 = vmatpush1.msra.mxu0 %v1152
        %1154 = vmatprep.subr.mxu0 0.0
        %v1155 = vand.u32 %v366, 4294901760
        %v1156 = vsub.f32 %v366, %v1155
        %v1157 = vand.u32 %v1156, 4294901760
        %1158 = vmatpush1.msra.mxu0 %v1157
        %1159 = vmatprep.subr.mxu0 0.0
        %v1160 = vand.u32 %v367, 4294901760
        %v1161 = vsub.f32 %v367, %v1160
        %v1162 = vand.u32 %v1161, 4294901760
        %1163 = vmatpush1.msra.mxu0 %v1162
        %1164 = vmatprep.subr.mxu0 0.0
        %v1165 = vand.u32 %v368, 4294901760
        %v1166 = vsub.f32 %v368, %v1165
        %v1167 = vand.u32 %v1166, 4294901760
        %1168 = vmatpush1.msra.mxu0 %v1167
        %1169 = vmatprep.subr.mxu0 0.0
        %v1170 = vand.u32 %v369, 4294901760
        %v1171 = vsub.f32 %v369, %v1170
        %v1172 = vand.u32 %v1171, 4294901760
        %1173 = vmatpush1.msra.mxu0 %v1172
        %1174 = vmatprep.subr.mxu0 0.0
        %v1175 = vand.u32 %v370, 4294901760
        %v1176 = vsub.f32 %v370, %v1175
        %v1177 = vand.u32 %v1176, 4294901760
        %1178 = vmatpush1.msra.mxu0 %v1177
        %1179 = vmatprep.subr.mxu0 0.0
        %v1180 = vand.u32 %v371, 4294901760
        %v1181 = vsub.f32 %v371, %v1180
        %v1182 = vand.u32 %v1181, 4294901760
        %1183 = vmatpush1.msra.mxu0 %v1182
        %1184 = vmatprep.subr.mxu0 0.0
        %1185 = vmatpush1.msra.mxu0 0.0
        %1186 = vmatprep.subr.mxu0 0.0
        %1187 = vmatpush1.msra.mxu0 0.0
        %1188 = vmatprep.subr.mxu0 0.0
        %1189 = vmatpush1.msra.mxu0 0.0
        %1190 = vmatprep.subr.mxu0 0.0
        %1191 = vmatpush1.msra.mxu0 0.0
        %1192 = vmatprep.subr.mxu0 0.0
        %1193 = vmatpush1.msra.mxu0 0.0
        %1194 = vmatprep.subr.mxu0 0.0
        %1195 = vmatpush1.msra.mxu0 0.0
        %1196 = vmatprep.subr.mxu0 0.0
        %1197 = vmatpush1.msra.mxu0 0.0
        %1198 = vmatprep.subr.mxu0 0.0
        %1199 = vmatpush1.msra.mxu0 0.0
        %1200 = vmatprep.subr.mxu0 0.0
        %1201 = vmatpush1.msra.mxu0 0.0
        %1202 = vmatprep.subr.mxu0 0.0
        %1203 = vmatpush1.msra.mxu0 0.0
        %1204 = vmatprep.subr.mxu0 0.0
        %1205 = vmatpush1.msra.mxu0 0.0
        %1206 = vmatprep.subr.mxu0 0.0
        %1207 = vmatpush1.msra.mxu0 0.0
        %1208 = vmatprep.subr.mxu0 0.0
        %1209 = vmatpush1.msra.mxu0 0.0
        %1210 = vmatprep.subr.mxu0 0.0
        %1211 = vmatpush1.msra.mxu0 0.0
        %1212 = vmatprep.subr.mxu0 0.0
        %1213 = vmatpush1.msra.mxu0 0.0
        %1214 = vmatprep.subr.mxu0 0.0
        %1215 = vmatpush1.msra.mxu0 0.0
        %1216 = vmatprep.mubr.f32.mxu0 0.0
        %v1217 = vand.u32 %v668, 4294901760
        %1218 = vmatmul.mubr.f32.gmra.mrb[0].mxu0 %v1217
        %v1219 = vpop.f32.mrb[0].mxu0
        %v1220 = vadd.f32 %v1101, %v1219
        %v1221 = vpop.f32.mrb[0].mxu0
        %1222 = vdwg.mxu0
        %1223 = vmatprep.subr.mxu0 0.0
        %v1224 = vand.u32 %v356, 4294901760
        %1225 = vmatpush1.msra.mxu0 %v1224
        %1226 = vmatprep.subr.mxu0 0.0
        %v1227 = vand.u32 %v357, 4294901760
        %1228 = vmatpush1.msra.mxu0 %v1227
        %1229 = vmatprep.subr.mxu0 0.0
        %v1230 = vand.u32 %v358, 4294901760
        %1231 = vmatpush1.msra.mxu0 %v1230
        %1232 = vmatprep.subr.mxu0 0.0
        %v1233 = vand.u32 %v359, 4294901760
        %1234 = vmatpush1.msra.mxu0 %v1233
        %1235 = vmatprep.subr.mxu0 0.0
        %v1236 = vand.u32 %v360, 4294901760
        %1237 = vmatpush1.msra.mxu0 %v1236
        %1238 = vmatprep.subr.mxu0 0.0
        %v1239 = vand.u32 %v361, 4294901760
        %1240 = vmatpush1.msra.mxu0 %v1239
        %1241 = vmatprep.subr.mxu0 0.0
        %v1242 = vand.u32 %v362, 4294901760
        %1243 = vmatpush1.msra.mxu0 %v1242
        %1244 = vmatprep.subr.mxu0 0.0
        %v1245 = vand.u32 %v363, 4294901760
        %1246 = vmatpush1.msra.mxu0 %v1245
        %1247 = vmatprep.subr.mxu0 0.0
        %v1248 = vand.u32 %v364, 4294901760
        %1249 = vmatpush1.msra.mxu0 %v1248
        %1250 = vmatprep.subr.mxu0 0.0
        %v1251 = vand.u32 %v365, 4294901760
        %1252 = vmatpush1.msra.mxu0 %v1251
        %1253 = vmatprep.subr.mxu0 0.0
        %v1254 = vand.u32 %v366, 4294901760
        %1255 = vmatpush1.msra.mxu0 %v1254
        %1256 = vmatprep.subr.mxu0 0.0
        %v1257 = vand.u32 %v367, 4294901760
        %1258 = vmatpush1.msra.mxu0 %v1257
        %1259 = vmatprep.subr.mxu0 0.0
        %v1260 = vand.u32 %v368, 4294901760
        %1261 = vmatpush1.msra.mxu0 %v1260
        %1262 = vmatprep.subr.mxu0 0.0
        %v1263 = vand.u32 %v369, 4294901760
        %1264 = vmatpush1.msra.mxu0 %v1263
        %1265 = vmatprep.subr.mxu0 0.0
        %v1266 = vand.u32 %v370, 4294901760
        %1267 = vmatpush1.msra.mxu0 %v1266
        %1268 = vmatprep.subr.mxu0 0.0
        %v1269 = vand.u32 %v371, 4294901760
        %1270 = vmatpush1.msra.mxu0 %v1269
        %1271 = vmatprep.subr.mxu0 0.0
        %1272 = vmatpush1.msra.mxu0 0.0
        %1273 = vmatprep.subr.mxu0 0.0
        %1274 = vmatpush1.msra.mxu0 0.0
        %1275 = vmatprep.subr.mxu0 0.0
        %1276 = vmatpush1.msra.mxu0 0.0
        %1277 = vmatprep.subr.mxu0 0.0
        %1278 = vmatpush1.msra.mxu0 0.0
        %1279 = vmatprep.subr.mxu0 0.0
        %1280 = vmatpush1.msra.mxu0 0.0
        %1281 = vmatprep.subr.mxu0 0.0
        %1282 = vmatpush1.msra.mxu0 0.0
        %1283 = vmatprep.subr.mxu0 0.0
        %1284 = vmatpush1.msra.mxu0 0.0
        %1285 = vmatprep.subr.mxu0 0.0
        %1286 = vmatpush1.msra.mxu0 0.0
        %1287 = vmatprep.subr.mxu0 0.0
        %1288 = vmatpush1.msra.mxu0 0.0
        %1289 = vmatprep.subr.mxu0 0.0
        %1290 = vmatpush1.msra.mxu0 0.0
        %1291 = vmatprep.subr.mxu0 0.0
        %1292 = vmatpush1.msra.mxu0 0.0
        %1293 = vmatprep.subr.mxu0 0.0
        %1294 = vmatpush1.msra.mxu0 0.0
        %1295 = vmatprep.subr.mxu0 0.0
        %1296 = vmatpush1.msra.mxu0 0.0
        %1297 = vmatprep.subr.mxu0 0.0
        %1298 = vmatpush1.msra.mxu0 0.0
        %1299 = vmatprep.subr.mxu0 0.0
        %1300 = vmatpush1.msra.mxu0 0.0
        %1301 = vmatprep.subr.mxu0 0.0
        %1302 = vmatpush1.msra.mxu0 0.0
        %1303 = vmatprep.mubr.f32.mxu0 0.0
        %v1304 = vand.u32 %v668, 4294901760
        %1305 = vmatmul.mubr.f32.gmra.mrb[0].mxu0 %v1304
        %v1306 = vpop.f32.mrb[0].mxu0
        %v1307 = vadd.f32 %v1220, %v1306
        %v1308 = vpop.f32.mrb[0].mxu0
        %1309 = vdwg.mxu0
        %vm1310 = vcmask 31744
        %v1312 = vsel %vm1310, %v1307, 0
        %vm1314 = vcmask 1043456
        %v1316 = vsel %vm1314, %v372, 0
        %1318 = vmatprep.subr.mxu0 0.0
        %v1319 = vand.u32 %v1316, 4294901760
        %1320 = vmatpush1.msra.mxu0 %v1319
        %1321 = vmatprep.subr.mxu0 0.0
        %1322 = vmatpush1.msra.mxu0 0.0
        %1323 = vmatprep.subr.mxu0 0.0
        %1324 = vmatpush1.msra.mxu0 0.0
        %1325 = vmatprep.subr.mxu0 0.0
        %1326 = vmatpush1.msra.mxu0 0.0
        %1327 = vmatprep.subr.mxu0 0.0
        %1328 = vmatpush1.msra.mxu0 0.0
        %1329 = vmatprep.subr.mxu0 0.0
        %1330 = vmatpush1.msra.mxu0 0.0
        %1331 = vmatprep.subr.mxu0 0.0
        %1332 = vmatpush1.msra.mxu0 0.0
        %1333 = vmatprep.subr.mxu0 0.0
        %1334 = vmatpush1.msra.mxu0 0.0
        %1335 = vmatprep.subr.mxu0 0.0
        %1336 = vmatpush1.msra.mxu0 0.0
        %1337 = vmatprep.subr.mxu0 0.0
        %1338 = vmatpush1.msra.mxu0 0.0
        %1339 = vmatprep.subr.mxu0 0.0
        %1340 = vmatpush1.msra.mxu0 0.0
        %1341 = vmatprep.subr.mxu0 0.0
        %1342 = vmatpush1.msra.mxu0 0.0
        %1343 = vmatprep.subr.mxu0 0.0
        %1344 = vmatpush1.msra.mxu0 0.0
        %1345 = vmatprep.subr.mxu0 0.0
        %1346 = vmatpush1.msra.mxu0 0.0
        %1347 = vmatprep.subr.mxu0 0.0
        %1348 = vmatpush1.msra.mxu0 0.0
        %1349 = vmatprep.subr.mxu0 0.0
        %1350 = vmatpush1.msra.mxu0 0.0
        %1351 = vmatprep.subr.mxu0 0.0
        %1352 = vmatpush1.msra.mxu0 0.0
        %1353 = vmatprep.subr.mxu0 0.0
        %1354 = vmatpush1.msra.mxu0 0.0
        %1355 = vmatprep.subr.mxu0 0.0
        %1356 = vmatpush1.msra.mxu0 0.0
        %1357 = vmatprep.subr.mxu0 0.0
        %1358 = vmatpush1.msra.mxu0 0.0
        %1359 = vmatprep.subr.mxu0 0.0
        %1360 = vmatpush1.msra.mxu0 0.0
        %1361 = vmatprep.subr.mxu0 0.0
        %1362 = vmatpush1.msra.mxu0 0.0
        %1363 = vmatprep.subr.mxu0 0.0
        %1364 = vmatpush1.msra.mxu0 0.0
        %1365 = vmatprep.subr.mxu0 0.0
        %1366 = vmatpush1.msra.mxu0 0.0
        %1367 = vmatprep.subr.mxu0 0.0
        %1368 = vmatpush1.msra.mxu0 0.0
        %1369 = vmatprep.subr.mxu0 0.0
        %1370 = vmatpush1.msra.mxu0 0.0
        %1371 = vmatprep.subr.mxu0 0.0
        %1372 = vmatpush1.msra.mxu0 0.0
        %1373 = vmatprep.subr.mxu0 0.0
        %1374 = vmatpush1.msra.mxu0 0.0
        %1375 = vmatprep.subr.mxu0 0.0
        %1376 = vmatpush1.msra.mxu0 0.0
        %1377 = vmatprep.subr.mxu0 0.0
        %1378 = vmatpush1.msra.mxu0 0.0
        %1379 = vmatprep.subr.mxu0 0.0
        %1380 = vmatpush1.msra.mxu0 0.0
        %1381 = vmatprep.subr.mxu0 0.0
        %1382 = vmatpush1.msra.mxu0 0.0
        %1383 = vmatprep.mubr.f32.mxu0 0.0
        %v1384 = vand.u32 %v1312, 4294901760
        %v1385 = vsub.f32 %v1312, %v1384
        %v1386 = vand.u32 %v1385, 4294901760
        %v1387 = vsub.f32 %v1385, %v1386
        %v1388 = vand.u32 %v1387, 4294901760
        %1389 = vmatmul.mubr.f32.gmra.mrb[0].mxu0 %v1388
        %v1390 = vpop.f32.mrb[0].mxu0
        %v1391 = vadd.f32 0.0, %v1390
        %v1392 = vpop.f32.mrb[0].mxu0
        %1393 = vdwg.mxu0
        %1394 = vmatprep.subr.mxu0 0.0
        %v1395 = vand.u32 %v1316, 4294901760
        %v1396 = vsub.f32 %v1316, %v1395
        %v1397 = vand.u32 %v1396, 4294901760
        %v1398 = vsub.f32 %v1396, %v1397
        %v1399 = vand.u32 %v1398, 4294901760
        %1400 = vmatpush1.msra.mxu0 %v1399
        %1401 = vmatprep.subr.mxu0 0.0
        %1402 = vmatpush1.msra.mxu0 0.0
        %1403 = vmatprep.subr.mxu0 0.0
        %1404 = vmatpush1.msra.mxu0 0.0
        %1405 = vmatprep.subr.mxu0 0.0
        %1406 = vmatpush1.msra.mxu0 0.0
        %1407 = vmatprep.subr.mxu0 0.0
        %1408 = vmatpush1.msra.mxu0 0.0
        %1409 = vmatprep.subr.mxu0 0.0
        %1410 = vmatpush1.msra.mxu0 0.0
        %1411 = vmatprep.subr.mxu0 0.0
        %1412 = vmatpush1.msra.mxu0 0.0
        %1413 = vmatprep.subr.mxu0 0.0
        %1414 = vmatpush1.msra.mxu0 0.0
        %1415 = vmatprep.subr.mxu0 0.0
        %1416 = vmatpush1.msra.mxu0 0.0
        %1417 = vmatprep.subr.mxu0 0.0
        %1418 = vmatpush1.msra.mxu0 0.0
        %1419 = vmatprep.subr.mxu0 0.0
        %1420 = vmatpush1.msra.mxu0 0.0
        %1421 = vmatprep.subr.mxu0 0.0
        %1422 = vmatpush1.msra.mxu0 0.0
        %1423 = vmatprep.subr.mxu0 0.0
        %1424 = vmatpush1.msra.mxu0 0.0
        %1425 = vmatprep.subr.mxu0 0.0
        %1426 = vmatpush1.msra.mxu0 0.0
        %1427 = vmatprep.subr.mxu0 0.0
        %1428 = vmatpush1.msra.mxu0 0.0
        %1429 = vmatprep.subr.mxu0 0.0
        %1430 = vmatpush1.msra.mxu0 0.0
        %1431 = vmatprep.subr.mxu0 0.0
        %1432 = vmatpush1.msra.mxu0 0.0
        %1433 = vmatprep.subr.mxu0 0.0
        %1434 = vmatpush1.msra.mxu0 0.0
        %1435 = vmatprep.subr.mxu0 0.0
        %1436 = vmatpush1.msra.mxu0 0.0
        %1437 = vmatprep.subr.mxu0 0.0
        %1438 = vmatpush1.msra.mxu0 0.0
        %1439 = vmatprep.subr.mxu0 0.0
        %1440 = vmatpush1.msra.mxu0 0.0
        %1441 = vmatprep.subr.mxu0 0.0
        %1442 = vmatpush1.msra.mxu0 0.0
        %1443 = vmatprep.subr.mxu0 0.0
        %1444 = vmatpush1.msra.mxu0 0.0
        %1445 = vmatprep.subr.mxu0 0.0
        %1446 = vmatpush1.msra.mxu0 0.0
        %1447 = vmatprep.subr.mxu0 0.0
        %1448 = vmatpush1.msra.mxu0 0.0
        %1449 = vmatprep.subr.mxu0 0.0
        %1450 = vmatpush1.msra.mxu0 0.0
        %1451 = vmatprep.subr.mxu0 0.0
        %1452 = vmatpush1.msra.mxu0 0.0
        %1453 = vmatprep.subr.mxu0 0.0
        %1454 = vmatpush1.msra.mxu0 0.0
        %1455 = vmatprep.subr.mxu0 0.0
        %1456 = vmatpush1.msra.mxu0 0.0
        %1457 = vmatprep.subr.mxu0 0.0
        %1458 = vmatpush1.msra.mxu0 0.0
        %1459 = vmatprep.subr.mxu0 0.0
        %1460 = vmatpush1.msra.mxu0 0.0
        %1461 = vmatprep.subr.mxu0 0.0
        %1462 = vmatpush1.msra.mxu0 0.0
        %1463 = vmatprep.mubr.f32.mxu0 0.0
        %v1464 = vand.u32 %v1312, 4294901760
        %1465 = vmatmul.mubr.f32.gmra.mrb[0].mxu0 %v1464
        %v1466 = vpop.f32.mrb[0].mxu0
        %v1467 = vadd.f32 %v1391, %v1466
        %v1468 = vpop.f32.mrb[0].mxu0
        %1469 = vdwg.mxu0
        %1470 = vmatprep.subr.mxu0 0.0
        %v1471 = vand.u32 %v1316, 4294901760
        %v1472 = vsub.f32 %v1316, %v1471
        %1473 = vmatpush1.msra.mxu0 %v1472
        %1474 = vmatprep.subr.mxu0 0.0
        %1475 = vmatpush1.msra.mxu0 0.0
        %1476 = vmatprep.subr.mxu0 0.0
        %1477 = vmatpush1.msra.mxu0 0.0
        %1478 = vmatprep.subr.mxu0 0.0
        %1479 = vmatpush1.msra.mxu0 0.0
        %1480 = vmatprep.subr.mxu0 0.0
        %1481 = vmatpush1.msra.mxu0 0.0
        %1482 = vmatprep.subr.mxu0 0.0
        %1483 = vmatpush1.msra.mxu0 0.0
        %1484 = vmatprep.subr.mxu0 0.0
        %1485 = vmatpush1.msra.mxu0 0.0
        %1486 = vmatprep.subr.mxu0 0.0
        %1487 = vmatpush1.msra.mxu0 0.0
        %1488 = vmatprep.subr.mxu0 0.0
        %1489 = vmatpush1.msra.mxu0 0.0
        %1490 = vmatprep.subr.mxu0 0.0
        %1491 = vmatpush1.msra.mxu0 0.0
        %1492 = vmatprep.subr.mxu0 0.0
        %1493 = vmatpush1.msra.mxu0 0.0
        %1494 = vmatprep.subr.mxu0 0.0
        %1495 = vmatpush1.msra.mxu0 0.0
        %1496 = vmatprep.subr.mxu0 0.0
        %1497 = vmatpush1.msra.mxu0 0.0
        %1498 = vmatprep.subr.mxu0 0.0
        %1499 = vmatpush1.msra.mxu0 0.0
        %1500 = vmatprep.subr.mxu0 0.0
        %1501 = vmatpush1.msra.mxu0 0.0
        %1502 = vmatprep.subr.mxu0 0.0
        %1503 = vmatpush1.msra.mxu0 0.0
        %1504 = vmatprep.subr.mxu0 0.0
        %1505 = vmatpush1.msra.mxu0 0.0
        %1506 = vmatprep.subr.mxu0 0.0
        %1507 = vmatpush1.msra.mxu0 0.0
        %1508 = vmatprep.subr.mxu0 0.0
        %1509 = vmatpush1.msra.mxu0 0.0
        %1510 = vmatprep.subr.mxu0 0.0
        %1511 = vmatpush1.msra.mxu0 0.0
        %1512 = vmatprep.subr.mxu0 0.0
        %1513 = vmatpush1.msra.mxu0 0.0
        %1514 = vmatprep.subr.mxu0 0.0
        %1515 = vmatpush1.msra.mxu0 0.0
        %1516 = vmatprep.subr.mxu0 0.0
        %1517 = vmatpush1.msra.mxu0 0.0
        %1518 = vmatprep.subr.mxu0 0.0
        %1519 = vmatpush1.msra.mxu0 0.0
        %1520 = vmatprep.subr.mxu0 0.0
        %1521 = vmatpush1.msra.mxu0 0.0
        %1522 = vmatprep.subr.mxu0 0.0
        %1523 = vmatpush1.msra.mxu0 0.0
        %1524 = vmatprep.subr.mxu0 0.0
        %1525 = vmatpush1.msra.mxu0 0.0
        %1526 = vmatprep.subr.mxu0 0.0
        %1527 = vmatpush1.msra.mxu0 0.0
        %1528 = vmatprep.subr.mxu0 0.0
        %1529 = vmatpush1.msra.mxu0 0.0
        %1530 = vmatprep.subr.mxu0 0.0
        %1531 = vmatpush1.msra.mxu0 0.0
        %1532 = vmatprep.subr.mxu0 0.0
        %1533 = vmatpush1.msra.mxu0 0.0
        %1534 = vmatprep.subr.mxu0 0.0
        %1535 = vmatpush1.msra.mxu0 0.0
        %1536 = vmatprep.mubr.f32.mxu0 0.0
        %v1537 = vand.u32 %v1312, 4294901760
        %v1538 = vsub.f32 %v1312, %v1537
        %1539 = vmatmul.mubr.f32.gmra.mrb[0].mxu0 %v1538
        %v1540 = vpop.f32.mrb[0].mxu0
        %v1541 = vadd.f32 %v1467, %v1540
        %v1542 = vpop.f32.mrb[0].mxu0
        %1543 = vdwg.mxu0
        %1544 = vmatprep.subr.mxu0 0.0
        %v1545 = vand.u32 %v1316, 4294901760
        %1546 = vmatpush1.msra.mxu0 %v1545
        %1547 = vmatprep.subr.mxu0 0.0
        %1548 = vmatpush1.msra.mxu0 0.0
        %1549 = vmatprep.subr.mxu0 0.0
        %1550 = vmatpush1.msra.mxu0 0.0
        %1551 = vmatprep.subr.mxu0 0.0
        %1552 = vmatpush1.msra.mxu0 0.0
        %1553 = vmatprep.subr.mxu0 0.0
        %1554 = vmatpush1.msra.mxu0 0.0
        %1555 = vmatprep.subr.mxu0 0.0
        %1556 = vmatpush1.msra.mxu0 0.0
        %1557 = vmatprep.subr.mxu0 0.0
        %1558 = vmatpush1.msra.mxu0 0.0
        %1559 = vmatprep.subr.mxu0 0.0
        %1560 = vmatpush1.msra.mxu0 0.0
        %1561 = vmatprep.subr.mxu0 0.0
        %1562 = vmatpush1.msra.mxu0 0.0
        %1563 = vmatprep.subr.mxu0 0.0
        %1564 = vmatpush1.msra.mxu0 0.0
        %1565 = vmatprep.subr.mxu0 0.0
        %1566 = vmatpush1.msra.mxu0 0.0
        %1567 = vmatprep.subr.mxu0 0.0
        %1568 = vmatpush1.msra.mxu0 0.0
        %1569 = vmatprep.subr.mxu0 0.0
        %1570 = vmatpush1.msra.mxu0 0.0
        %1571 = vmatprep.subr.mxu0 0.0
        %1572 = vmatpush1.msra.mxu0 0.0
        %1573 = vmatprep.subr.mxu0 0.0
        %1574 = vmatpush1.msra.mxu0 0.0
        %1575 = vmatprep.subr.mxu0 0.0
        %1576 = vmatpush1.msra.mxu0 0.0
        %1577 = vmatprep.subr.mxu0 0.0
        %1578 = vmatpush1.msra.mxu0 0.0
        %1579 = vmatprep.subr.mxu0 0.0
        %1580 = vmatpush1.msra.mxu0 0.0
        %1581 = vmatprep.subr.mxu0 0.0
        %1582 = vmatpush1.msra.mxu0 0.0
        %1583 = vmatprep.subr.mxu0 0.0
        %1584 = vmatpush1.msra.mxu0 0.0
        %1585 = vmatprep.subr.mxu0 0.0
        %1586 = vmatpush1.msra.mxu0 0.0
        %1587 = vmatprep.subr.mxu0 0.0
        %1588 = vmatpush1.msra.mxu0 0.0
        %1589 = vmatprep.subr.mxu0 0.0
        %1590 = vmatpush1.msra.mxu0 0.0
        %1591 = vmatprep.subr.mxu0 0.0
        %1592 = vmatpush1.msra.mxu0 0.0
        %1593 = vmatprep.subr.mxu0 0.0
        %1594 = vmatpush1.msra.mxu0 0.0
        %1595 = vmatprep.subr.mxu0 0.0
        %1596 = vmatpush1.msra.mxu0 0.0
        %1597 = vmatprep.subr.mxu0 0.0
        %1598 = vmatpush1.msra.mxu0 0.0
        %1599 = vmatprep.subr.mxu0 0.0
        %1600 = vmatpush1.msra.mxu0 0.0
        %1601 = vmatprep.subr.mxu0 0.0
        %1602 = vmatpush1.msra.mxu0 0.0
        %1603 = vmatprep.subr.mxu0 0.0
        %1604 = vmatpush1.msra.mxu0 0.0
        %1605 = vmatprep.subr.mxu0 0.0
        %1606 = vmatpush1.msra.mxu0 0.0
        %1607 = vmatprep.subr.mxu0 0.0
        %1608 = vmatpush1.msra.mxu0 0.0
        %1609 = vmatprep.mubr.f32.mxu0 0.0
        %v1610 = vand.u32 %v1312, 4294901760
        %v1611 = vsub.f32 %v1312, %v1610
        %v1612 = vand.u32 %v1611, 4294901760
        %1613 = vmatmul.mubr.f32.gmra.mrb[0].mxu0 %v1612
        %v1614 = vpop.f32.mrb[0].mxu0
        %v1615 = vadd.f32 %v1541, %v1614
        %v1616 = vpop.f32.mrb[0].mxu0
        %1617 = vdwg.mxu0
        %1618 = vmatprep.subr.mxu0 0.0
        %v1619 = vand.u32 %v1316, 4294901760
        %v1620 = vsub.f32 %v1316, %v1619
        %v1621 = vand.u32 %v1620, 4294901760
        %1622 = vmatpush1.msra.mxu0 %v1621
        %1623 = vmatprep.subr.mxu0 0.0
        %1624 = vmatpush1.msra.mxu0 0.0
        %1625 = vmatprep.subr.mxu0 0.0
        %1626 = vmatpush1.msra.mxu0 0.0
        %1627 = vmatprep.subr.mxu0 0.0
        %1628 = vmatpush1.msra.mxu0 0.0
        %1629 = vmatprep.subr.mxu0 0.0
        %1630 = vmatpush1.msra.mxu0 0.0
        %1631 = vmatprep.subr.mxu0 0.0
        %1632 = vmatpush1.msra.mxu0 0.0
        %1633 = vmatprep.subr.mxu0 0.0
        %1634 = vmatpush1.msra.mxu0 0.0
        %1635 = vmatprep.subr.mxu0 0.0
        %1636 = vmatpush1.msra.mxu0 0.0
        %1637 = vmatprep.subr.mxu0 0.0
        %1638 = vmatpush1.msra.mxu0 0.0
        %1639 = vmatprep.subr.mxu0 0.0
        %1640 = vmatpush1.msra.mxu0 0.0
        %1641 = vmatprep.subr.mxu0 0.0
        %1642 = vmatpush1.msra.mxu0 0.0
        %1643 = vmatprep.subr.mxu0 0.0
        %1644 = vmatpush1.msra.mxu0 0.0
        %1645 = vmatprep.subr.mxu0 0.0
        %1646 = vmatpush1.msra.mxu0 0.0
        %1647 = vmatprep.subr.mxu0 0.0
        %1648 = vmatpush1.msra.mxu0 0.0
        %1649 = vmatprep.subr.mxu0 0.0
        %1650 = vmatpush1.msra.mxu0 0.0
        %1651 = vmatprep.subr.mxu0 0.0
        %1652 = vmatpush1.msra.mxu0 0.0
        %1653 = vmatprep.subr.mxu0 0.0
        %1654 = vmatpush1.msra.mxu0 0.0
        %1655 = vmatprep.subr.mxu0 0.0
        %1656 = vmatpush1.msra.mxu0 0.0
        %1657 = vmatprep.subr.mxu0 0.0
        %1658 = vmatpush1.msra.mxu0 0.0
        %1659 = vmatprep.subr.mxu0 0.0
        %1660 = vmatpush1.msra.mxu0 0.0
        %1661 = vmatprep.subr.mxu0 0.0
        %1662 = vmatpush1.msra.mxu0 0.0
        %1663 = vmatprep.subr.mxu0 0.0
        %1664 = vmatpush1.msra.mxu0 0.0
        %1665 = vmatprep.subr.mxu0 0.0
        %1666 = vmatpush1.msra.mxu0 0.0
        %1667 = vmatprep.subr.mxu0 0.0
        %1668 = vmatpush1.msra.mxu0 0.0
        %1669 = vmatprep.subr.mxu0 0.0
        %1670 = vmatpush1.msra.mxu0 0.0
        %1671 = vmatprep.subr.mxu0 0.0
        %1672 = vmatpush1.msra.mxu0 0.0
        %1673 = vmatprep.subr.mxu0 0.0
        %1674 = vmatpush1.msra.mxu0 0.0
        %1675 = vmatprep.subr.mxu0 0.0
        %1676 = vmatpush1.msra.mxu0 0.0
        %1677 = vmatprep.subr.mxu0 0.0
        %1678 = vmatpush1.msra.mxu0 0.0
        %1679 = vmatprep.subr.mxu0 0.0
        %1680 = vmatpush1.msra.mxu0 0.0
        %1681 = vmatprep.subr.mxu0 0.0
        %1682 = vmatpush1.msra.mxu0 0.0
        %1683 = vmatprep.subr.mxu0 0.0
        %1684 = vmatpush1.msra.mxu0 0.0
        %1685 = vmatprep.mubr.f32.mxu0 0.0
        %v1686 = vand.u32 %v1312, 4294901760
        %1687 = vmatmul.mubr.f32.gmra.mrb[0].mxu0 %v1686
        %v1688 = vpop.f32.mrb[0].mxu0
        %v1689 = vadd.f32 %v1615, %v1688
        %v1690 = vpop.f32.mrb[0].mxu0
        %1691 = vdwg.mxu0
        %1692 = vmatprep.subr.mxu0 0.0
        %v1693 = vand.u32 %v1316, 4294901760
        %1694 = vmatpush1.msra.mxu0 %v1693
        %1695 = vmatprep.subr.mxu0 0.0
        %1696 = vmatpush1.msra.mxu0 0.0
        %1697 = vmatprep.subr.mxu0 0.0
        %1698 = vmatpush1.msra.mxu0 0.0
        %1699 = vmatprep.subr.mxu0 0.0
        %1700 = vmatpush1.msra.mxu0 0.0
        %1701 = vmatprep.subr.mxu0 0.0
        %1702 = vmatpush1.msra.mxu0 0.0
        %1703 = vmatprep.subr.mxu0 0.0
        %1704 = vmatpush1.msra.mxu0 0.0
        %1705 = vmatprep.subr.mxu0 0.0
        %1706 = vmatpush1.msra.mxu0 0.0
        %1707 = vmatprep.subr.mxu0 0.0
        %1708 = vmatpush1.msra.mxu0 0.0
        %1709 = vmatprep.subr.mxu0 0.0
        %1710 = vmatpush1.msra.mxu0 0.0
        %1711 = vmatprep.subr.mxu0 0.0
        %1712 = vmatpush1.msra.mxu0 0.0
        %1713 = vmatprep.subr.mxu0 0.0
        %1714 = vmatpush1.msra.mxu0 0.0
        %1715 = vmatprep.subr.mxu0 0.0
        %1716 = vmatpush1.msra.mxu0 0.0
        %1717 = vmatprep.subr.mxu0 0.0
        %1718 = vmatpush1.msra.mxu0 0.0
        %1719 = vmatprep.subr.mxu0 0.0
        %1720 = vmatpush1.msra.mxu0 0.0
        %1721 = vmatprep.subr.mxu0 0.0
        %1722 = vmatpush1.msra.mxu0 0.0
        %1723 = vmatprep.subr.mxu0 0.0
        %1724 = vmatpush1.msra.mxu0 0.0
        %1725 = vmatprep.subr.mxu0 0.0
        %1726 = vmatpush1.msra.mxu0 0.0
        %1727 = vmatprep.subr.mxu0 0.0
        %1728 = vmatpush1.msra.mxu0 0.0
        %1729 = vmatprep.subr.mxu0 0.0
        %1730 = vmatpush1.msra.mxu0 0.0
        %1731 = vmatprep.subr.mxu0 0.0
        %1732 = vmatpush1.msra.mxu0 0.0
        %1733 = vmatprep.subr.mxu0 0.0
        %1734 = vmatpush1.msra.mxu0 0.0
        %1735 = vmatprep.subr.mxu0 0.0
        %1736 = vmatpush1.msra.mxu0 0.0
        %1737 = vmatprep.subr.mxu0 0.0
        %1738 = vmatpush1.msra.mxu0 0.0
        %1739 = vmatprep.subr.mxu0 0.0
        %1740 = vmatpush1.msra.mxu0 0.0
        %1741 = vmatprep.subr.mxu0 0.0
        %1742 = vmatpush1.msra.mxu0 0.0
        %1743 = vmatprep.subr.mxu0 0.0
        %1744 = vmatpush1.msra.mxu0 0.0
        %1745 = vmatprep.subr.mxu0 0.0
        %1746 = vmatpush1.msra.mxu0 0.0
        %1747 = vmatprep.subr.mxu0 0.0
        %1748 = vmatpush1.msra.mxu0 0.0
        %1749 = vmatprep.subr.mxu0 0.0
        %1750 = vmatpush1.msra.mxu0 0.0
        %1751 = vmatprep.subr.mxu0 0.0
        %1752 = vmatpush1.msra.mxu0 0.0
        %1753 = vmatprep.subr.mxu0 0.0
        %1754 = vmatpush1.msra.mxu0 0.0
        %1755 = vmatprep.subr.mxu0 0.0
        %1756 = vmatpush1.msra.mxu0 0.0
        %1757 = vmatprep.mubr.f32.mxu0 0.0
        %v1758 = vand.u32 %v1312, 4294901760
        %1759 = vmatmul.mubr.f32.gmra.mrb[0].mxu0 %v1758
        %v1760 = vpop.f32.mrb[0].mxu0
        %v1761 = vadd.f32 %v1689, %v1760
        %v1762 = vpop.f32.mrb[0].mxu0
        %1763 = vdwg.mxu0
        %v1764 = vlaneseq
        %v1765 = vshrl.u32 %v1764, 7
        %v1766 = vsub.s32 0, %v1765
        %v1767 = vrot.slane %v1761, %v1766
        %v1768 = vsub.f32 %v658, %v1767
        %v1769 = vsub.f32 %v659, %v1767
        %v1770 = vmul.f32 %v1768, %v1768
        %v1771 = vmul.f32 %v1769, %v1769
        %v1772 = vadd.f32 %v1770, %v1771
        %v1773 = vrot.slane %v1772, 4
        %v1774 = vadd.f32 %v1772, %v1773
        %v1775 = vrot.slane %v1774, 2
        %v1776 = vadd.f32 %v1774, %v1775
        %v1777 = vrot.slane %v1776, 1
        %v1778 = vadd.f32 %v1776, %v1777
        %1779 = vmatprep.subr.mxu0 0.0
        %v1780 = vand.u32 %v356, 4294901760
        %1781 = vmatpush1.msra.mxu0 %v1780
        %1782 = vmatprep.subr.mxu0 0.0
        %v1783 = vand.u32 %v357, 4294901760
        %1784 = vmatpush1.msra.mxu0 %v1783
        %1785 = vmatprep.subr.mxu0 0.0
        %v1786 = vand.u32 %v358, 4294901760
        %1787 = vmatpush1.msra.mxu0 %v1786
        %1788 = vmatprep.subr.mxu0 0.0
        %v1789 = vand.u32 %v359, 4294901760
        %1790 = vmatpush1.msra.mxu0 %v1789
        %1791 = vmatprep.subr.mxu0 0.0
        %v1792 = vand.u32 %v360, 4294901760
        %1793 = vmatpush1.msra.mxu0 %v1792
        %1794 = vmatprep.subr.mxu0 0.0
        %v1795 = vand.u32 %v361, 4294901760
        %1796 = vmatpush1.msra.mxu0 %v1795
        %1797 = vmatprep.subr.mxu0 0.0
        %v1798 = vand.u32 %v362, 4294901760
        %1799 = vmatpush1.msra.mxu0 %v1798
        %1800 = vmatprep.subr.mxu0 0.0
        %v1801 = vand.u32 %v363, 4294901760
        %1802 = vmatpush1.msra.mxu0 %v1801
        %1803 = vmatprep.subr.mxu0 0.0
        %v1804 = vand.u32 %v364, 4294901760
        %1805 = vmatpush1.msra.mxu0 %v1804
        %1806 = vmatprep.subr.mxu0 0.0
        %v1807 = vand.u32 %v365, 4294901760
        %1808 = vmatpush1.msra.mxu0 %v1807
        %1809 = vmatprep.subr.mxu0 0.0
        %v1810 = vand.u32 %v366, 4294901760
        %1811 = vmatpush1.msra.mxu0 %v1810
        %1812 = vmatprep.subr.mxu0 0.0
        %v1813 = vand.u32 %v367, 4294901760
        %1814 = vmatpush1.msra.mxu0 %v1813
        %1815 = vmatprep.subr.mxu0 0.0
        %v1816 = vand.u32 %v368, 4294901760
        %1817 = vmatpush1.msra.mxu0 %v1816
        %1818 = vmatprep.subr.mxu0 0.0
        %v1819 = vand.u32 %v369, 4294901760
        %1820 = vmatpush1.msra.mxu0 %v1819
        %1821 = vmatprep.subr.mxu0 0.0
        %v1822 = vand.u32 %v370, 4294901760
        %1823 = vmatpush1.msra.mxu0 %v1822
        %1824 = vmatprep.subr.mxu0 0.0
        %v1825 = vand.u32 %v371, 4294901760
        %1826 = vmatpush1.msra.mxu0 %v1825
        %1827 = vmatprep.subr.mxu0 0.0
        %1828 = vmatpush1.msra.mxu0 0.0
        %1829 = vmatprep.subr.mxu0 0.0
        %1830 = vmatpush1.msra.mxu0 0.0
        %1831 = vmatprep.subr.mxu0 0.0
        %1832 = vmatpush1.msra.mxu0 0.0
        %1833 = vmatprep.subr.mxu0 0.0
        %1834 = vmatpush1.msra.mxu0 0.0
        %1835 = vmatprep.subr.mxu0 0.0
        %1836 = vmatpush1.msra.mxu0 0.0
        %1837 = vmatprep.subr.mxu0 0.0
        %1838 = vmatpush1.msra.mxu0 0.0
        %1839 = vmatprep.subr.mxu0 0.0
        %1840 = vmatpush1.msra.mxu0 0.0
        %1841 = vmatprep.subr.mxu0 0.0
        %1842 = vmatpush1.msra.mxu0 0.0
        %1843 = vmatprep.subr.mxu0 0.0
        %1844 = vmatpush1.msra.mxu0 0.0
        %1845 = vmatprep.subr.mxu0 0.0
        %1846 = vmatpush1.msra.mxu0 0.0
        %1847 = vmatprep.subr.mxu0 0.0
        %1848 = vmatpush1.msra.mxu0 0.0
        %1849 = vmatprep.subr.mxu0 0.0
        %1850 = vmatpush1.msra.mxu0 0.0
        %1851 = vmatprep.subr.mxu0 0.0
        %1852 = vmatpush1.msra.mxu0 0.0
        %1853 = vmatprep.subr.mxu0 0.0
        %1854 = vmatpush1.msra.mxu0 0.0
        %1855 = vmatprep.subr.mxu0 0.0
        %1856 = vmatpush1.msra.mxu0 0.0
        %1857 = vmatprep.subr.mxu0 0.0
        %1858 = vmatpush1.msra.mxu0 0.0
        %1859 = vmatprep.mubr.f32.mxu0 0.0
        %v1860 = vand.u32 %v1778, 4294901760
        %v1861 = vsub.f32 %v1778, %v1860
        %v1862 = vand.u32 %v1861, 4294901760
        %v1863 = vsub.f32 %v1861, %v1862
        %v1864 = vand.u32 %v1863, 4294901760
        %1865 = vmatmul.mubr.f32.gmra.mrb[0].mxu0 %v1864
        %v1866 = vpop.f32.mrb[0].mxu0
        %v1867 = vadd.f32 0.0, %v1866
        %v1868 = vpop.f32.mrb[0].mxu0
        %1869 = vdwg.mxu0
        %1870 = vmatprep.subr.mxu0 0.0
        %v1871 = vand.u32 %v356, 4294901760
        %v1872 = vsub.f32 %v356, %v1871
        %v1873 = vand.u32 %v1872, 4294901760
        %v1874 = vsub.f32 %v1872, %v1873
        %v1875 = vand.u32 %v1874, 4294901760
        %1876 = vmatpush1.msra.mxu0 %v1875
        %1877 = vmatprep.subr.mxu0 0.0
        %v1878 = vand.u32 %v357, 4294901760
        %v1879 = vsub.f32 %v357, %v1878
        %v1880 = vand.u32 %v1879, 4294901760
        %v1881 = vsub.f32 %v1879, %v1880
        %v1882 = vand.u32 %v1881, 4294901760
        %1883 = vmatpush1.msra.mxu0 %v1882
        %1884 = vmatprep.subr.mxu0 0.0
        %v1885 = vand.u32 %v358, 4294901760
        %v1886 = vsub.f32 %v358, %v1885
        %v1887 = vand.u32 %v1886, 4294901760
        %v1888 = vsub.f32 %v1886, %v1887
        %v1889 = vand.u32 %v1888, 4294901760
        %1890 = vmatpush1.msra.mxu0 %v1889
        %1891 = vmatprep.subr.mxu0 0.0
        %v1892 = vand.u32 %v359, 4294901760
        %v1893 = vsub.f32 %v359, %v1892
        %v1894 = vand.u32 %v1893, 4294901760
        %v1895 = vsub.f32 %v1893, %v1894
        %v1896 = vand.u32 %v1895, 4294901760
        %1897 = vmatpush1.msra.mxu0 %v1896
        %1898 = vmatprep.subr.mxu0 0.0
        %v1899 = vand.u32 %v360, 4294901760
        %v1900 = vsub.f32 %v360, %v1899
        %v1901 = vand.u32 %v1900, 4294901760
        %v1902 = vsub.f32 %v1900, %v1901
        %v1903 = vand.u32 %v1902, 4294901760
        %1904 = vmatpush1.msra.mxu0 %v1903
        %1905 = vmatprep.subr.mxu0 0.0
        %v1906 = vand.u32 %v361, 4294901760
        %v1907 = vsub.f32 %v361, %v1906
        %v1908 = vand.u32 %v1907, 4294901760
        %v1909 = vsub.f32 %v1907, %v1908
        %v1910 = vand.u32 %v1909, 4294901760
        %1911 = vmatpush1.msra.mxu0 %v1910
        %1912 = vmatprep.subr.mxu0 0.0
        %v1913 = vand.u32 %v362, 4294901760
        %v1914 = vsub.f32 %v362, %v1913
        %v1915 = vand.u32 %v1914, 4294901760
        %v1916 = vsub.f32 %v1914, %v1915
        %v1917 = vand.u32 %v1916, 4294901760
        %1918 = vmatpush1.msra.mxu0 %v1917
        %1919 = vmatprep.subr.mxu0 0.0
        %v1920 = vand.u32 %v363, 4294901760
        %v1921 = vsub.f32 %v363, %v1920
        %v1922 = vand.u32 %v1921, 4294901760
        %v1923 = vsub.f32 %v1921, %v1922
        %v1924 = vand.u32 %v1923, 4294901760
        %1925 = vmatpush1.msra.mxu0 %v1924
        %1926 = vmatprep.subr.mxu0 0.0
        %v1927 = vand.u32 %v364, 4294901760
        %v1928 = vsub.f32 %v364, %v1927
        %v1929 = vand.u32 %v1928, 4294901760
        %v1930 = vsub.f32 %v1928, %v1929
        %v1931 = vand.u32 %v1930, 4294901760
        %1932 = vmatpush1.msra.mxu0 %v1931
        %1933 = vmatprep.subr.mxu0 0.0
        %v1934 = vand.u32 %v365, 4294901760
        %v1935 = vsub.f32 %v365, %v1934
        %v1936 = vand.u32 %v1935, 4294901760
        %v1937 = vsub.f32 %v1935, %v1936
        %v1938 = vand.u32 %v1937, 4294901760
        %1939 = vmatpush1.msra.mxu0 %v1938
        %1940 = vmatprep.subr.mxu0 0.0
        %v1941 = vand.u32 %v366, 4294901760
        %v1942 = vsub.f32 %v366, %v1941
        %v1943 = vand.u32 %v1942, 4294901760
        %v1944 = vsub.f32 %v1942, %v1943
        %v1945 = vand.u32 %v1944, 4294901760
        %1946 = vmatpush1.msra.mxu0 %v1945
        %1947 = vmatprep.subr.mxu0 0.0
        %v1948 = vand.u32 %v367, 4294901760
        %v1949 = vsub.f32 %v367, %v1948
        %v1950 = vand.u32 %v1949, 4294901760
        %v1951 = vsub.f32 %v1949, %v1950
        %v1952 = vand.u32 %v1951, 4294901760
        %1953 = vmatpush1.msra.mxu0 %v1952
        %1954 = vmatprep.subr.mxu0 0.0
        %v1955 = vand.u32 %v368, 4294901760
        %v1956 = vsub.f32 %v368, %v1955
        %v1957 = vand.u32 %v1956, 4294901760
        %v1958 = vsub.f32 %v1956, %v1957
        %v1959 = vand.u32 %v1958, 4294901760
        %1960 = vmatpush1.msra.mxu0 %v1959
        %1961 = vmatprep.subr.mxu0 0.0
        %v1962 = vand.u32 %v369, 4294901760
        %v1963 = vsub.f32 %v369, %v1962
        %v1964 = vand.u32 %v1963, 4294901760
        %v1965 = vsub.f32 %v1963, %v1964
        %v1966 = vand.u32 %v1965, 4294901760
        %1967 = vmatpush1.msra.mxu0 %v1966
        %1968 = vmatprep.subr.mxu0 0.0
        %v1969 = vand.u32 %v370, 4294901760
        %v1970 = vsub.f32 %v370, %v1969
        %v1971 = vand.u32 %v1970, 4294901760
        %v1972 = vsub.f32 %v1970, %v1971
        %v1973 = vand.u32 %v1972, 4294901760
        %1974 = vmatpush1.msra.mxu0 %v1973
        %1975 = vmatprep.subr.mxu0 0.0
        %v1976 = vand.u32 %v371, 4294901760
        %v1977 = vsub.f32 %v371, %v1976
        %v1978 = vand.u32 %v1977, 4294901760
        %v1979 = vsub.f32 %v1977, %v1978
        %v1980 = vand.u32 %v1979, 4294901760
        %1981 = vmatpush1.msra.mxu0 %v1980
        %1982 = vmatprep.subr.mxu0 0.0
        %1983 = vmatpush1.msra.mxu0 0.0
        %1984 = vmatprep.subr.mxu0 0.0
        %1985 = vmatpush1.msra.mxu0 0.0
        %1986 = vmatprep.subr.mxu0 0.0
        %1987 = vmatpush1.msra.mxu0 0.0
        %1988 = vmatprep.subr.mxu0 0.0
        %1989 = vmatpush1.msra.mxu0 0.0
        %1990 = vmatprep.subr.mxu0 0.0
        %1991 = vmatpush1.msra.mxu0 0.0
        %1992 = vmatprep.subr.mxu0 0.0
        %1993 = vmatpush1.msra.mxu0 0.0
        %1994 = vmatprep.subr.mxu0 0.0
        %1995 = vmatpush1.msra.mxu0 0.0
        %1996 = vmatprep.subr.mxu0 0.0
        %1997 = vmatpush1.msra.mxu0 0.0
        %1998 = vmatprep.subr.mxu0 0.0
        %1999 = vmatpush1.msra.mxu0 0.0
        %2000 = vmatprep.subr.mxu0 0.0
        %2001 = vmatpush1.msra.mxu0 0.0
        %2002 = vmatprep.subr.mxu0 0.0
        %2003 = vmatpush1.msra.mxu0 0.0
        %2004 = vmatprep.subr.mxu0 0.0
        %2005 = vmatpush1.msra.mxu0 0.0
        %2006 = vmatprep.subr.mxu0 0.0
        %2007 = vmatpush1.msra.mxu0 0.0
        %2008 = vmatprep.subr.mxu0 0.0
        %2009 = vmatpush1.msra.mxu0 0.0
        %2010 = vmatprep.subr.mxu0 0.0
        %2011 = vmatpush1.msra.mxu0 0.0
        %2012 = vmatprep.subr.mxu0 0.0
        %2013 = vmatpush1.msra.mxu0 0.0
        %2014 = vmatprep.mubr.f32.mxu0 0.0
        %v2015 = vand.u32 %v1778, 4294901760
        %2016 = vmatmul.mubr.f32.gmra.mrb[0].mxu0 %v2015
        %v2017 = vpop.f32.mrb[0].mxu0
        %v2018 = vadd.f32 %v1867, %v2017
        %v2019 = vpop.f32.mrb[0].mxu0
        %2020 = vdwg.mxu0
        %2021 = vmatprep.subr.mxu0 0.0
        %v2022 = vand.u32 %v356, 4294901760
        %v2023 = vsub.f32 %v356, %v2022
        %2024 = vmatpush1.msra.mxu0 %v2023
        %2025 = vmatprep.subr.mxu0 0.0
        %v2026 = vand.u32 %v357, 4294901760
        %v2027 = vsub.f32 %v357, %v2026
        %2028 = vmatpush1.msra.mxu0 %v2027
        %2029 = vmatprep.subr.mxu0 0.0
        %v2030 = vand.u32 %v358, 4294901760
        %v2031 = vsub.f32 %v358, %v2030
        %2032 = vmatpush1.msra.mxu0 %v2031
        %2033 = vmatprep.subr.mxu0 0.0
        %v2034 = vand.u32 %v359, 4294901760
        %v2035 = vsub.f32 %v359, %v2034
        %2036 = vmatpush1.msra.mxu0 %v2035
        %2037 = vmatprep.subr.mxu0 0.0
        %v2038 = vand.u32 %v360, 4294901760
        %v2039 = vsub.f32 %v360, %v2038
        %2040 = vmatpush1.msra.mxu0 %v2039
        %2041 = vmatprep.subr.mxu0 0.0
        %v2042 = vand.u32 %v361, 4294901760
        %v2043 = vsub.f32 %v361, %v2042
        %2044 = vmatpush1.msra.mxu0 %v2043
        %2045 = vmatprep.subr.mxu0 0.0
        %v2046 = vand.u32 %v362, 4294901760
        %v2047 = vsub.f32 %v362, %v2046
        %2048 = vmatpush1.msra.mxu0 %v2047
        %2049 = vmatprep.subr.mxu0 0.0
        %v2050 = vand.u32 %v363, 4294901760
        %v2051 = vsub.f32 %v363, %v2050
        %2052 = vmatpush1.msra.mxu0 %v2051
        %2053 = vmatprep.subr.mxu0 0.0
        %v2054 = vand.u32 %v364, 4294901760
        %v2055 = vsub.f32 %v364, %v2054
        %2056 = vmatpush1.msra.mxu0 %v2055
        %2057 = vmatprep.subr.mxu0 0.0
        %v2058 = vand.u32 %v365, 4294901760
        %v2059 = vsub.f32 %v365, %v2058
        %2060 = vmatpush1.msra.mxu0 %v2059
        %2061 = vmatprep.subr.mxu0 0.0
        %v2062 = vand.u32 %v366, 4294901760
        %v2063 = vsub.f32 %v366, %v2062
        %2064 = vmatpush1.msra.mxu0 %v2063
        %2065 = vmatprep.subr.mxu0 0.0
        %v2066 = vand.u32 %v367, 4294901760
        %v2067 = vsub.f32 %v367, %v2066
        %2068 = vmatpush1.msra.mxu0 %v2067
        %2069 = vmatprep.subr.mxu0 0.0
        %v2070 = vand.u32 %v368, 4294901760
        %v2071 = vsub.f32 %v368, %v2070
        %2072 = vmatpush1.msra.mxu0 %v2071
        %2073 = vmatprep.subr.mxu0 0.0
        %v2074 = vand.u32 %v369, 4294901760
        %v2075 = vsub.f32 %v369, %v2074
        %2076 = vmatpush1.msra.mxu0 %v2075
        %2077 = vmatprep.subr.mxu0 0.0
        %v2078 = vand.u32 %v370, 4294901760
        %v2079 = vsub.f32 %v370, %v2078
        %2080 = vmatpush1.msra.mxu0 %v2079
        %2081 = vmatprep.subr.mxu0 0.0
        %v2082 = vand.u32 %v371, 4294901760
        %v2083 = vsub.f32 %v371, %v2082
        %2084 = vmatpush1.msra.mxu0 %v2083
        %2085 = vmatprep.subr.mxu0 0.0
        %2086 = vmatpush1.msra.mxu0 0.0
        %2087 = vmatprep.subr.mxu0 0.0
        %2088 = vmatpush1.msra.mxu0 0.0
        %2089 = vmatprep.subr.mxu0 0.0
        %2090 = vmatpush1.msra.mxu0 0.0
        %2091 = vmatprep.subr.mxu0 0.0
        %2092 = vmatpush1.msra.mxu0 0.0
        %2093 = vmatprep.subr.mxu0 0.0
        %2094 = vmatpush1.msra.mxu0 0.0
        %2095 = vmatprep.subr.mxu0 0.0
        %2096 = vmatpush1.msra.mxu0 0.0
        %2097 = vmatprep.subr.mxu0 0.0
        %2098 = vmatpush1.msra.mxu0 0.0
        %2099 = vmatprep.subr.mxu0 0.0
        %2100 = vmatpush1.msra.mxu0 0.0
        %2101 = vmatprep.subr.mxu0 0.0
        %2102 = vmatpush1.msra.mxu0 0.0
        %2103 = vmatprep.subr.mxu0 0.0
        %2104 = vmatpush1.msra.mxu0 0.0
        %2105 = vmatprep.subr.mxu0 0.0
        %2106 = vmatpush1.msra.mxu0 0.0
        %2107 = vmatprep.subr.mxu0 0.0
        %2108 = vmatpush1.msra.mxu0 0.0
        %2109 = vmatprep.subr.mxu0 0.0
        %2110 = vmatpush1.msra.mxu0 0.0
        %2111 = vmatprep.subr.mxu0 0.0
        %2112 = vmatpush1.msra.mxu0 0.0
        %2113 = vmatprep.subr.mxu0 0.0
        %2114 = vmatpush1.msra.mxu0 0.0
        %2115 = vmatprep.subr.mxu0 0.0
        %2116 = vmatpush1.msra.mxu0 0.0
        %2117 = vmatprep.mubr.f32.mxu0 0.0
        %v2118 = vand.u32 %v1778, 4294901760
        %v2119 = vsub.f32 %v1778, %v2118
        %2120 = vmatmul.mubr.f32.gmra.mrb[0].mxu0 %v2119
        %v2121 = vpop.f32.mrb[0].mxu0
        %v2122 = vadd.f32 %v2018, %v2121
        %v2123 = vpop.f32.mrb[0].mxu0
        %2124 = vdwg.mxu0
        %2125 = vmatprep.subr.mxu0 0.0
        %v2126 = vand.u32 %v356, 4294901760
        %2127 = vmatpush1.msra.mxu0 %v2126
        %2128 = vmatprep.subr.mxu0 0.0
        %v2129 = vand.u32 %v357, 4294901760
        %2130 = vmatpush1.msra.mxu0 %v2129
        %2131 = vmatprep.subr.mxu0 0.0
        %v2132 = vand.u32 %v358, 4294901760
        %2133 = vmatpush1.msra.mxu0 %v2132
        %2134 = vmatprep.subr.mxu0 0.0
        %v2135 = vand.u32 %v359, 4294901760
        %2136 = vmatpush1.msra.mxu0 %v2135
        %2137 = vmatprep.subr.mxu0 0.0
        %v2138 = vand.u32 %v360, 4294901760
        %2139 = vmatpush1.msra.mxu0 %v2138
        %2140 = vmatprep.subr.mxu0 0.0
        %v2141 = vand.u32 %v361, 4294901760
        %2142 = vmatpush1.msra.mxu0 %v2141
        %2143 = vmatprep.subr.mxu0 0.0
        %v2144 = vand.u32 %v362, 4294901760
        %2145 = vmatpush1.msra.mxu0 %v2144
        %2146 = vmatprep.subr.mxu0 0.0
        %v2147 = vand.u32 %v363, 4294901760
        %2148 = vmatpush1.msra.mxu0 %v2147
        %2149 = vmatprep.subr.mxu0 0.0
        %v2150 = vand.u32 %v364, 4294901760
        %2151 = vmatpush1.msra.mxu0 %v2150
        %2152 = vmatprep.subr.mxu0 0.0
        %v2153 = vand.u32 %v365, 4294901760
        %2154 = vmatpush1.msra.mxu0 %v2153
        %2155 = vmatprep.subr.mxu0 0.0
        %v2156 = vand.u32 %v366, 4294901760
        %2157 = vmatpush1.msra.mxu0 %v2156
        %2158 = vmatprep.subr.mxu0 0.0
        %v2159 = vand.u32 %v367, 4294901760
        %2160 = vmatpush1.msra.mxu0 %v2159
        %2161 = vmatprep.subr.mxu0 0.0
        %v2162 = vand.u32 %v368, 4294901760
        %2163 = vmatpush1.msra.mxu0 %v2162
        %2164 = vmatprep.subr.mxu0 0.0
        %v2165 = vand.u32 %v369, 4294901760
        %2166 = vmatpush1.msra.mxu0 %v2165
        %2167 = vmatprep.subr.mxu0 0.0
        %v2168 = vand.u32 %v370, 4294901760
        %2169 = vmatpush1.msra.mxu0 %v2168
        %2170 = vmatprep.subr.mxu0 0.0
        %v2171 = vand.u32 %v371, 4294901760
        %2172 = vmatpush1.msra.mxu0 %v2171
        %2173 = vmatprep.subr.mxu0 0.0
        %2174 = vmatpush1.msra.mxu0 0.0
        %2175 = vmatprep.subr.mxu0 0.0
        %2176 = vmatpush1.msra.mxu0 0.0
        %2177 = vmatprep.subr.mxu0 0.0
        %2178 = vmatpush1.msra.mxu0 0.0
        %2179 = vmatprep.subr.mxu0 0.0
        %2180 = vmatpush1.msra.mxu0 0.0
        %2181 = vmatprep.subr.mxu0 0.0
        %2182 = vmatpush1.msra.mxu0 0.0
        %2183 = vmatprep.subr.mxu0 0.0
        %2184 = vmatpush1.msra.mxu0 0.0
        %2185 = vmatprep.subr.mxu0 0.0
        %2186 = vmatpush1.msra.mxu0 0.0
        %2187 = vmatprep.subr.mxu0 0.0
        %2188 = vmatpush1.msra.mxu0 0.0
        %2189 = vmatprep.subr.mxu0 0.0
        %2190 = vmatpush1.msra.mxu0 0.0
        %2191 = vmatprep.subr.mxu0 0.0
        %2192 = vmatpush1.msra.mxu0 0.0
        %2193 = vmatprep.subr.mxu0 0.0
        %2194 = vmatpush1.msra.mxu0 0.0
        %2195 = vmatprep.subr.mxu0 0.0
        %2196 = vmatpush1.msra.mxu0 0.0
        %2197 = vmatprep.subr.mxu0 0.0
        %2198 = vmatpush1.msra.mxu0 0.0
        %2199 = vmatprep.subr.mxu0 0.0
        %2200 = vmatpush1.msra.mxu0 0.0
        %2201 = vmatprep.subr.mxu0 0.0
        %2202 = vmatpush1.msra.mxu0 0.0
        %2203 = vmatprep.subr.mxu0 0.0
        %2204 = vmatpush1.msra.mxu0 0.0
        %2205 = vmatprep.mubr.f32.mxu0 0.0
        %v2206 = vand.u32 %v1778, 4294901760
        %v2207 = vsub.f32 %v1778, %v2206
        %v2208 = vand.u32 %v2207, 4294901760
        %2209 = vmatmul.mubr.f32.gmra.mrb[0].mxu0 %v2208
        %v2210 = vpop.f32.mrb[0].mxu0
        %v2211 = vadd.f32 %v2122, %v2210
        %v2212 = vpop.f32.mrb[0].mxu0
        %2213 = vdwg.mxu0
        %2214 = vmatprep.subr.mxu0 0.0
        %v2215 = vand.u32 %v356, 4294901760
        %v2216 = vsub.f32 %v356, %v2215
        %v2217 = vand.u32 %v2216, 4294901760
        %2218 = vmatpush1.msra.mxu0 %v2217
        %2219 = vmatprep.subr.mxu0 0.0
        %v2220 = vand.u32 %v357, 4294901760
        %v2221 = vsub.f32 %v357, %v2220
        %v2222 = vand.u32 %v2221, 4294901760
        %2223 = vmatpush1.msra.mxu0 %v2222
        %2224 = vmatprep.subr.mxu0 0.0
        %v2225 = vand.u32 %v358, 4294901760
        %v2226 = vsub.f32 %v358, %v2225
        %v2227 = vand.u32 %v2226, 4294901760
        %2228 = vmatpush1.msra.mxu0 %v2227
        %2229 = vmatprep.subr.mxu0 0.0
        %v2230 = vand.u32 %v359, 4294901760
        %v2231 = vsub.f32 %v359, %v2230
        %v2232 = vand.u32 %v2231, 4294901760
        %2233 = vmatpush1.msra.mxu0 %v2232
        %2234 = vmatprep.subr.mxu0 0.0
        %v2235 = vand.u32 %v360, 4294901760
        %v2236 = vsub.f32 %v360, %v2235
        %v2237 = vand.u32 %v2236, 4294901760
        %2238 = vmatpush1.msra.mxu0 %v2237
        %2239 = vmatprep.subr.mxu0 0.0
        %v2240 = vand.u32 %v361, 4294901760
        %v2241 = vsub.f32 %v361, %v2240
        %v2242 = vand.u32 %v2241, 4294901760
        %2243 = vmatpush1.msra.mxu0 %v2242
        %2244 = vmatprep.subr.mxu0 0.0
        %v2245 = vand.u32 %v362, 4294901760
        %v2246 = vsub.f32 %v362, %v2245
        %v2247 = vand.u32 %v2246, 4294901760
        %2248 = vmatpush1.msra.mxu0 %v2247
        %2249 = vmatprep.subr.mxu0 0.0
        %v2250 = vand.u32 %v363, 4294901760
        %v2251 = vsub.f32 %v363, %v2250
        %v2252 = vand.u32 %v2251, 4294901760
        %2253 = vmatpush1.msra.mxu0 %v2252
        %2254 = vmatprep.subr.mxu0 0.0
        %v2255 = vand.u32 %v364, 4294901760
        %v2256 = vsub.f32 %v364, %v2255
        %v2257 = vand.u32 %v2256, 4294901760
        %2258 = vmatpush1.msra.mxu0 %v2257
        %2259 = vmatprep.subr.mxu0 0.0
        %v2260 = vand.u32 %v365, 4294901760
        %v2261 = vsub.f32 %v365, %v2260
        %v2262 = vand.u32 %v2261, 4294901760
        %2263 = vmatpush1.msra.mxu0 %v2262
        %2264 = vmatprep.subr.mxu0 0.0
        %v2265 = vand.u32 %v366, 4294901760
        %v2266 = vsub.f32 %v366, %v2265
        %v2267 = vand.u32 %v2266, 4294901760
        %2268 = vmatpush1.msra.mxu0 %v2267
        %2269 = vmatprep.subr.mxu0 0.0
        %v2270 = vand.u32 %v367, 4294901760
        %v2271 = vsub.f32 %v367, %v2270
        %v2272 = vand.u32 %v2271, 4294901760
        %2273 = vmatpush1.msra.mxu0 %v2272
        %2274 = vmatprep.subr.mxu0 0.0
        %v2275 = vand.u32 %v368, 4294901760
        %v2276 = vsub.f32 %v368, %v2275
        %v2277 = vand.u32 %v2276, 4294901760
        %2278 = vmatpush1.msra.mxu0 %v2277
        %2279 = vmatprep.subr.mxu0 0.0
        %v2280 = vand.u32 %v369, 4294901760
        %v2281 = vsub.f32 %v369, %v2280
        %v2282 = vand.u32 %v2281, 4294901760
        %2283 = vmatpush1.msra.mxu0 %v2282
        %2284 = vmatprep.subr.mxu0 0.0
        %v2285 = vand.u32 %v370, 4294901760
        %v2286 = vsub.f32 %v370, %v2285
        %v2287 = vand.u32 %v2286, 4294901760
        %2288 = vmatpush1.msra.mxu0 %v2287
        %2289 = vmatprep.subr.mxu0 0.0
        %v2290 = vand.u32 %v371, 4294901760
        %v2291 = vsub.f32 %v371, %v2290
        %v2292 = vand.u32 %v2291, 4294901760
        %2293 = vmatpush1.msra.mxu0 %v2292
        %2294 = vmatprep.subr.mxu0 0.0
        %2295 = vmatpush1.msra.mxu0 0.0
        %2296 = vmatprep.subr.mxu0 0.0
        %2297 = vmatpush1.msra.mxu0 0.0
        %2298 = vmatprep.subr.mxu0 0.0
        %2299 = vmatpush1.msra.mxu0 0.0
        %2300 = vmatprep.subr.mxu0 0.0
        %2301 = vmatpush1.msra.mxu0 0.0
        %2302 = vmatprep.subr.mxu0 0.0
        %2303 = vmatpush1.msra.mxu0 0.0
        %2304 = vmatprep.subr.mxu0 0.0
        %2305 = vmatpush1.msra.mxu0 0.0
        %2306 = vmatprep.subr.mxu0 0.0
        %2307 = vmatpush1.msra.mxu0 0.0
        %2308 = vmatprep.subr.mxu0 0.0
        %2309 = vmatpush1.msra.mxu0 0.0
        %2310 = vmatprep.subr.mxu0 0.0
        %2311 = vmatpush1.msra.mxu0 0.0
        %2312 = vmatprep.subr.mxu0 0.0
        %2313 = vmatpush1.msra.mxu0 0.0
        %2314 = vmatprep.subr.mxu0 0.0
        %2315 = vmatpush1.msra.mxu0 0.0
        %2316 = vmatprep.subr.mxu0 0.0
        %2317 = vmatpush1.msra.mxu0 0.0
        %2318 = vmatprep.subr.mxu0 0.0
        %2319 = vmatpush1.msra.mxu0 0.0
        %2320 = vmatprep.subr.mxu0 0.0
        %2321 = vmatpush1.msra.mxu0 0.0
        %2322 = vmatprep.subr.mxu0 0.0
        %2323 = vmatpush1.msra.mxu0 0.0
        %2324 = vmatprep.subr.mxu0 0.0
        %2325 = vmatpush1.msra.mxu0 0.0
        %2326 = vmatprep.mubr.f32.mxu0 0.0
        %v2327 = vand.u32 %v1778, 4294901760
        %2328 = vmatmul.mubr.f32.gmra.mrb[0].mxu0 %v2327
        %v2329 = vpop.f32.mrb[0].mxu0
        %v2330 = vadd.f32 %v2211, %v2329
        %v2331 = vpop.f32.mrb[0].mxu0
        %2332 = vdwg.mxu0
        %2333 = vmatprep.subr.mxu0 0.0
        %v2334 = vand.u32 %v356, 4294901760
        %2335 = vmatpush1.msra.mxu0 %v2334
        %2336 = vmatprep.subr.mxu0 0.0
        %v2337 = vand.u32 %v357, 4294901760
        %2338 = vmatpush1.msra.mxu0 %v2337
        %2339 = vmatprep.subr.mxu0 0.0
        %v2340 = vand.u32 %v358, 4294901760
        %2341 = vmatpush1.msra.mxu0 %v2340
        %2342 = vmatprep.subr.mxu0 0.0
        %v2343 = vand.u32 %v359, 4294901760
        %2344 = vmatpush1.msra.mxu0 %v2343
        %2345 = vmatprep.subr.mxu0 0.0
        %v2346 = vand.u32 %v360, 4294901760
        %2347 = vmatpush1.msra.mxu0 %v2346
        %2348 = vmatprep.subr.mxu0 0.0
        %v2349 = vand.u32 %v361, 4294901760
        %2350 = vmatpush1.msra.mxu0 %v2349
        %2351 = vmatprep.subr.mxu0 0.0
        %v2352 = vand.u32 %v362, 4294901760
        %2353 = vmatpush1.msra.mxu0 %v2352
        %2354 = vmatprep.subr.mxu0 0.0
        %v2355 = vand.u32 %v363, 4294901760
        %2356 = vmatpush1.msra.mxu0 %v2355
        %2357 = vmatprep.subr.mxu0 0.0
        %v2358 = vand.u32 %v364, 4294901760
        %2359 = vmatpush1.msra.mxu0 %v2358
        %2360 = vmatprep.subr.mxu0 0.0
        %v2361 = vand.u32 %v365, 4294901760
        %2362 = vmatpush1.msra.mxu0 %v2361
        %2363 = vmatprep.subr.mxu0 0.0
        %v2364 = vand.u32 %v366, 4294901760
        %2365 = vmatpush1.msra.mxu0 %v2364
        %2366 = vmatprep.subr.mxu0 0.0
        %v2367 = vand.u32 %v367, 4294901760
        %2368 = vmatpush1.msra.mxu0 %v2367
        %2369 = vmatprep.subr.mxu0 0.0
        %v2370 = vand.u32 %v368, 4294901760
        %2371 = vmatpush1.msra.mxu0 %v2370
        %2372 = vmatprep.subr.mxu0 0.0
        %v2373 = vand.u32 %v369, 4294901760
        %2374 = vmatpush1.msra.mxu0 %v2373
        %2375 = vmatprep.subr.mxu0 0.0
        %v2376 = vand.u32 %v370, 4294901760
        %2377 = vmatpush1.msra.mxu0 %v2376
        %2378 = vmatprep.subr.mxu0 0.0
        %v2379 = vand.u32 %v371, 4294901760
        %2380 = vmatpush1.msra.mxu0 %v2379
        %2381 = vmatprep.subr.mxu0 0.0
        %2382 = vmatpush1.msra.mxu0 0.0
        %2383 = vmatprep.subr.mxu0 0.0
        %2384 = vmatpush1.msra.mxu0 0.0
        %2385 = vmatprep.subr.mxu0 0.0
        %2386 = vmatpush1.msra.mxu0 0.0
        %2387 = vmatprep.subr.mxu0 0.0
        %2388 = vmatpush1.msra.mxu0 0.0
        %2389 = vmatprep.subr.mxu0 0.0
        %2390 = vmatpush1.msra.mxu0 0.0
        %2391 = vmatprep.subr.mxu0 0.0
        %2392 = vmatpush1.msra.mxu0 0.0
        %2393 = vmatprep.subr.mxu0 0.0
        %2394 = vmatpush1.msra.mxu0 0.0
        %2395 = vmatprep.subr.mxu0 0.0
        %2396 = vmatpush1.msra.mxu0 0.0
        %2397 = vmatprep.subr.mxu0 0.0
        %2398 = vmatpush1.msra.mxu0 0.0
        %2399 = vmatprep.subr.mxu0 0.0
        %2400 = vmatpush1.msra.mxu0 0.0
        %2401 = vmatprep.subr.mxu0 0.0
        %2402 = vmatpush1.msra.mxu0 0.0
        %2403 = vmatprep.subr.mxu0 0.0
        %2404 = vmatpush1.msra.mxu0 0.0
        %2405 = vmatprep.subr.mxu0 0.0
        %2406 = vmatpush1.msra.mxu0 0.0
        %2407 = vmatprep.subr.mxu0 0.0
        %2408 = vmatpush1.msra.mxu0 0.0
        %2409 = vmatprep.subr.mxu0 0.0
        %2410 = vmatpush1.msra.mxu0 0.0
        %2411 = vmatprep.subr.mxu0 0.0
        %2412 = vmatpush1.msra.mxu0 0.0
        %2413 = vmatprep.mubr.f32.mxu0 0.0
        %v2414 = vand.u32 %v1778, 4294901760
        %2415 = vmatmul.mubr.f32.gmra.mrb[0].mxu0 %v2414
        %v2416 = vpop.f32.mrb[0].mxu0
        %v2417 = vadd.f32 %v2330, %v2416
        %v2418 = vpop.f32.mrb[0].mxu0
        %2419 = vdwg.mxu0
        %v2421 = vsel %vm1310, %v2417, 0
        %2423 = vmatprep.subr.mxu0 0.0
        %v2424 = vand.u32 %v1316, 4294901760
        %2425 = vmatpush1.msra.mxu0 %v2424
        %2426 = vmatprep.subr.mxu0 0.0
        %2427 = vmatpush1.msra.mxu0 0.0
        %2428 = vmatprep.subr.mxu0 0.0
        %2429 = vmatpush1.msra.mxu0 0.0
        %2430 = vmatprep.subr.mxu0 0.0
        %2431 = vmatpush1.msra.mxu0 0.0
        %2432 = vmatprep.subr.mxu0 0.0
        %2433 = vmatpush1.msra.mxu0 0.0
        %2434 = vmatprep.subr.mxu0 0.0
        %2435 = vmatpush1.msra.mxu0 0.0
        %2436 = vmatprep.subr.mxu0 0.0
        %2437 = vmatpush1.msra.mxu0 0.0
        %2438 = vmatprep.subr.mxu0 0.0
        %2439 = vmatpush1.msra.mxu0 0.0
        %2440 = vmatprep.subr.mxu0 0.0
        %2441 = vmatpush1.msra.mxu0 0.0
        %2442 = vmatprep.subr.mxu0 0.0
        %2443 = vmatpush1.msra.mxu0 0.0
        %2444 = vmatprep.subr.mxu0 0.0
        %2445 = vmatpush1.msra.mxu0 0.0
        %2446 = vmatprep.subr.mxu0 0.0
        %2447 = vmatpush1.msra.mxu0 0.0
        %2448 = vmatprep.subr.mxu0 0.0
        %2449 = vmatpush1.msra.mxu0 0.0
        %2450 = vmatprep.subr.mxu0 0.0
        %2451 = vmatpush1.msra.mxu0 0.0
        %2452 = vmatprep.subr.mxu0 0.0
        %2453 = vmatpush1.msra.mxu0 0.0
        %2454 = vmatprep.subr.mxu0 0.0
        %2455 = vmatpush1.msra.mxu0 0.0
        %2456 = vmatprep.subr.mxu0 0.0
        %2457 = vmatpush1.msra.mxu0 0.0
        %2458 = vmatprep.subr.mxu0 0.0
        %2459 = vmatpush1.msra.mxu0 0.0
        %2460 = vmatprep.subr.mxu0 0.0
        %2461 = vmatpush1.msra.mxu0 0.0
        %2462 = vmatprep.subr.mxu0 0.0
        %2463 = vmatpush1.msra.mxu0 0.0
        %2464 = vmatprep.subr.mxu0 0.0
        %2465 = vmatpush1.msra.mxu0 0.0
        %2466 = vmatprep.subr.mxu0 0.0
        %2467 = vmatpush1.msra.mxu0 0.0
        %2468 = vmatprep.subr.mxu0 0.0
        %2469 = vmatpush1.msra.mxu0 0.0
        %2470 = vmatprep.subr.mxu0 0.0
        %2471 = vmatpush1.msra.mxu0 0.0
        %2472 = vmatprep.subr.mxu0 0.0
        %2473 = vmatpush1.msra.mxu0 0.0
        %2474 = vmatprep.subr.mxu0 0.0
        %2475 = vmatpush1.msra.mxu0 0.0
        %2476 = vmatprep.subr.mxu0 0.0
        %2477 = vmatpush1.msra.mxu0 0.0
        %2478 = vmatprep.subr.mxu0 0.0
        %2479 = vmatpush1.msra.mxu0 0.0
        %2480 = vmatprep.subr.mxu0 0.0
        %2481 = vmatpush1.msra.mxu0 0.0
        %2482 = vmatprep.subr.mxu0 0.0
        %2483 = vmatpush1.msra.mxu0 0.0
        %2484 = vmatprep.subr.mxu0 0.0
        %2485 = vmatpush1.msra.mxu0 0.0
        %2486 = vmatprep.subr.mxu0 0.0
        %2487 = vmatpush1.msra.mxu0 0.0
        %2488 = vmatprep.mubr.f32.mxu0 0.0
        %v2489 = vand.u32 %v2421, 4294901760
        %v2490 = vsub.f32 %v2421, %v2489
        %v2491 = vand.u32 %v2490, 4294901760
        %v2492 = vsub.f32 %v2490, %v2491
        %v2493 = vand.u32 %v2492, 4294901760
        %2494 = vmatmul.mubr.f32.gmra.mrb[0].mxu0 %v2493
        %v2495 = vpop.f32.mrb[0].mxu0
        %v2496 = vadd.f32 1e-05, %v2495
        %v2497 = vpop.f32.mrb[0].mxu0
        %2498 = vdwg.mxu0
        %2499 = vmatprep.subr.mxu0 0.0
        %v2500 = vand.u32 %v1316, 4294901760
        %v2501 = vsub.f32 %v1316, %v2500
        %v2502 = vand.u32 %v2501, 4294901760
        %v2503 = vsub.f32 %v2501, %v2502
        %v2504 = vand.u32 %v2503, 4294901760
        %2505 = vmatpush1.msra.mxu0 %v2504
        %2506 = vmatprep.subr.mxu0 0.0
        %2507 = vmatpush1.msra.mxu0 0.0
        %2508 = vmatprep.subr.mxu0 0.0
        %2509 = vmatpush1.msra.mxu0 0.0
        %2510 = vmatprep.subr.mxu0 0.0
        %2511 = vmatpush1.msra.mxu0 0.0
        %2512 = vmatprep.subr.mxu0 0.0
        %2513 = vmatpush1.msra.mxu0 0.0
        %2514 = vmatprep.subr.mxu0 0.0
        %2515 = vmatpush1.msra.mxu0 0.0
        %2516 = vmatprep.subr.mxu0 0.0
        %2517 = vmatpush1.msra.mxu0 0.0
        %2518 = vmatprep.subr.mxu0 0.0
        %2519 = vmatpush1.msra.mxu0 0.0
        %2520 = vmatprep.subr.mxu0 0.0
        %2521 = vmatpush1.msra.mxu0 0.0
        %2522 = vmatprep.subr.mxu0 0.0
        %2523 = vmatpush1.msra.mxu0 0.0
        %2524 = vmatprep.subr.mxu0 0.0
        %2525 = vmatpush1.msra.mxu0 0.0
        %2526 = vmatprep.subr.mxu0 0.0
        %2527 = vmatpush1.msra.mxu0 0.0
        %2528 = vmatprep.subr.mxu0 0.0
        %2529 = vmatpush1.msra.mxu0 0.0
        %2530 = vmatprep.subr.mxu0 0.0
        %2531 = vmatpush1.msra.mxu0 0.0
        %2532 = vmatprep.subr.mxu0 0.0
        %2533 = vmatpush1.msra.mxu0 0.0
        %2534 = vmatprep.subr.mxu0 0.0
        %2535 = vmatpush1.msra.mxu0 0.0
        %2536 = vmatprep.subr.mxu0 0.0
        %2537 = vmatpush1.msra.mxu0 0.0
        %2538 = vmatprep.subr.mxu0 0.0
        %2539 = vmatpush1.msra.mxu0 0.0
        %2540 = vmatprep.subr.mxu0 0.0
        %2541 = vmatpush1.msra.mxu0 0.0
        %2542 = vmatprep.subr.mxu0 0.0
        %2543 = vmatpush1.msra.mxu0 0.0
        %2544 = vmatprep.subr.mxu0 0.0
        %2545 = vmatpush1.msra.mxu0 0.0
        %2546 = vmatprep.subr.mxu0 0.0
        %2547 = vmatpush1.msra.mxu0 0.0
        %2548 = vmatprep.subr.mxu0 0.0
        %2549 = vmatpush1.msra.mxu0 0.0
        %2550 = vmatprep.subr.mxu0 0.0
        %2551 = vmatpush1.msra.mxu0 0.0
        %2552 = vmatprep.subr.mxu0 0.0
        %2553 = vmatpush1.msra.mxu0 0.0
        %2554 = vmatprep.subr.mxu0 0.0
        %2555 = vmatpush1.msra.mxu0 0.0
        %2556 = vmatprep.subr.mxu0 0.0
        %2557 = vmatpush1.msra.mxu0 0.0
        %2558 = vmatprep.subr.mxu0 0.0
        %2559 = vmatpush1.msra.mxu0 0.0
        %2560 = vmatprep.subr.mxu0 0.0
        %2561 = vmatpush1.msra.mxu0 0.0
        %2562 = vmatprep.subr.mxu0 0.0
        %2563 = vmatpush1.msra.mxu0 0.0
        %2564 = vmatprep.subr.mxu0 0.0
        %2565 = vmatpush1.msra.mxu0 0.0
        %2566 = vmatprep.subr.mxu0 0.0
        %2567 = vmatpush1.msra.mxu0 0.0
        %2568 = vmatprep.mubr.f32.mxu0 0.0
        %v2569 = vand.u32 %v2421, 4294901760
        %2570 = vmatmul.mubr.f32.gmra.mrb[0].mxu0 %v2569
        %v2571 = vpop.f32.mrb[0].mxu0
        %v2572 = vadd.f32 %v2496, %v2571
        %v2573 = vpop.f32.mrb[0].mxu0
        %2574 = vdwg.mxu0
        %2575 = vmatprep.subr.mxu0 0.0
        %v2576 = vand.u32 %v1316, 4294901760
        %v2577 = vsub.f32 %v1316, %v2576
        %2578 = vmatpush1.msra.mxu0 %v2577
        %2579 = vmatprep.subr.mxu0 0.0
        %2580 = vmatpush1.msra.mxu0 0.0
        %2581 = vmatprep.subr.mxu0 0.0
        %2582 = vmatpush1.msra.mxu0 0.0
        %2583 = vmatprep.subr.mxu0 0.0
        %2584 = vmatpush1.msra.mxu0 0.0
        %2585 = vmatprep.subr.mxu0 0.0
        %2586 = vmatpush1.msra.mxu0 0.0
        %2587 = vmatprep.subr.mxu0 0.0
        %2588 = vmatpush1.msra.mxu0 0.0
        %2589 = vmatprep.subr.mxu0 0.0
        %2590 = vmatpush1.msra.mxu0 0.0
        %2591 = vmatprep.subr.mxu0 0.0
        %2592 = vmatpush1.msra.mxu0 0.0
        %2593 = vmatprep.subr.mxu0 0.0
        %2594 = vmatpush1.msra.mxu0 0.0
        %2595 = vmatprep.subr.mxu0 0.0
        %2596 = vmatpush1.msra.mxu0 0.0
        %2597 = vmatprep.subr.mxu0 0.0
        %2598 = vmatpush1.msra.mxu0 0.0
        %2599 = vmatprep.subr.mxu0 0.0
        %2600 = vmatpush1.msra.mxu0 0.0
        %2601 = vmatprep.subr.mxu0 0.0
        %2602 = vmatpush1.msra.mxu0 0.0
        %2603 = vmatprep.subr.mxu0 0.0
        %2604 = vmatpush1.msra.mxu0 0.0
        %2605 = vmatprep.subr.mxu0 0.0
        %2606 = vmatpush1.msra.mxu0 0.0
        %2607 = vmatprep.subr.mxu0 0.0
        %2608 = vmatpush1.msra.mxu0 0.0
        %2609 = vmatprep.subr.mxu0 0.0
        %2610 = vmatpush1.msra.mxu0 0.0
        %2611 = vmatprep.subr.mxu0 0.0
        %2612 = vmatpush1.msra.mxu0 0.0
        %2613 = vmatprep.subr.mxu0 0.0
        %2614 = vmatpush1.msra.mxu0 0.0
        %2615 = vmatprep.subr.mxu0 0.0
        %2616 = vmatpush1.msra.mxu0 0.0
        %2617 = vmatprep.subr.mxu0 0.0
        %2618 = vmatpush1.msra.mxu0 0.0
        %2619 = vmatprep.subr.mxu0 0.0
        %2620 = vmatpush1.msra.mxu0 0.0
        %2621 = vmatprep.subr.mxu0 0.0
        %2622 = vmatpush1.msra.mxu0 0.0
        %2623 = vmatprep.subr.mxu0 0.0
        %2624 = vmatpush1.msra.mxu0 0.0
        %2625 = vmatprep.subr.mxu0 0.0
        %2626 = vmatpush1.msra.mxu0 0.0
        %2627 = vmatprep.subr.mxu0 0.0
        %2628 = vmatpush1.msra.mxu0 0.0
        %2629 = vmatprep.subr.mxu0 0.0
        %2630 = vmatpush1.msra.mxu0 0.0
        %2631 = vmatprep.subr.mxu0 0.0
        %2632 = vmatpush1.msra.mxu0 0.0
        %2633 = vmatprep.subr.mxu0 0.0
        %2634 = vmatpush1.msra.mxu0 0.0
        %2635 = vmatprep.subr.mxu0 0.0
        %2636 = vmatpush1.msra.mxu0 0.0
        %2637 = vmatprep.subr.mxu0 0.0
        %2638 = vmatpush1.msra.mxu0 0.0
        %2639 = vmatprep.subr.mxu0 0.0
        %2640 = vmatpush1.msra.mxu0 0.0
        %2641 = vmatprep.mubr.f32.mxu0 0.0
        %v2642 = vand.u32 %v2421, 4294901760
        %v2643 = vsub.f32 %v2421, %v2642
        %2644 = vmatmul.mubr.f32.gmra.mrb[0].mxu0 %v2643
        %v2645 = vpop.f32.mrb[0].mxu0
        %v2646 = vadd.f32 %v2572, %v2645
        %v2647 = vpop.f32.mrb[0].mxu0
        %2648 = vdwg.mxu0
        %2649 = vmatprep.subr.mxu0 0.0
        %v2650 = vand.u32 %v1316, 4294901760
        %2651 = vmatpush1.msra.mxu0 %v2650
        %2652 = vmatprep.subr.mxu0 0.0
        %2653 = vmatpush1.msra.mxu0 0.0
        %2654 = vmatprep.subr.mxu0 0.0
        %2655 = vmatpush1.msra.mxu0 0.0
        %2656 = vmatprep.subr.mxu0 0.0
        %2657 = vmatpush1.msra.mxu0 0.0
        %2658 = vmatprep.subr.mxu0 0.0
        %2659 = vmatpush1.msra.mxu0 0.0
        %2660 = vmatprep.subr.mxu0 0.0
        %2661 = vmatpush1.msra.mxu0 0.0
        %2662 = vmatprep.subr.mxu0 0.0
        %2663 = vmatpush1.msra.mxu0 0.0
        %2664 = vmatprep.subr.mxu0 0.0
        %2665 = vmatpush1.msra.mxu0 0.0
        %2666 = vmatprep.subr.mxu0 0.0
        %2667 = vmatpush1.msra.mxu0 0.0
        %2668 = vmatprep.subr.mxu0 0.0
        %2669 = vmatpush1.msra.mxu0 0.0
        %2670 = vmatprep.subr.mxu0 0.0
        %2671 = vmatpush1.msra.mxu0 0.0
        %2672 = vmatprep.subr.mxu0 0.0
        %2673 = vmatpush1.msra.mxu0 0.0
        %2674 = vmatprep.subr.mxu0 0.0
        %2675 = vmatpush1.msra.mxu0 0.0
        %2676 = vmatprep.subr.mxu0 0.0
        %2677 = vmatpush1.msra.mxu0 0.0
        %2678 = vmatprep.subr.mxu0 0.0
        %2679 = vmatpush1.msra.mxu0 0.0
        %2680 = vmatprep.subr.mxu0 0.0
        %2681 = vmatpush1.msra.mxu0 0.0
        %2682 = vmatprep.subr.mxu0 0.0
        %2683 = vmatpush1.msra.mxu0 0.0
        %2684 = vmatprep.subr.mxu0 0.0
        %2685 = vmatpush1.msra.mxu0 0.0
        %2686 = vmatprep.subr.mxu0 0.0
        %2687 = vmatpush1.msra.mxu0 0.0
        %2688 = vmatprep.subr.mxu0 0.0
        %2689 = vmatpush1.msra.mxu0 0.0
        %2690 = vmatprep.subr.mxu0 0.0
        %2691 = vmatpush1.msra.mxu0 0.0
        %2692 = vmatprep.subr.mxu0 0.0
        %2693 = vmatpush1.msra.mxu0 0.0
        %2694 = vmatprep.subr.mxu0 0.0
        %2695 = vmatpush1.msra.mxu0 0.0
        %2696 = vmatprep.subr.mxu0 0.0
        %2697 = vmatpush1.msra.mxu0 0.0
        %2698 = vmatprep.subr.mxu0 0.0
        %2699 = vmatpush1.msra.mxu0 0.0
        %2700 = vmatprep.subr.mxu0 0.0
        %2701 = vmatpush1.msra.mxu0 0.0
        %2702 = vmatprep.subr.mxu0 0.0
        %2703 = vmatpush1.msra.mxu0 0.0
        %2704 = vmatprep.subr.mxu0 0.0
        %2705 = vmatpush1.msra.mxu0 0.0
        %2706 = vmatprep.subr.mxu0 0.0
        %2707 = vmatpush1.msra.mxu0 0.0
        %2708 = vmatprep.subr.mxu0 0.0
        %2709 = vmatpush1.msra.mxu0 0.0
        %2710 = vmatprep.subr.mxu0 0.0
        %2711 = vmatpush1.msra.mxu0 0.0
        %2712 = vmatprep.subr.mxu0 0.0
        %2713 = vmatpush1.msra.mxu0 0.0
        %2714 = vmatprep.mubr.f32.mxu0 0.0
        %v2715 = vand.u32 %v2421, 4294901760
        %v2716 = vsub.f32 %v2421, %v2715
        %v2717 = vand.u32 %v2716, 4294901760
        %2718 = vmatmul.mubr.f32.gmra.mrb[0].mxu0 %v2717
        %v2719 = vpop.f32.mrb[0].mxu0
        %v2720 = vadd.f32 %v2646, %v2719
        %v2721 = vpop.f32.mrb[0].mxu0
        %2722 = vdwg.mxu0
        %2723 = vmatprep.subr.mxu0 0.0
        %v2724 = vand.u32 %v1316, 4294901760
        %v2725 = vsub.f32 %v1316, %v2724
        %v2726 = vand.u32 %v2725, 4294901760
        %2727 = vmatpush1.msra.mxu0 %v2726
        %2728 = vmatprep.subr.mxu0 0.0
        %2729 = vmatpush1.msra.mxu0 0.0
        %2730 = vmatprep.subr.mxu0 0.0
        %2731 = vmatpush1.msra.mxu0 0.0
        %2732 = vmatprep.subr.mxu0 0.0
        %2733 = vmatpush1.msra.mxu0 0.0
        %2734 = vmatprep.subr.mxu0 0.0
        %2735 = vmatpush1.msra.mxu0 0.0
        %2736 = vmatprep.subr.mxu0 0.0
        %2737 = vmatpush1.msra.mxu0 0.0
        %2738 = vmatprep.subr.mxu0 0.0
        %2739 = vmatpush1.msra.mxu0 0.0
        %2740 = vmatprep.subr.mxu0 0.0
        %2741 = vmatpush1.msra.mxu0 0.0
        %2742 = vmatprep.subr.mxu0 0.0
        %2743 = vmatpush1.msra.mxu0 0.0
        %2744 = vmatprep.subr.mxu0 0.0
        %2745 = vmatpush1.msra.mxu0 0.0
        %2746 = vmatprep.subr.mxu0 0.0
        %2747 = vmatpush1.msra.mxu0 0.0
        %2748 = vmatprep.subr.mxu0 0.0
        %2749 = vmatpush1.msra.mxu0 0.0
        %2750 = vmatprep.subr.mxu0 0.0
        %2751 = vmatpush1.msra.mxu0 0.0
        %2752 = vmatprep.subr.mxu0 0.0
        %2753 = vmatpush1.msra.mxu0 0.0
        %2754 = vmatprep.subr.mxu0 0.0
        %2755 = vmatpush1.msra.mxu0 0.0
        %2756 = vmatprep.subr.mxu0 0.0
        %2757 = vmatpush1.msra.mxu0 0.0
        %2758 = vmatprep.subr.mxu0 0.0
        %2759 = vmatpush1.msra.mxu0 0.0
        %2760 = vmatprep.subr.mxu0 0.0
        %2761 = vmatpush1.msra.mxu0 0.0
        %2762 = vmatprep.subr.mxu0 0.0
        %2763 = vmatpush1.msra.mxu0 0.0
        %2764 = vmatprep.subr.mxu0 0.0
        %2765 = vmatpush1.msra.mxu0 0.0
        %2766 = vmatprep.subr.mxu0 0.0
        %2767 = vmatpush1.msra.mxu0 0.0
        %2768 = vmatprep.subr.mxu0 0.0
        %2769 = vmatpush1.msra.mxu0 0.0
        %2770 = vmatprep.subr.mxu0 0.0
        %2771 = vmatpush1.msra.mxu0 0.0
        %2772 = vmatprep.subr.mxu0 0.0
        %2773 = vmatpush1.msra.mxu0 0.0
        %2774 = vmatprep.subr.mxu0 0.0
        %2775 = vmatpush1.msra.mxu0 0.0
        %2776 = vmatprep.subr.mxu0 0.0
        %2777 = vmatpush1.msra.mxu0 0.0
        %2778 = vmatprep.subr.mxu0 0.0
        %2779 = vmatpush1.msra.mxu0 0.0
        %2780 = vmatprep.subr.mxu0 0.0
        %2781 = vmatpush1.msra.mxu0 0.0
        %2782 = vmatprep.subr.mxu0 0.0
        %2783 = vmatpush1.msra.mxu0 0.0
        %2784 = vmatprep.subr.mxu0 0.0
        %2785 = vmatpush1.msra.mxu0 0.0
        %2786 = vmatprep.subr.mxu0 0.0
        %2787 = vmatpush1.msra.mxu0 0.0
        %2788 = vmatprep.subr.mxu0 0.0
        %2789 = vmatpush1.msra.mxu0 0.0
        %2790 = vmatprep.mubr.f32.mxu0 0.0
        %v2791 = vand.u32 %v2421, 4294901760
        %2792 = vmatmul.mubr.f32.gmra.mrb[0].mxu0 %v2791
        %v2793 = vpop.f32.mrb[0].mxu0
        %v2794 = vadd.f32 %v2720, %v2793
        %v2795 = vpop.f32.mrb[0].mxu0
        %2796 = vdwg.mxu0
        %2797 = vmatprep.subr.mxu0 0.0
        %v2798 = vand.u32 %v1316, 4294901760
        %2799 = vmatpush1.msra.mxu0 %v2798
        %2800 = vmatprep.subr.mxu0 0.0
        %2801 = vmatpush1.msra.mxu0 0.0
        %2802 = vmatprep.subr.mxu0 0.0
        %2803 = vmatpush1.msra.mxu0 0.0
        %2804 = vmatprep.subr.mxu0 0.0
        %2805 = vmatpush1.msra.mxu0 0.0
        %2806 = vmatprep.subr.mxu0 0.0
        %2807 = vmatpush1.msra.mxu0 0.0
        %2808 = vmatprep.subr.mxu0 0.0
        %2809 = vmatpush1.msra.mxu0 0.0
        %2810 = vmatprep.subr.mxu0 0.0
        %2811 = vmatpush1.msra.mxu0 0.0
        %2812 = vmatprep.subr.mxu0 0.0
        %2813 = vmatpush1.msra.mxu0 0.0
        %2814 = vmatprep.subr.mxu0 0.0
        %2815 = vmatpush1.msra.mxu0 0.0
        %2816 = vmatprep.subr.mxu0 0.0
        %2817 = vmatpush1.msra.mxu0 0.0
        %2818 = vmatprep.subr.mxu0 0.0
        %2819 = vmatpush1.msra.mxu0 0.0
        %2820 = vmatprep.subr.mxu0 0.0
        %2821 = vmatpush1.msra.mxu0 0.0
        %2822 = vmatprep.subr.mxu0 0.0
        %2823 = vmatpush1.msra.mxu0 0.0
        %2824 = vmatprep.subr.mxu0 0.0
        %2825 = vmatpush1.msra.mxu0 0.0
        %2826 = vmatprep.subr.mxu0 0.0
        %2827 = vmatpush1.msra.mxu0 0.0
        %2828 = vmatprep.subr.mxu0 0.0
        %2829 = vmatpush1.msra.mxu0 0.0
        %2830 = vmatprep.subr.mxu0 0.0
        %2831 = vmatpush1.msra.mxu0 0.0
        %2832 = vmatprep.subr.mxu0 0.0
        %2833 = vmatpush1.msra.mxu0 0.0
        %2834 = vmatprep.subr.mxu0 0.0
        %2835 = vmatpush1.msra.mxu0 0.0
        %2836 = vmatprep.subr.mxu0 0.0
        %2837 = vmatpush1.msra.mxu0 0.0
        %2838 = vmatprep.subr.mxu0 0.0
        %2839 = vmatpush1.msra.mxu0 0.0
        %2840 = vmatprep.subr.mxu0 0.0
        %2841 = vmatpush1.msra.mxu0 0.0
        %2842 = vmatprep.subr.mxu0 0.0
        %2843 = vmatpush1.msra.mxu0 0.0
        %2844 = vmatprep.subr.mxu0 0.0
        %2845 = vmatpush1.msra.mxu0 0.0
        %2846 = vmatprep.subr.mxu0 0.0
        %2847 = vmatpush1.msra.mxu0 0.0
        %2848 = vmatprep.subr.mxu0 0.0
        %2849 = vmatpush1.msra.mxu0 0.0
        %2850 = vmatprep.subr.mxu0 0.0
        %2851 = vmatpush1.msra.mxu0 0.0
        %2852 = vmatprep.subr.mxu0 0.0
        %2853 = vmatpush1.msra.mxu0 0.0
        %2854 = vmatprep.subr.mxu0 0.0
        %2855 = vmatpush1.msra.mxu0 0.0
        %2856 = vmatprep.subr.mxu0 0.0
        %2857 = vmatpush1.msra.mxu0 0.0
        %2858 = vmatprep.subr.mxu0 0.0
        %2859 = vmatpush1.msra.mxu0 0.0
        %2860 = vmatprep.subr.mxu0 0.0
        %2861 = vmatpush1.msra.mxu0 0.0
        %2862 = vmatprep.mubr.f32.mxu0 0.0
        %v2863 = vand.u32 %v2421, 4294901760
        %2864 = vmatmul.mubr.f32.gmra.mrb[0].mxu0 %v2863
        %v2865 = vpop.f32.mrb[0].mxu0
        %v2866 = vadd.f32 %v2794, %v2865
        %v2867 = vpop.f32.mrb[0].mxu0
        %2868 = vdwg.mxu0
        %v2869 = vrsqrt.pop %v2866
        %v2870 = vmul.f32 %v2869, %v660
        %v2871 = vlaneseq
        %v2872 = vshrl.u32 %v2871, 7
        %v2873 = vsub.s32 0, %v2872
        %v2874 = vrot.slane %v2870, %v2873
        %v2875 = vmul.f32 %v1768, %v2874
        %v2876 = vmul.f32 %v1769, %v2874
        %v2877 = vlaneseq
        %v2878 = vshrl.u32 %v2877, 7
        %v2879 = vsub.s32 0, %v2878
        %v2880 = vrot.slane %v661, %v2879
        %v2881 = vadd.f32 %v2875, %v2880
        %v2882 = vadd.f32 %v2876, %v2880
        %v2883 = vld [vmem:[%s350] sm:$0x3]
        %v2884 = vadd.f32 %v2883, 1.0
        %v2885 = vlaneseq
        %v2886 = vshrl.u32 %v2885, 7
        %v2887 = vsub.s32 0, %v2886
        %v2888 = vrot.slane %v2884, %v2887
        %v2889 = vmul.f32 %v2881, %v2888
        %v2890 = vmul.f32 %v2882, %v2888
        %v2891 = vlaneseq
        %v2892 = vshrl.u32 %v2891, 7
        %v2893 = vsub.s32 1, %v2892
        %v2894 = vrot.slane %v2883, %v2893
        %v2895 = vadd.f32 %v2889, %v2894
        %v2896 = vadd.f32 %v2890, %v2894
        %v2897 = vxor.u32 %v2895, 2147483648
        %v2898 = vxor.u32 %v2896, 2147483648
        %v2899 = vmul.f32 %v2897, 1.442695
        %v2900 = vpow.pop %v2899
        %v2901 = vmul.f32 %v2898, 1.442695
        %v2902 = vpow.pop %v2901
        %v2903 = vadd.f32 %v2900, 1.0
        %v2904 = vadd.f32 %v2902, 1.0
        %v2905 = vrcp.pop %v2903
        %v2906 = vmul.f32 1.0, %v2905
        %v2907 = vrcp.pop %v2904
        %v2908 = vmul.f32 1.0, %v2907
        %v2909 = vmul.f32 %v2895, %v2906
        %v2910 = vmul.f32 %v2896, %v2908
        %v2911 = vld [vmem:[%s3] sm:$0xff]
        %v2912 = vld [vmem:[%s3 + $0x8] sm:$0xff]
        %v2913 = vld [vmem:[%s3 + $0x10] sm:$0xff]
        %v2914 = vld [vmem:[%s3 + $0x18] sm:$0xff]
        %v2915 = vld [vmem:[%s3 + $0x20] sm:$0xff]
        %v2916 = vld [vmem:[%s3 + $0x28] sm:$0xff]
        %v2917 = vld [vmem:[%s3 + $0x30] sm:$0xff]
        %v2918 = vld [vmem:[%s3 + $0x38] sm:$0xff]
        %v2919 = vld [vmem:[%s4 + $0x6] sm:$0x1]
        %v2920 = vlaneseq
        %v2921 = vshrl.u32 %v2920, 7
        %v2922 = vsub.s32 0, %v2921
        %v2923 = vrot.slane %v2919, %v2922
        %2924 = vmatprep.subr.mxu0 0.0
        %2925 = vmatpush1.msra.mxu0 %v2911
        %2926 = vmatprep.subr.mxu0 0.0
        %2927 = vmatpush1.msra.mxu0 %v2912
        %2928 = vmatprep.subr.mxu0 0.0
        %2929 = vmatpush1.msra.mxu0 %v2913
        %2930 = vmatprep.subr.mxu0 0.0
        %2931 = vmatpush1.msra.mxu0 %v2914
        %2932 = vmatprep.subr.mxu0 0.0
        %2933 = vmatpush1.msra.mxu0 %v2915
        %2934 = vmatprep.subr.mxu0 0.0
        %2935 = vmatpush1.msra.mxu0 %v2916
        %2936 = vmatprep.subr.mxu0 0.0
        %2937 = vmatpush1.msra.mxu0 %v2917
        %2938 = vmatprep.subr.mxu0 0.0
        %2939 = vmatpush1.msra.mxu0 %v2918
        %2940 = vmatprep.subr.mxu0 0.0
        %2941 = vmatpush1.msra.mxu0 0.0
        %2942 = vmatprep.subr.mxu0 0.0
        %2943 = vmatpush1.msra.mxu0 0.0
        %2944 = vmatprep.subr.mxu0 0.0
        %2945 = vmatpush1.msra.mxu0 0.0
        %2946 = vmatprep.subr.mxu0 0.0
        %2947 = vmatpush1.msra.mxu0 0.0
        %2948 = vmatprep.subr.mxu0 0.0
        %2949 = vmatpush1.msra.mxu0 0.0
        %2950 = vmatprep.subr.mxu0 0.0
        %2951 = vmatpush1.msra.mxu0 0.0
        %2952 = vmatprep.subr.mxu0 0.0
        %2953 = vmatpush1.msra.mxu0 0.0
        %2954 = vmatprep.subr.mxu0 0.0
        %2955 = vmatpush1.msra.mxu0 0.0
        %2956 = vmatprep.subr.mxu0 0.0
        %2957 = vmatpush1.msra.mxu0 0.0
        %2958 = vmatprep.subr.mxu0 0.0
        %2959 = vmatpush1.msra.mxu0 0.0
        %2960 = vmatprep.subr.mxu0 0.0
        %2961 = vmatpush1.msra.mxu0 0.0
        %2962 = vmatprep.subr.mxu0 0.0
        %2963 = vmatpush1.msra.mxu0 0.0
        %2964 = vmatprep.subr.mxu0 0.0
        %2965 = vmatpush1.msra.mxu0 0.0
        %2966 = vmatprep.subr.mxu0 0.0
        %2967 = vmatpush1.msra.mxu0 0.0
        %2968 = vmatprep.subr.mxu0 0.0
        %2969 = vmatpush1.msra.mxu0 0.0
        %2970 = vmatprep.subr.mxu0 0.0
        %2971 = vmatpush1.msra.mxu0 0.0
        %2972 = vmatprep.subr.mxu0 0.0
        %2973 = vmatpush1.msra.mxu0 0.0
        %2974 = vmatprep.subr.mxu0 0.0
        %2975 = vmatpush1.msra.mxu0 0.0
        %2976 = vmatprep.subr.mxu0 0.0
        %2977 = vmatpush1.msra.mxu0 0.0
        %2978 = vmatprep.subr.mxu0 0.0
        %2979 = vmatpush1.msra.mxu0 0.0
        %2980 = vmatprep.subr.mxu0 0.0
        %2981 = vmatpush1.msra.mxu0 0.0
        %2982 = vmatprep.subr.mxu0 0.0
        %2983 = vmatpush1.msra.mxu0 0.0
        %2984 = vmatprep.subr.mxu0 0.0
        %2985 = vmatpush1.msra.mxu0 0.0
        %2986 = vmatprep.subr.mxu0 0.0
        %2987 = vmatpush1.msra.mxu0 0.0
        %2988 = vmatprep.mubr.f32.mxu0 0.0
        %2989 = vmatmul.mubr.f32.gmra.mrb[0].mxu0 %v383
        %v2990 = vpop.f32.mrb[0].mxu0
        %v2991 = vadd.f32 %v2923, %v2990
        %v2992 = vpop.f32.mrb[0].mxu0
        %2993 = vmatprep.mubr.f32.mxu0 0.0
        %2994 = vmatmul.mubr.f32.gmra.mrb[0].mxu0 %v386
        %v2995 = vpop.f32.mrb[0].mxu0
        %v2996 = vadd.f32 %v2923, %v2995
        %v2997 = vpop.f32.mrb[0].mxu0
        %2998 = vdwg.mxu0
        %v2999 = vld [vmem:[#allocation5] sm:$0xff]
        %v3000 = vld [vmem:[#allocation5 + $0x8] sm:$0xff]
        %v3001 = vld [vmem:[#allocation5 + $0x10] sm:$0xff]
        %v3002 = vld [vmem:[#allocation5 + $0x18] sm:$0xff]
        %v3003 = vld [vmem:[#allocation5 + $0x20] sm:$0xff]
        %v3004 = vld [vmem:[#allocation5 + $0x28] sm:$0xff]
        %v3005 = vld [vmem:[#allocation5 + $0x30] sm:$0xff]
        %v3006 = vld [vmem:[#allocation5 + $0x38] sm:$0xff]
        %v3007 = vld [vmem:[#allocation5 + $0x40] sm:$0xff]
        %v3008 = vld [vmem:[#allocation5 + $0x48] sm:$0xff]
        %v3009 = vld [vmem:[#allocation5 + $0x50] sm:$0xff]
        %v3010 = vld [vmem:[#allocation5 + $0x58] sm:$0xff]
        %v3011 = vld [vmem:[#allocation5 + $0x60] sm:$0xff]
        %v3012 = vld [vmem:[#allocation5 + $0x68] sm:$0xff]
        %v3013 = vld [vmem:[#allocation5 + $0x70] sm:$0xff]
        %v3014 = vld [vmem:[#allocation5 + $0x78] sm:$0xff]
        %3015 = vmatprep.subr.mxu0 0.0
        %3016 = vmatpush1.msra.mxu0 %v2999
        %3017 = vmatprep.subr.mxu0 0.0
        %3018 = vmatpush1.msra.mxu0 %v3000
        %3019 = vmatprep.subr.mxu0 0.0
        %3020 = vmatpush1.msra.mxu0 %v3001
        %3021 = vmatprep.subr.mxu0 0.0
        %3022 = vmatpush1.msra.mxu0 %v3002
        %3023 = vmatprep.subr.mxu0 0.0
        %3024 = vmatpush1.msra.mxu0 %v3003
        %3025 = vmatprep.subr.mxu0 0.0
        %3026 = vmatpush1.msra.mxu0 %v3004
        %3027 = vmatprep.subr.mxu0 0.0
        %3028 = vmatpush1.msra.mxu0 %v3005
        %3029 = vmatprep.subr.mxu0 0.0
        %3030 = vmatpush1.msra.mxu0 %v3006
        %3031 = vmatprep.subr.mxu0 0.0
        %3032 = vmatpush1.msra.mxu0 %v3007
        %3033 = vmatprep.subr.mxu0 0.0
        %3034 = vmatpush1.msra.mxu0 %v3008
        %3035 = vmatprep.subr.mxu0 0.0
        %3036 = vmatpush1.msra.mxu0 %v3009
        %3037 = vmatprep.subr.mxu0 0.0
        %3038 = vmatpush1.msra.mxu0 %v3010
        %3039 = vmatprep.subr.mxu0 0.0
        %3040 = vmatpush1.msra.mxu0 %v3011
        %3041 = vmatprep.subr.mxu0 0.0
        %3042 = vmatpush1.msra.mxu0 %v3012
        %3043 = vmatprep.subr.mxu0 0.0
        %3044 = vmatpush1.msra.mxu0 %v3013
        %3045 = vmatprep.subr.mxu0 0.0
        %3046 = vmatpush1.msra.mxu0 %v3014
        %3047 = vmatprep.subr.mxu0 0.0
        %3048 = vmatpush1.msra.mxu0 0.0
        %3049 = vmatprep.subr.mxu0 0.0
        %3050 = vmatpush1.msra.mxu0 0.0
        %3051 = vmatprep.subr.mxu0 0.0
        %3052 = vmatpush1.msra.mxu0 0.0
        %3053 = vmatprep.subr.mxu0 0.0
        %3054 = vmatpush1.msra.mxu0 0.0
        %3055 = vmatprep.subr.mxu0 0.0
        %3056 = vmatpush1.msra.mxu0 0.0
        %3057 = vmatprep.subr.mxu0 0.0
        %3058 = vmatpush1.msra.mxu0 0.0
        %3059 = vmatprep.subr.mxu0 0.0
        %3060 = vmatpush1.msra.mxu0 0.0
        %3061 = vmatprep.subr.mxu0 0.0
        %3062 = vmatpush1.msra.mxu0 0.0
        %3063 = vmatprep.subr.mxu0 0.0
        %3064 = vmatpush1.msra.mxu0 0.0
        %3065 = vmatprep.subr.mxu0 0.0
        %3066 = vmatpush1.msra.mxu0 0.0
        %3067 = vmatprep.subr.mxu0 0.0
        %3068 = vmatpush1.msra.mxu0 0.0
        %3069 = vmatprep.subr.mxu0 0.0
        %3070 = vmatpush1.msra.mxu0 0.0
        %3071 = vmatprep.subr.mxu0 0.0
        %3072 = vmatpush1.msra.mxu0 0.0
        %3073 = vmatprep.subr.mxu0 0.0
        %3074 = vmatpush1.msra.mxu0 0.0
        %3075 = vmatprep.subr.mxu0 0.0
        %3076 = vmatpush1.msra.mxu0 0.0
        %3077 = vmatprep.subr.mxu0 0.0
        %3078 = vmatpush1.msra.mxu0 0.0
        %3079 = vmatprep.mubr.f32.mxu0 0.0
        %3080 = vmatmul.mubr.f32.gmra.mrb[0].mxu0 %v2909
        %v3081 = vpop.f32.mrb[0].mxu0
        %v3082 = vadd.f32 0.0, %v3081
        %v3083 = vpop.f32.mrb[0].mxu0
        %3084 = vmatprep.mubr.f32.mxu0 0.0
        %3085 = vmatmul.mubr.f32.gmra.mrb[0].mxu0 %v2910
        %v3086 = vpop.f32.mrb[0].mxu0
        %v3087 = vadd.f32 0.0, %v3086
        %v3088 = vpop.f32.mrb[0].mxu0
        %3089 = vdwg.mxu0
        %s3090 = scalar_lea.vmem [#allocation5], 128
        %v3091 = vld [vmem:[%s3090] sm:$0xff]
        %v3092 = vld [vmem:[%s3090 + $0x8] sm:$0xff]
        %v3093 = vld [vmem:[%s3090 + $0x10] sm:$0xff]
        %v3094 = vld [vmem:[%s3090 + $0x18] sm:$0xff]
        %v3095 = vld [vmem:[%s3090 + $0x20] sm:$0xff]
        %v3096 = vld [vmem:[%s3090 + $0x28] sm:$0xff]
        %v3097 = vld [vmem:[%s3090 + $0x30] sm:$0xff]
        %v3098 = vld [vmem:[%s3090 + $0x38] sm:$0xff]
        %v3099 = vld [vmem:[%s3090 + $0x40] sm:$0xff]
        %v3100 = vld [vmem:[%s3090 + $0x48] sm:$0xff]
        %v3101 = vld [vmem:[%s3090 + $0x50] sm:$0xff]
        %v3102 = vld [vmem:[%s3090 + $0x58] sm:$0xff]
        %v3103 = vld [vmem:[%s3090 + $0x60] sm:$0xff]
        %v3104 = vld [vmem:[%s3090 + $0x68] sm:$0xff]
        %v3105 = vld [vmem:[%s3090 + $0x70] sm:$0xff]
        %v3106 = vld [vmem:[%s3090 + $0x78] sm:$0xff]
        %3107 = vmatprep.subr.mxu0 0.0
        %3108 = vmatpush1.msra.mxu0 %v3091
        %3109 = vmatprep.subr.mxu0 0.0
        %3110 = vmatpush1.msra.mxu0 %v3092
        %3111 = vmatprep.subr.mxu0 0.0
        %3112 = vmatpush1.msra.mxu0 %v3093
        %3113 = vmatprep.subr.mxu0 0.0
        %3114 = vmatpush1.msra.mxu0 %v3094
        %3115 = vmatprep.subr.mxu0 0.0
        %3116 = vmatpush1.msra.mxu0 %v3095
        %3117 = vmatprep.subr.mxu0 0.0
        %3118 = vmatpush1.msra.mxu0 %v3096
        %3119 = vmatprep.subr.mxu0 0.0
        %3120 = vmatpush1.msra.mxu0 %v3097
        %3121 = vmatprep.subr.mxu0 0.0
        %3122 = vmatpush1.msra.mxu0 %v3098
        %3123 = vmatprep.subr.mxu0 0.0
        %3124 = vmatpush1.msra.mxu0 %v3099
        %3125 = vmatprep.subr.mxu0 0.0
        %3126 = vmatpush1.msra.mxu0 %v3100
        %3127 = vmatprep.subr.mxu0 0.0
        %3128 = vmatpush1.msra.mxu0 %v3101
        %3129 = vmatprep.subr.mxu0 0.0
        %3130 = vmatpush1.msra.mxu0 %v3102
        %3131 = vmatprep.subr.mxu0 0.0
        %3132 = vmatpush1.msra.mxu0 %v3103
        %3133 = vmatprep.subr.mxu0 0.0
        %3134 = vmatpush1.msra.mxu0 %v3104
        %3135 = vmatprep.subr.mxu0 0.0
        %3136 = vmatpush1.msra.mxu0 %v3105
        %3137 = vmatprep.subr.mxu0 0.0
        %3138 = vmatpush1.msra.mxu0 %v3106
        %3139 = vmatprep.subr.mxu0 0.0
        %3140 = vmatpush1.msra.mxu0 0.0
        %3141 = vmatprep.subr.mxu0 0.0
        %3142 = vmatpush1.msra.mxu0 0.0
        %3143 = vmatprep.subr.mxu0 0.0
        %3144 = vmatpush1.msra.mxu0 0.0
        %3145 = vmatprep.subr.mxu0 0.0
        %3146 = vmatpush1.msra.mxu0 0.0
        %3147 = vmatprep.subr.mxu0 0.0
        %3148 = vmatpush1.msra.mxu0 0.0
        %3149 = vmatprep.subr.mxu0 0.0
        %3150 = vmatpush1.msra.mxu0 0.0
        %3151 = vmatprep.subr.mxu0 0.0
        %3152 = vmatpush1.msra.mxu0 0.0
        %3153 = vmatprep.subr.mxu0 0.0
        %3154 = vmatpush1.msra.mxu0 0.0
        %3155 = vmatprep.subr.mxu0 0.0
        %3156 = vmatpush1.msra.mxu0 0.0
        %3157 = vmatprep.subr.mxu0 0.0
        %3158 = vmatpush1.msra.mxu0 0.0
        %3159 = vmatprep.subr.mxu0 0.0
        %3160 = vmatpush1.msra.mxu0 0.0
        %3161 = vmatprep.subr.mxu0 0.0
        %3162 = vmatpush1.msra.mxu0 0.0
        %3163 = vmatprep.subr.mxu0 0.0
        %3164 = vmatpush1.msra.mxu0 0.0
        %3165 = vmatprep.subr.mxu0 0.0
        %3166 = vmatpush1.msra.mxu0 0.0
        %3167 = vmatprep.subr.mxu0 0.0
        %3168 = vmatpush1.msra.mxu0 0.0
        %3169 = vmatprep.subr.mxu0 0.0
        %3170 = vmatpush1.msra.mxu0 0.0
        %3171 = vmatprep.mubr.f32.mxu0 0.0
        %3172 = vmatmul.mubr.f32.gmra.mrb[0].mxu0 %v2909
        %v3173 = vpop.f32.mrb[0].mxu0
        %v3174 = vadd.f32 0.0, %v3173
        %v3175 = vpop.f32.mrb[0].mxu0
        %3176 = vmatprep.mubr.f32.mxu0 0.0
        %3177 = vmatmul.mubr.f32.gmra.mrb[0].mxu0 %v2910
        %v3178 = vpop.f32.mrb[0].mxu0
        %v3179 = vadd.f32 0.0, %v3178
        %v3180 = vpop.f32.mrb[0].mxu0
        %3181 = vdwg.mxu0
        %s3182 = scalar_lea.vmem [#allocation5], 256
        %v3183 = vld [vmem:[%s3182] sm:$0xff]
        %v3184 = vld [vmem:[%s3182 + $0x8] sm:$0xff]
        %v3185 = vld [vmem:[%s3182 + $0x10] sm:$0xff]
        %v3186 = vld [vmem:[%s3182 + $0x18] sm:$0xff]
        %v3187 = vld [vmem:[%s3182 + $0x20] sm:$0xff]
        %v3188 = vld [vmem:[%s3182 + $0x28] sm:$0xff]
        %v3189 = vld [vmem:[%s3182 + $0x30] sm:$0xff]
        %v3190 = vld [vmem:[%s3182 + $0x38] sm:$0xff]
        %v3191 = vld [vmem:[%s3182 + $0x40] sm:$0xff]
        %v3192 = vld [vmem:[%s3182 + $0x48] sm:$0xff]
        %v3193 = vld [vmem:[%s3182 + $0x50] sm:$0xff]
        %v3194 = vld [vmem:[%s3182 + $0x58] sm:$0xff]
        %v3195 = vld [vmem:[%s3182 + $0x60] sm:$0xff]
        %v3196 = vld [vmem:[%s3182 + $0x68] sm:$0xff]
        %v3197 = vld [vmem:[%s3182 + $0x70] sm:$0xff]
        %v3198 = vld [vmem:[%s3182 + $0x78] sm:$0xff]
        %3199 = vmatprep.subr.mxu0 0.0
        %3200 = vmatpush1.msra.mxu0 %v3183
        %3201 = vmatprep.subr.mxu0 0.0
        %3202 = vmatpush1.msra.mxu0 %v3184
        %3203 = vmatprep.subr.mxu0 0.0
        %3204 = vmatpush1.msra.mxu0 %v3185
        %3205 = vmatprep.subr.mxu0 0.0
        %3206 = vmatpush1.msra.mxu0 %v3186
        %3207 = vmatprep.subr.mxu0 0.0
        %3208 = vmatpush1.msra.mxu0 %v3187
        %3209 = vmatprep.subr.mxu0 0.0
        %3210 = vmatpush1.msra.mxu0 %v3188
        %3211 = vmatprep.subr.mxu0 0.0
        %3212 = vmatpush1.msra.mxu0 %v3189
        %3213 = vmatprep.subr.mxu0 0.0
        %3214 = vmatpush1.msra.mxu0 %v3190
        %3215 = vmatprep.subr.mxu0 0.0
        %3216 = vmatpush1.msra.mxu0 %v3191
        %3217 = vmatprep.subr.mxu0 0.0
        %3218 = vmatpush1.msra.mxu0 %v3192
        %3219 = vmatprep.subr.mxu0 0.0
        %3220 = vmatpush1.msra.mxu0 %v3193
        %3221 = vmatprep.subr.mxu0 0.0
        %3222 = vmatpush1.msra.mxu0 %v3194
        %3223 = vmatprep.subr.mxu0 0.0
        %3224 = vmatpush1.msra.mxu0 %v3195
        %3225 = vmatprep.subr.mxu0 0.0
        %3226 = vmatpush1.msra.mxu0 %v3196
        %3227 = vmatprep.subr.mxu0 0.0
        %3228 = vmatpush1.msra.mxu0 %v3197
        %3229 = vmatprep.subr.mxu0 0.0
        %3230 = vmatpush1.msra.mxu0 %v3198
        %3231 = vmatprep.subr.mxu0 0.0
        %3232 = vmatpush1.msra.mxu0 0.0
        %3233 = vmatprep.subr.mxu0 0.0
        %3234 = vmatpush1.msra.mxu0 0.0
        %3235 = vmatprep.subr.mxu0 0.0
        %3236 = vmatpush1.msra.mxu0 0.0
        %3237 = vmatprep.subr.mxu0 0.0
        %3238 = vmatpush1.msra.mxu0 0.0
        %3239 = vmatprep.subr.mxu0 0.0
        %3240 = vmatpush1.msra.mxu0 0.0
        %3241 = vmatprep.subr.mxu0 0.0
        %3242 = vmatpush1.msra.mxu0 0.0
        %3243 = vmatprep.subr.mxu0 0.0
        %3244 = vmatpush1.msra.mxu0 0.0
        %3245 = vmatprep.subr.mxu0 0.0
        %3246 = vmatpush1.msra.mxu0 0.0
        %3247 = vmatprep.subr.mxu0 0.0
        %3248 = vmatpush1.msra.mxu0 0.0
        %3249 = vmatprep.subr.mxu0 0.0
        %3250 = vmatpush1.msra.mxu0 0.0
        %3251 = vmatprep.subr.mxu0 0.0
        %3252 = vmatpush1.msra.mxu0 0.0
        %3253 = vmatprep.subr.mxu0 0.0
        %3254 = vmatpush1.msra.mxu0 0.0
        %3255 = vmatprep.subr.mxu0 0.0
        %3256 = vmatpush1.msra.mxu0 0.0
        %3257 = vmatprep.subr.mxu0 0.0
        %3258 = vmatpush1.msra.mxu0 0.0
        %3259 = vmatprep.subr.mxu0 0.0
        %3260 = vmatpush1.msra.mxu0 0.0
        %3261 = vmatprep.subr.mxu0 0.0
        %3262 = vmatpush1.msra.mxu0 0.0
        %3263 = vmatprep.mubr.f32.mxu0 0.0
        %3264 = vmatmul.mubr.f32.gmra.mrb[0].mxu0 %v2909
        %v3265 = vpop.f32.mrb[0].mxu0
        %v3266 = vadd.f32 0.0, %v3265
        %v3267 = vpop.f32.mrb[0].mxu0
        %3268 = vmatprep.mubr.f32.mxu0 0.0
        %3269 = vmatmul.mubr.f32.gmra.mrb[0].mxu0 %v2910
        %v3270 = vpop.f32.mrb[0].mxu0
        %v3271 = vadd.f32 0.0, %v3270
        %v3272 = vpop.f32.mrb[0].mxu0
        %3273 = vdwg.mxu0
        %v3274 = vrot.slane %v3082, 7
        %v3275 = vrot.slane %v3087, 7
        %v3276 = vsel %vm635, %v3274, %v3275
        %v3277 = vsel %vm635, %v3275, %v3274
        %v3278 = vsel %vm631, 0.0, %v3277
        %v3279 = vsel %vm632, 0.0, %v3276
        %v3280 = vrot.slane %v3266, 1
        %v3281 = vrot.slane %v3271, 1
        %v3282 = vsel %vm644, %v3280, %v3281
        %v3283 = vsel %vm644, %v3281, %v3280
        %v3284 = vsel %vm640, 0.0, %v3282
        %v3285 = vsel %vm641, 0.0, %v3283
        %v3286 = vadd.f32 %v3278, %v3174
        %v3287 = vadd.f32 %v3279, %v3179
        %v3288 = vadd.f32 %v3286, %v3284
        %v3289 = vadd.f32 %v3287, %v3285
        %v3290 = vld [vmem:[%s4 + $0x3] sm:$0x1]
        %v3291 = vlaneseq
        %v3292 = vshrl.u32 %v3291, 7
        %v3293 = vsub.s32 0, %v3292
        %v3294 = vrot.slane %v3290, %v3293
        %v3295 = vadd.f32 %v3288, %v3294
        %v3296 = vadd.f32 %v3289, %v3294
        %v3297 = vld [vmem:[%s4 + $0x4] sm:$0x1]
        %v3298 = vld [vmem:[%s4 + $0x5] sm:$0x1]
        %v3299 = vadd.f32 %v3295, %v3296
        %v3300 = vrot.slane %v3299, 4
        %v3301 = vadd.f32 %v3299, %v3300
        %v3302 = vrot.slane %v3301, 2
        %v3303 = vadd.f32 %v3301, %v3302
        %v3304 = vrot.slane %v3303, 1
        %v3305 = vadd.f32 %v3303, %v3304
        %3306 = vmatprep.subr.mxu0 0.0
        %v3307 = vand.u32 %v356, 4294901760
        %3308 = vmatpush1.msra.mxu0 %v3307
        %3309 = vmatprep.subr.mxu0 0.0
        %v3310 = vand.u32 %v357, 4294901760
        %3311 = vmatpush1.msra.mxu0 %v3310
        %3312 = vmatprep.subr.mxu0 0.0
        %v3313 = vand.u32 %v358, 4294901760
        %3314 = vmatpush1.msra.mxu0 %v3313
        %3315 = vmatprep.subr.mxu0 0.0
        %v3316 = vand.u32 %v359, 4294901760
        %3317 = vmatpush1.msra.mxu0 %v3316
        %3318 = vmatprep.subr.mxu0 0.0
        %v3319 = vand.u32 %v360, 4294901760
        %3320 = vmatpush1.msra.mxu0 %v3319
        %3321 = vmatprep.subr.mxu0 0.0
        %v3322 = vand.u32 %v361, 4294901760
        %3323 = vmatpush1.msra.mxu0 %v3322
        %3324 = vmatprep.subr.mxu0 0.0
        %v3325 = vand.u32 %v362, 4294901760
        %3326 = vmatpush1.msra.mxu0 %v3325
        %3327 = vmatprep.subr.mxu0 0.0
        %v3328 = vand.u32 %v363, 4294901760
        %3329 = vmatpush1.msra.mxu0 %v3328
        %3330 = vmatprep.subr.mxu0 0.0
        %v3331 = vand.u32 %v364, 4294901760
        %3332 = vmatpush1.msra.mxu0 %v3331
        %3333 = vmatprep.subr.mxu0 0.0
        %v3334 = vand.u32 %v365, 4294901760
        %3335 = vmatpush1.msra.mxu0 %v3334
        %3336 = vmatprep.subr.mxu0 0.0
        %v3337 = vand.u32 %v366, 4294901760
        %3338 = vmatpush1.msra.mxu0 %v3337
        %3339 = vmatprep.subr.mxu0 0.0
        %v3340 = vand.u32 %v367, 4294901760
        %3341 = vmatpush1.msra.mxu0 %v3340
        %3342 = vmatprep.subr.mxu0 0.0
        %v3343 = vand.u32 %v368, 4294901760
        %3344 = vmatpush1.msra.mxu0 %v3343
        %3345 = vmatprep.subr.mxu0 0.0
        %v3346 = vand.u32 %v369, 4294901760
        %3347 = vmatpush1.msra.mxu0 %v3346
        %3348 = vmatprep.subr.mxu0 0.0
        %v3349 = vand.u32 %v370, 4294901760
        %3350 = vmatpush1.msra.mxu0 %v3349
        %3351 = vmatprep.subr.mxu0 0.0
        %v3352 = vand.u32 %v371, 4294901760
        %3353 = vmatpush1.msra.mxu0 %v3352
        %3354 = vmatprep.subr.mxu0 0.0
        %3355 = vmatpush1.msra.mxu0 0.0
        %3356 = vmatprep.subr.mxu0 0.0
        %3357 = vmatpush1.msra.mxu0 0.0
        %3358 = vmatprep.subr.mxu0 0.0
        %3359 = vmatpush1.msra.mxu0 0.0
        %3360 = vmatprep.subr.mxu0 0.0
        %3361 = vmatpush1.msra.mxu0 0.0
        %3362 = vmatprep.subr.mxu0 0.0
        %3363 = vmatpush1.msra.mxu0 0.0
        %3364 = vmatprep.subr.mxu0 0.0
        %3365 = vmatpush1.msra.mxu0 0.0
        %3366 = vmatprep.subr.mxu0 0.0
        %3367 = vmatpush1.msra.mxu0 0.0
        %3368 = vmatprep.subr.mxu0 0.0
        %3369 = vmatpush1.msra.mxu0 0.0
        %3370 = vmatprep.subr.mxu0 0.0
        %3371 = vmatpush1.msra.mxu0 0.0
        %3372 = vmatprep.subr.mxu0 0.0
        %3373 = vmatpush1.msra.mxu0 0.0
        %3374 = vmatprep.subr.mxu0 0.0
        %3375 = vmatpush1.msra.mxu0 0.0
        %3376 = vmatprep.subr.mxu0 0.0
        %3377 = vmatpush1.msra.mxu0 0.0
        %3378 = vmatprep.subr.mxu0 0.0
        %3379 = vmatpush1.msra.mxu0 0.0
        %3380 = vmatprep.subr.mxu0 0.0
        %3381 = vmatpush1.msra.mxu0 0.0
        %3382 = vmatprep.subr.mxu0 0.0
        %3383 = vmatpush1.msra.mxu0 0.0
        %3384 = vmatprep.subr.mxu0 0.0
        %3385 = vmatpush1.msra.mxu0 0.0
        %3386 = vmatprep.mubr.f32.mxu0 0.0
        %v3387 = vand.u32 %v3305, 4294901760
        %v3388 = vsub.f32 %v3305, %v3387
        %v3389 = vand.u32 %v3388, 4294901760
        %v3390 = vsub.f32 %v3388, %v3389
        %v3391 = vand.u32 %v3390, 4294901760
        %3392 = vmatmul.mubr.f32.gmra.mrb[0].mxu0 %v3391
        %v3393 = vpop.f32.mrb[0].mxu0
        %v3394 = vadd.f32 0.0, %v3393
        %v3395 = vpop.f32.mrb[0].mxu0
        %3396 = vdwg.mxu0
        %3397 = vmatprep.subr.mxu0 0.0
        %v3398 = vand.u32 %v356, 4294901760
        %v3399 = vsub.f32 %v356, %v3398
        %v3400 = vand.u32 %v3399, 4294901760
        %v3401 = vsub.f32 %v3399, %v3400
        %v3402 = vand.u32 %v3401, 4294901760
        %3403 = vmatpush1.msra.mxu0 %v3402
        %3404 = vmatprep.subr.mxu0 0.0
        %v3405 = vand.u32 %v357, 4294901760
        %v3406 = vsub.f32 %v357, %v3405
        %v3407 = vand.u32 %v3406, 4294901760
        %v3408 = vsub.f32 %v3406, %v3407
        %v3409 = vand.u32 %v3408, 4294901760
        %3410 = vmatpush1.msra.mxu0 %v3409
        %3411 = vmatprep.subr.mxu0 0.0
        %v3412 = vand.u32 %v358, 4294901760
        %v3413 = vsub.f32 %v358, %v3412
        %v3414 = vand.u32 %v3413, 4294901760
        %v3415 = vsub.f32 %v3413, %v3414
        %v3416 = vand.u32 %v3415, 4294901760
        %3417 = vmatpush1.msra.mxu0 %v3416
        %3418 = vmatprep.subr.mxu0 0.0
        %v3419 = vand.u32 %v359, 4294901760
        %v3420 = vsub.f32 %v359, %v3419
        %v3421 = vand.u32 %v3420, 4294901760
        %v3422 = vsub.f32 %v3420, %v3421
        %v3423 = vand.u32 %v3422, 4294901760
        %3424 = vmatpush1.msra.mxu0 %v3423
        %3425 = vmatprep.subr.mxu0 0.0
        %v3426 = vand.u32 %v360, 4294901760
        %v3427 = vsub.f32 %v360, %v3426
        %v3428 = vand.u32 %v3427, 4294901760
        %v3429 = vsub.f32 %v3427, %v3428
        %v3430 = vand.u32 %v3429, 4294901760
        %3431 = vmatpush1.msra.mxu0 %v3430
        %3432 = vmatprep.subr.mxu0 0.0
        %v3433 = vand.u32 %v361, 4294901760
        %v3434 = vsub.f32 %v361, %v3433
        %v3435 = vand.u32 %v3434, 4294901760
        %v3436 = vsub.f32 %v3434, %v3435
        %v3437 = vand.u32 %v3436, 4294901760
        %3438 = vmatpush1.msra.mxu0 %v3437
        %3439 = vmatprep.subr.mxu0 0.0
        %v3440 = vand.u32 %v362, 4294901760
        %v3441 = vsub.f32 %v362, %v3440
        %v3442 = vand.u32 %v3441, 4294901760
        %v3443 = vsub.f32 %v3441, %v3442
        %v3444 = vand.u32 %v3443, 4294901760
        %3445 = vmatpush1.msra.mxu0 %v3444
        %3446 = vmatprep.subr.mxu0 0.0
        %v3447 = vand.u32 %v363, 4294901760
        %v3448 = vsub.f32 %v363, %v3447
        %v3449 = vand.u32 %v3448, 4294901760
        %v3450 = vsub.f32 %v3448, %v3449
        %v3451 = vand.u32 %v3450, 4294901760
        %3452 = vmatpush1.msra.mxu0 %v3451
        %3453 = vmatprep.subr.mxu0 0.0
        %v3454 = vand.u32 %v364, 4294901760
        %v3455 = vsub.f32 %v364, %v3454
        %v3456 = vand.u32 %v3455, 4294901760
        %v3457 = vsub.f32 %v3455, %v3456
        %v3458 = vand.u32 %v3457, 4294901760
        %3459 = vmatpush1.msra.mxu0 %v3458
        %3460 = vmatprep.subr.mxu0 0.0
        %v3461 = vand.u32 %v365, 4294901760
        %v3462 = vsub.f32 %v365, %v3461
        %v3463 = vand.u32 %v3462, 4294901760
        %v3464 = vsub.f32 %v3462, %v3463
        %v3465 = vand.u32 %v3464, 4294901760
        %3466 = vmatpush1.msra.mxu0 %v3465
        %3467 = vmatprep.subr.mxu0 0.0
        %v3468 = vand.u32 %v366, 4294901760
        %v3469 = vsub.f32 %v366, %v3468
        %v3470 = vand.u32 %v3469, 4294901760
        %v3471 = vsub.f32 %v3469, %v3470
        %v3472 = vand.u32 %v3471, 4294901760
        %3473 = vmatpush1.msra.mxu0 %v3472
        %3474 = vmatprep.subr.mxu0 0.0
        %v3475 = vand.u32 %v367, 4294901760
        %v3476 = vsub.f32 %v367, %v3475
        %v3477 = vand.u32 %v3476, 4294901760
        %v3478 = vsub.f32 %v3476, %v3477
        %v3479 = vand.u32 %v3478, 4294901760
        %3480 = vmatpush1.msra.mxu0 %v3479
        %3481 = vmatprep.subr.mxu0 0.0
        %v3482 = vand.u32 %v368, 4294901760
        %v3483 = vsub.f32 %v368, %v3482
        %v3484 = vand.u32 %v3483, 4294901760
        %v3485 = vsub.f32 %v3483, %v3484
        %v3486 = vand.u32 %v3485, 4294901760
        %3487 = vmatpush1.msra.mxu0 %v3486
        %3488 = vmatprep.subr.mxu0 0.0
        %v3489 = vand.u32 %v369, 4294901760
        %v3490 = vsub.f32 %v369, %v3489
        %v3491 = vand.u32 %v3490, 4294901760
        %v3492 = vsub.f32 %v3490, %v3491
        %v3493 = vand.u32 %v3492, 4294901760
        %3494 = vmatpush1.msra.mxu0 %v3493
        %3495 = vmatprep.subr.mxu0 0.0
        %v3496 = vand.u32 %v370, 4294901760
        %v3497 = vsub.f32 %v370, %v3496
        %v3498 = vand.u32 %v3497, 4294901760
        %v3499 = vsub.f32 %v3497, %v3498
        %v3500 = vand.u32 %v3499, 4294901760
        %3501 = vmatpush1.msra.mxu0 %v3500
        %3502 = vmatprep.subr.mxu0 0.0
        %v3503 = vand.u32 %v371, 4294901760
        %v3504 = vsub.f32 %v371, %v3503
        %v3505 = vand.u32 %v3504, 4294901760
        %v3506 = vsub.f32 %v3504, %v3505
        %v3507 = vand.u32 %v3506, 4294901760
        %3508 = vmatpush1.msra.mxu0 %v3507
        %3509 = vmatprep.subr.mxu0 0.0
        %3510 = vmatpush1.msra.mxu0 0.0
        %3511 = vmatprep.subr.mxu0 0.0
        %3512 = vmatpush1.msra.mxu0 0.0
        %3513 = vmatprep.subr.mxu0 0.0
        %3514 = vmatpush1.msra.mxu0 0.0
        %3515 = vmatprep.subr.mxu0 0.0
        %3516 = vmatpush1.msra.mxu0 0.0
        %3517 = vmatprep.subr.mxu0 0.0
        %3518 = vmatpush1.msra.mxu0 0.0
        %3519 = vmatprep.subr.mxu0 0.0
        %3520 = vmatpush1.msra.mxu0 0.0
        %3521 = vmatprep.subr.mxu0 0.0
        %3522 = vmatpush1.msra.mxu0 0.0
        %3523 = vmatprep.subr.mxu0 0.0
        %3524 = vmatpush1.msra.mxu0 0.0
        %3525 = vmatprep.subr.mxu0 0.0
        %3526 = vmatpush1.msra.mxu0 0.0
        %3527 = vmatprep.subr.mxu0 0.0
        %3528 = vmatpush1.msra.mxu0 0.0
        %3529 = vmatprep.subr.mxu0 0.0
        %3530 = vmatpush1.msra.mxu0 0.0
        %3531 = vmatprep.subr.mxu0 0.0
        %3532 = vmatpush1.msra.mxu0 0.0
        %3533 = vmatprep.subr.mxu0 0.0
        %3534 = vmatpush1.msra.mxu0 0.0
        %3535 = vmatprep.subr.mxu0 0.0
        %3536 = vmatpush1.msra.mxu0 0.0
        %3537 = vmatprep.subr.mxu0 0.0
        %3538 = vmatpush1.msra.mxu0 0.0
        %3539 = vmatprep.subr.mxu0 0.0
        %3540 = vmatpush1.msra.mxu0 0.0
        %3541 = vmatprep.mubr.f32.mxu0 0.0
        %v3542 = vand.u32 %v3305, 4294901760
        %3543 = vmatmul.mubr.f32.gmra.mrb[0].mxu0 %v3542
        %v3544 = vpop.f32.mrb[0].mxu0
        %v3545 = vadd.f32 %v3394, %v3544
        %v3546 = vpop.f32.mrb[0].mxu0
        %3547 = vdwg.mxu0
        %3548 = vmatprep.subr.mxu0 0.0
        %v3549 = vand.u32 %v356, 4294901760
        %v3550 = vsub.f32 %v356, %v3549
        %3551 = vmatpush1.msra.mxu0 %v3550
        %3552 = vmatprep.subr.mxu0 0.0
        %v3553 = vand.u32 %v357, 4294901760
        %v3554 = vsub.f32 %v357, %v3553
        %3555 = vmatpush1.msra.mxu0 %v3554
        %3556 = vmatprep.subr.mxu0 0.0
        %v3557 = vand.u32 %v358, 4294901760
        %v3558 = vsub.f32 %v358, %v3557
        %3559 = vmatpush1.msra.mxu0 %v3558
        %3560 = vmatprep.subr.mxu0 0.0
        %v3561 = vand.u32 %v359, 4294901760
        %v3562 = vsub.f32 %v359, %v3561
        %3563 = vmatpush1.msra.mxu0 %v3562
        %3564 = vmatprep.subr.mxu0 0.0
        %v3565 = vand.u32 %v360, 4294901760
        %v3566 = vsub.f32 %v360, %v3565
        %3567 = vmatpush1.msra.mxu0 %v3566
        %3568 = vmatprep.subr.mxu0 0.0
        %v3569 = vand.u32 %v361, 4294901760
        %v3570 = vsub.f32 %v361, %v3569
        %3571 = vmatpush1.msra.mxu0 %v3570
        %3572 = vmatprep.subr.mxu0 0.0
        %v3573 = vand.u32 %v362, 4294901760
        %v3574 = vsub.f32 %v362, %v3573
        %3575 = vmatpush1.msra.mxu0 %v3574
        %3576 = vmatprep.subr.mxu0 0.0
        %v3577 = vand.u32 %v363, 4294901760
        %v3578 = vsub.f32 %v363, %v3577
        %3579 = vmatpush1.msra.mxu0 %v3578
        %3580 = vmatprep.subr.mxu0 0.0
        %v3581 = vand.u32 %v364, 4294901760
        %v3582 = vsub.f32 %v364, %v3581
        %3583 = vmatpush1.msra.mxu0 %v3582
        %3584 = vmatprep.subr.mxu0 0.0
        %v3585 = vand.u32 %v365, 4294901760
        %v3586 = vsub.f32 %v365, %v3585
        %3587 = vmatpush1.msra.mxu0 %v3586
        %3588 = vmatprep.subr.mxu0 0.0
        %v3589 = vand.u32 %v366, 4294901760
        %v3590 = vsub.f32 %v366, %v3589
        %3591 = vmatpush1.msra.mxu0 %v3590
        %3592 = vmatprep.subr.mxu0 0.0
        %v3593 = vand.u32 %v367, 4294901760
        %v3594 = vsub.f32 %v367, %v3593
        %3595 = vmatpush1.msra.mxu0 %v3594
        %3596 = vmatprep.subr.mxu0 0.0
        %v3597 = vand.u32 %v368, 4294901760
        %v3598 = vsub.f32 %v368, %v3597
        %3599 = vmatpush1.msra.mxu0 %v3598
        %3600 = vmatprep.subr.mxu0 0.0
        %v3601 = vand.u32 %v369, 4294901760
        %v3602 = vsub.f32 %v369, %v3601
        %3603 = vmatpush1.msra.mxu0 %v3602
        %3604 = vmatprep.subr.mxu0 0.0
        %v3605 = vand.u32 %v370, 4294901760
        %v3606 = vsub.f32 %v370, %v3605
        %3607 = vmatpush1.msra.mxu0 %v3606
        %3608 = vmatprep.subr.mxu0 0.0
        %v3609 = vand.u32 %v371, 4294901760
        %v3610 = vsub.f32 %v371, %v3609
        %3611 = vmatpush1.msra.mxu0 %v3610
        %3612 = vmatprep.subr.mxu0 0.0
        %3613 = vmatpush1.msra.mxu0 0.0
        %3614 = vmatprep.subr.mxu0 0.0
        %3615 = vmatpush1.msra.mxu0 0.0
        %3616 = vmatprep.subr.mxu0 0.0
        %3617 = vmatpush1.msra.mxu0 0.0
        %3618 = vmatprep.subr.mxu0 0.0
        %3619 = vmatpush1.msra.mxu0 0.0
        %3620 = vmatprep.subr.mxu0 0.0
        %3621 = vmatpush1.msra.mxu0 0.0
        %3622 = vmatprep.subr.mxu0 0.0
        %3623 = vmatpush1.msra.mxu0 0.0
        %3624 = vmatprep.subr.mxu0 0.0
        %3625 = vmatpush1.msra.mxu0 0.0
        %3626 = vmatprep.subr.mxu0 0.0
        %3627 = vmatpush1.msra.mxu0 0.0
        %3628 = vmatprep.subr.mxu0 0.0
        %3629 = vmatpush1.msra.mxu0 0.0
        %3630 = vmatprep.subr.mxu0 0.0
        %3631 = vmatpush1.msra.mxu0 0.0
        %3632 = vmatprep.subr.mxu0 0.0
        %3633 = vmatpush1.msra.mxu0 0.0
        %3634 = vmatprep.subr.mxu0 0.0
        %3635 = vmatpush1.msra.mxu0 0.0
        %3636 = vmatprep.subr.mxu0 0.0
        %3637 = vmatpush1.msra.mxu0 0.0
        %3638 = vmatprep.subr.mxu0 0.0
        %3639 = vmatpush1.msra.mxu0 0.0
        %3640 = vmatprep.subr.mxu0 0.0
        %3641 = vmatpush1.msra.mxu0 0.0
        %3642 = vmatprep.subr.mxu0 0.0
        %3643 = vmatpush1.msra.mxu0 0.0
        %3644 = vmatprep.mubr.f32.mxu0 0.0
        %v3645 = vand.u32 %v3305, 4294901760
        %v3646 = vsub.f32 %v3305, %v3645
        %3647 = vmatmul.mubr.f32.gmra.mrb[0].mxu0 %v3646
        %v3648 = vpop.f32.mrb[0].mxu0
        %v3649 = vadd.f32 %v3545, %v3648
        %v3650 = vpop.f32.mrb[0].mxu0
        %3651 = vdwg.mxu0
        %3652 = vmatprep.subr.mxu0 0.0
        %v3653 = vand.u32 %v356, 4294901760
        %3654 = vmatpush1.msra.mxu0 %v3653
        %3655 = vmatprep.subr.mxu0 0.0
        %v3656 = vand.u32 %v357, 4294901760
        %3657 = vmatpush1.msra.mxu0 %v3656
        %3658 = vmatprep.subr.mxu0 0.0
        %v3659 = vand.u32 %v358, 4294901760
        %3660 = vmatpush1.msra.mxu0 %v3659
        %3661 = vmatprep.subr.mxu0 0.0
        %v3662 = vand.u32 %v359, 4294901760
        %3663 = vmatpush1.msra.mxu0 %v3662
        %3664 = vmatprep.subr.mxu0 0.0
        %v3665 = vand.u32 %v360, 4294901760
        %3666 = vmatpush1.msra.mxu0 %v3665
        %3667 = vmatprep.subr.mxu0 0.0
        %v3668 = vand.u32 %v361, 4294901760
        %3669 = vmatpush1.msra.mxu0 %v3668
        %3670 = vmatprep.subr.mxu0 0.0
        %v3671 = vand.u32 %v362, 4294901760
        %3672 = vmatpush1.msra.mxu0 %v3671
        %3673 = vmatprep.subr.mxu0 0.0
        %v3674 = vand.u32 %v363, 4294901760
        %3675 = vmatpush1.msra.mxu0 %v3674
        %3676 = vmatprep.subr.mxu0 0.0
        %v3677 = vand.u32 %v364, 4294901760
        %3678 = vmatpush1.msra.mxu0 %v3677
        %3679 = vmatprep.subr.mxu0 0.0
        %v3680 = vand.u32 %v365, 4294901760
        %3681 = vmatpush1.msra.mxu0 %v3680
        %3682 = vmatprep.subr.mxu0 0.0
        %v3683 = vand.u32 %v366, 4294901760
        %3684 = vmatpush1.msra.mxu0 %v3683
        %3685 = vmatprep.subr.mxu0 0.0
        %v3686 = vand.u32 %v367, 4294901760
        %3687 = vmatpush1.msra.mxu0 %v3686
        %3688 = vmatprep.subr.mxu0 0.0
        %v3689 = vand.u32 %v368, 4294901760
        %3690 = vmatpush1.msra.mxu0 %v3689
        %3691 = vmatprep.subr.mxu0 0.0
        %v3692 = vand.u32 %v369, 4294901760
        %3693 = vmatpush1.msra.mxu0 %v3692
        %3694 = vmatprep.subr.mxu0 0.0
        %v3695 = vand.u32 %v370, 4294901760
        %3696 = vmatpush1.msra.mxu0 %v3695
        %3697 = vmatprep.subr.mxu0 0.0
        %v3698 = vand.u32 %v371, 4294901760
        %3699 = vmatpush1.msra.mxu0 %v3698
        %3700 = vmatprep.subr.mxu0 0.0
        %3701 = vmatpush1.msra.mxu0 0.0
        %3702 = vmatprep.subr.mxu0 0.0
        %3703 = vmatpush1.msra.mxu0 0.0
        %3704 = vmatprep.subr.mxu0 0.0
        %3705 = vmatpush1.msra.mxu0 0.0
        %3706 = vmatprep.subr.mxu0 0.0
        %3707 = vmatpush1.msra.mxu0 0.0
        %3708 = vmatprep.subr.mxu0 0.0
        %3709 = vmatpush1.msra.mxu0 0.0
        %3710 = vmatprep.subr.mxu0 0.0
        %3711 = vmatpush1.msra.mxu0 0.0
        %3712 = vmatprep.subr.mxu0 0.0
        %3713 = vmatpush1.msra.mxu0 0.0
        %3714 = vmatprep.subr.mxu0 0.0
        %3715 = vmatpush1.msra.mxu0 0.0
        %3716 = vmatprep.subr.mxu0 0.0
        %3717 = vmatpush1.msra.mxu0 0.0
        %3718 = vmatprep.subr.mxu0 0.0
        %3719 = vmatpush1.msra.mxu0 0.0
        %3720 = vmatprep.subr.mxu0 0.0
        %3721 = vmatpush1.msra.mxu0 0.0
        %3722 = vmatprep.subr.mxu0 0.0
        %3723 = vmatpush1.msra.mxu0 0.0
        %3724 = vmatprep.subr.mxu0 0.0
        %3725 = vmatpush1.msra.mxu0 0.0
        %3726 = vmatprep.subr.mxu0 0.0
        %3727 = vmatpush1.msra.mxu0 0.0
        %3728 = vmatprep.subr.mxu0 0.0
        %3729 = vmatpush1.msra.mxu0 0.0
        %3730 = vmatprep.subr.mxu0 0.0
        %3731 = vmatpush1.msra.mxu0 0.0
        %3732 = vmatprep.mubr.f32.mxu0 0.0
        %v3733 = vand.u32 %v3305, 4294901760
        %v3734 = vsub.f32 %v3305, %v3733
        %v3735 = vand.u32 %v3734, 4294901760
        %3736 = vmatmul.mubr.f32.gmra.mrb[0].mxu0 %v3735
        %v3737 = vpop.f32.mrb[0].mxu0
        %v3738 = vadd.f32 %v3649, %v3737
        %v3739 = vpop.f32.mrb[0].mxu0
        %3740 = vdwg.mxu0
        %3741 = vmatprep.subr.mxu0 0.0
        %v3742 = vand.u32 %v356, 4294901760
        %v3743 = vsub.f32 %v356, %v3742
        %v3744 = vand.u32 %v3743, 4294901760
        %3745 = vmatpush1.msra.mxu0 %v3744
        %3746 = vmatprep.subr.mxu0 0.0
        %v3747 = vand.u32 %v357, 4294901760
        %v3748 = vsub.f32 %v357, %v3747
        %v3749 = vand.u32 %v3748, 4294901760
        %3750 = vmatpush1.msra.mxu0 %v3749
        %3751 = vmatprep.subr.mxu0 0.0
        %v3752 = vand.u32 %v358, 4294901760
        %v3753 = vsub.f32 %v358, %v3752
        %v3754 = vand.u32 %v3753, 4294901760
        %3755 = vmatpush1.msra.mxu0 %v3754
        %3756 = vmatprep.subr.mxu0 0.0
        %v3757 = vand.u32 %v359, 4294901760
        %v3758 = vsub.f32 %v359, %v3757
        %v3759 = vand.u32 %v3758, 4294901760
        %3760 = vmatpush1.msra.mxu0 %v3759
        %3761 = vmatprep.subr.mxu0 0.0
        %v3762 = vand.u32 %v360, 4294901760
        %v3763 = vsub.f32 %v360, %v3762
        %v3764 = vand.u32 %v3763, 4294901760
        %3765 = vmatpush1.msra.mxu0 %v3764
        %3766 = vmatprep.subr.mxu0 0.0
        %v3767 = vand.u32 %v361, 4294901760
        %v3768 = vsub.f32 %v361, %v3767
        %v3769 = vand.u32 %v3768, 4294901760
        %3770 = vmatpush1.msra.mxu0 %v3769
        %3771 = vmatprep.subr.mxu0 0.0
        %v3772 = vand.u32 %v362, 4294901760
        %v3773 = vsub.f32 %v362, %v3772
        %v3774 = vand.u32 %v3773, 4294901760
        %3775 = vmatpush1.msra.mxu0 %v3774
        %3776 = vmatprep.subr.mxu0 0.0
        %v3777 = vand.u32 %v363, 4294901760
        %v3778 = vsub.f32 %v363, %v3777
        %v3779 = vand.u32 %v3778, 4294901760
        %3780 = vmatpush1.msra.mxu0 %v3779
        %3781 = vmatprep.subr.mxu0 0.0
        %v3782 = vand.u32 %v364, 4294901760
        %v3783 = vsub.f32 %v364, %v3782
        %v3784 = vand.u32 %v3783, 4294901760
        %3785 = vmatpush1.msra.mxu0 %v3784
        %3786 = vmatprep.subr.mxu0 0.0
        %v3787 = vand.u32 %v365, 4294901760
        %v3788 = vsub.f32 %v365, %v3787
        %v3789 = vand.u32 %v3788, 4294901760
        %3790 = vmatpush1.msra.mxu0 %v3789
        %3791 = vmatprep.subr.mxu0 0.0
        %v3792 = vand.u32 %v366, 4294901760
        %v3793 = vsub.f32 %v366, %v3792
        %v3794 = vand.u32 %v3793, 4294901760
        %3795 = vmatpush1.msra.mxu0 %v3794
        %3796 = vmatprep.subr.mxu0 0.0
        %v3797 = vand.u32 %v367, 4294901760
        %v3798 = vsub.f32 %v367, %v3797
        %v3799 = vand.u32 %v3798, 4294901760
        %3800 = vmatpush1.msra.mxu0 %v3799
        %3801 = vmatprep.subr.mxu0 0.0
        %v3802 = vand.u32 %v368, 4294901760
        %v3803 = vsub.f32 %v368, %v3802
        %v3804 = vand.u32 %v3803, 4294901760
        %3805 = vmatpush1.msra.mxu0 %v3804
        %3806 = vmatprep.subr.mxu0 0.0
        %v3807 = vand.u32 %v369, 4294901760
        %v3808 = vsub.f32 %v369, %v3807
        %v3809 = vand.u32 %v3808, 4294901760
        %3810 = vmatpush1.msra.mxu0 %v3809
        %3811 = vmatprep.subr.mxu0 0.0
        %v3812 = vand.u32 %v370, 4294901760
        %v3813 = vsub.f32 %v370, %v3812
        %v3814 = vand.u32 %v3813, 4294901760
        %3815 = vmatpush1.msra.mxu0 %v3814
        %3816 = vmatprep.subr.mxu0 0.0
        %v3817 = vand.u32 %v371, 4294901760
        %v3818 = vsub.f32 %v371, %v3817
        %v3819 = vand.u32 %v3818, 4294901760
        %3820 = vmatpush1.msra.mxu0 %v3819
        %3821 = vmatprep.subr.mxu0 0.0
        %3822 = vmatpush1.msra.mxu0 0.0
        %3823 = vmatprep.subr.mxu0 0.0
        %3824 = vmatpush1.msra.mxu0 0.0
        %3825 = vmatprep.subr.mxu0 0.0
        %3826 = vmatpush1.msra.mxu0 0.0
        %3827 = vmatprep.subr.mxu0 0.0
        %3828 = vmatpush1.msra.mxu0 0.0
        %3829 = vmatprep.subr.mxu0 0.0
        %3830 = vmatpush1.msra.mxu0 0.0
        %3831 = vmatprep.subr.mxu0 0.0
        %3832 = vmatpush1.msra.mxu0 0.0
        %3833 = vmatprep.subr.mxu0 0.0
        %3834 = vmatpush1.msra.mxu0 0.0
        %3835 = vmatprep.subr.mxu0 0.0
        %3836 = vmatpush1.msra.mxu0 0.0
        %3837 = vmatprep.subr.mxu0 0.0
        %3838 = vmatpush1.msra.mxu0 0.0
        %3839 = vmatprep.subr.mxu0 0.0
        %3840 = vmatpush1.msra.mxu0 0.0
        %3841 = vmatprep.subr.mxu0 0.0
        %3842 = vmatpush1.msra.mxu0 0.0
        %3843 = vmatprep.subr.mxu0 0.0
        %3844 = vmatpush1.msra.mxu0 0.0
        %3845 = vmatprep.subr.mxu0 0.0
        %3846 = vmatpush1.msra.mxu0 0.0
        %3847 = vmatprep.subr.mxu0 0.0
        %3848 = vmatpush1.msra.mxu0 0.0
        %3849 = vmatprep.subr.mxu0 0.0
        %3850 = vmatpush1.msra.mxu0 0.0
        %3851 = vmatprep.subr.mxu0 0.0
        %3852 = vmatpush1.msra.mxu0 0.0
        %3853 = vmatprep.mubr.f32.mxu0 0.0
        %v3854 = vand.u32 %v3305, 4294901760
        %3855 = vmatmul.mubr.f32.gmra.mrb[0].mxu0 %v3854
        %v3856 = vpop.f32.mrb[0].mxu0
        %v3857 = vadd.f32 %v3738, %v3856
        %v3858 = vpop.f32.mrb[0].mxu0
        %3859 = vdwg.mxu0
        %3860 = vmatprep.subr.mxu0 0.0
        %v3861 = vand.u32 %v356, 4294901760
        %3862 = vmatpush1.msra.mxu0 %v3861
        %3863 = vmatprep.subr.mxu0 0.0
        %v3864 = vand.u32 %v357, 4294901760
        %3865 = vmatpush1.msra.mxu0 %v3864
        %3866 = vmatprep.subr.mxu0 0.0
        %v3867 = vand.u32 %v358, 4294901760
        %3868 = vmatpush1.msra.mxu0 %v3867
        %3869 = vmatprep.subr.mxu0 0.0
        %v3870 = vand.u32 %v359, 4294901760
        %3871 = vmatpush1.msra.mxu0 %v3870
        %3872 = vmatprep.subr.mxu0 0.0
        %v3873 = vand.u32 %v360, 4294901760
        %3874 = vmatpush1.msra.mxu0 %v3873
        %3875 = vmatprep.subr.mxu0 0.0
        %v3876 = vand.u32 %v361, 4294901760
        %3877 = vmatpush1.msra.mxu0 %v3876
        %3878 = vmatprep.subr.mxu0 0.0
        %v3879 = vand.u32 %v362, 4294901760
        %3880 = vmatpush1.msra.mxu0 %v3879
        %3881 = vmatprep.subr.mxu0 0.0
        %v3882 = vand.u32 %v363, 4294901760
        %3883 = vmatpush1.msra.mxu0 %v3882
        %3884 = vmatprep.subr.mxu0 0.0
        %v3885 = vand.u32 %v364, 4294901760
        %3886 = vmatpush1.msra.mxu0 %v3885
        %3887 = vmatprep.subr.mxu0 0.0
        %v3888 = vand.u32 %v365, 4294901760
        %3889 = vmatpush1.msra.mxu0 %v3888
        %3890 = vmatprep.subr.mxu0 0.0
        %v3891 = vand.u32 %v366, 4294901760
        %3892 = vmatpush1.msra.mxu0 %v3891
        %3893 = vmatprep.subr.mxu0 0.0
        %v3894 = vand.u32 %v367, 4294901760
        %3895 = vmatpush1.msra.mxu0 %v3894
        %3896 = vmatprep.subr.mxu0 0.0
        %v3897 = vand.u32 %v368, 4294901760
        %3898 = vmatpush1.msra.mxu0 %v3897
        %3899 = vmatprep.subr.mxu0 0.0
        %v3900 = vand.u32 %v369, 4294901760
        %3901 = vmatpush1.msra.mxu0 %v3900
        %3902 = vmatprep.subr.mxu0 0.0
        %v3903 = vand.u32 %v370, 4294901760
        %3904 = vmatpush1.msra.mxu0 %v3903
        %3905 = vmatprep.subr.mxu0 0.0
        %v3906 = vand.u32 %v371, 4294901760
        %3907 = vmatpush1.msra.mxu0 %v3906
        %3908 = vmatprep.subr.mxu0 0.0
        %3909 = vmatpush1.msra.mxu0 0.0
        %3910 = vmatprep.subr.mxu0 0.0
        %3911 = vmatpush1.msra.mxu0 0.0
        %3912 = vmatprep.subr.mxu0 0.0
        %3913 = vmatpush1.msra.mxu0 0.0
        %3914 = vmatprep.subr.mxu0 0.0
        %3915 = vmatpush1.msra.mxu0 0.0
        %3916 = vmatprep.subr.mxu0 0.0
        %3917 = vmatpush1.msra.mxu0 0.0
        %3918 = vmatprep.subr.mxu0 0.0
        %3919 = vmatpush1.msra.mxu0 0.0
        %3920 = vmatprep.subr.mxu0 0.0
        %3921 = vmatpush1.msra.mxu0 0.0
        %3922 = vmatprep.subr.mxu0 0.0
        %3923 = vmatpush1.msra.mxu0 0.0
        %3924 = vmatprep.subr.mxu0 0.0
        %3925 = vmatpush1.msra.mxu0 0.0
        %3926 = vmatprep.subr.mxu0 0.0
        %3927 = vmatpush1.msra.mxu0 0.0
        %3928 = vmatprep.subr.mxu0 0.0
        %3929 = vmatpush1.msra.mxu0 0.0
        %3930 = vmatprep.subr.mxu0 0.0
        %3931 = vmatpush1.msra.mxu0 0.0
        %3932 = vmatprep.subr.mxu0 0.0
        %3933 = vmatpush1.msra.mxu0 0.0
        %3934 = vmatprep.subr.mxu0 0.0
        %3935 = vmatpush1.msra.mxu0 0.0
        %3936 = vmatprep.subr.mxu0 0.0
        %3937 = vmatpush1.msra.mxu0 0.0
        %3938 = vmatprep.subr.mxu0 0.0
        %3939 = vmatpush1.msra.mxu0 0.0
        %3940 = vmatprep.mubr.f32.mxu0 0.0
        %v3941 = vand.u32 %v3305, 4294901760
        %3942 = vmatmul.mubr.f32.gmra.mrb[0].mxu0 %v3941
        %v3943 = vpop.f32.mrb[0].mxu0
        %v3944 = vadd.f32 %v3857, %v3943
        %v3945 = vpop.f32.mrb[0].mxu0
        %3946 = vdwg.mxu0
        %v3948 = vsel %vm1310, %v3944, 0
        %3950 = vmatprep.subr.mxu0 0.0
        %v3951 = vand.u32 %v1316, 4294901760
        %3952 = vmatpush1.msra.mxu0 %v3951
        %3953 = vmatprep.subr.mxu0 0.0
        %3954 = vmatpush1.msra.mxu0 0.0
        %3955 = vmatprep.subr.mxu0 0.0
        %3956 = vmatpush1.msra.mxu0 0.0
        %3957 = vmatprep.subr.mxu0 0.0
        %3958 = vmatpush1.msra.mxu0 0.0
        %3959 = vmatprep.subr.mxu0 0.0
        %3960 = vmatpush1.msra.mxu0 0.0
        %3961 = vmatprep.subr.mxu0 0.0
        %3962 = vmatpush1.msra.mxu0 0.0
        %3963 = vmatprep.subr.mxu0 0.0
        %3964 = vmatpush1.msra.mxu0 0.0
        %3965 = vmatprep.subr.mxu0 0.0
        %3966 = vmatpush1.msra.mxu0 0.0
        %3967 = vmatprep.subr.mxu0 0.0
        %3968 = vmatpush1.msra.mxu0 0.0
        %3969 = vmatprep.subr.mxu0 0.0
        %3970 = vmatpush1.msra.mxu0 0.0
        %3971 = vmatprep.subr.mxu0 0.0
        %3972 = vmatpush1.msra.mxu0 0.0
        %3973 = vmatprep.subr.mxu0 0.0
        %3974 = vmatpush1.msra.mxu0 0.0
        %3975 = vmatprep.subr.mxu0 0.0
        %3976 = vmatpush1.msra.mxu0 0.0
        %3977 = vmatprep.subr.mxu0 0.0
        %3978 = vmatpush1.msra.mxu0 0.0
        %3979 = vmatprep.subr.mxu0 0.0
        %3980 = vmatpush1.msra.mxu0 0.0
        %3981 = vmatprep.subr.mxu0 0.0
        %3982 = vmatpush1.msra.mxu0 0.0
        %3983 = vmatprep.subr.mxu0 0.0
        %3984 = vmatpush1.msra.mxu0 0.0
        %3985 = vmatprep.subr.mxu0 0.0
        %3986 = vmatpush1.msra.mxu0 0.0
        %3987 = vmatprep.subr.mxu0 0.0
        %3988 = vmatpush1.msra.mxu0 0.0
        %3989 = vmatprep.subr.mxu0 0.0
        %3990 = vmatpush1.msra.mxu0 0.0
        %3991 = vmatprep.subr.mxu0 0.0
        %3992 = vmatpush1.msra.mxu0 0.0
        %3993 = vmatprep.subr.mxu0 0.0
        %3994 = vmatpush1.msra.mxu0 0.0
        %3995 = vmatprep.subr.mxu0 0.0
        %3996 = vmatpush1.msra.mxu0 0.0
        %3997 = vmatprep.subr.mxu0 0.0
        %3998 = vmatpush1.msra.mxu0 0.0
        %3999 = vmatprep.subr.mxu0 0.0
        %4000 = vmatpush1.msra.mxu0 0.0
        %4001 = vmatprep.subr.mxu0 0.0
        %4002 = vmatpush1.msra.mxu0 0.0
        %4003 = vmatprep.subr.mxu0 0.0
        %4004 = vmatpush1.msra.mxu0 0.0
        %4005 = vmatprep.subr.mxu0 0.0
        %4006 = vmatpush1.msra.mxu0 0.0
        %4007 = vmatprep.subr.mxu0 0.0
        %4008 = vmatpush1.msra.mxu0 0.0
        %4009 = vmatprep.subr.mxu0 0.0
        %4010 = vmatpush1.msra.mxu0 0.0
        %4011 = vmatprep.subr.mxu0 0.0
        %4012 = vmatpush1.msra.mxu0 0.0
        %4013 = vmatprep.subr.mxu0 0.0
        %4014 = vmatpush1.msra.mxu0 0.0
        %4015 = vmatprep.mubr.f32.mxu0 0.0
        %v4016 = vand.u32 %v3948, 4294901760
        %v4017 = vsub.f32 %v3948, %v4016
        %v4018 = vand.u32 %v4017, 4294901760
        %v4019 = vsub.f32 %v4017, %v4018
        %v4020 = vand.u32 %v4019, 4294901760
        %4021 = vmatmul.mubr.f32.gmra.mrb[0].mxu0 %v4020
        %v4022 = vpop.f32.mrb[0].mxu0
        %v4023 = vadd.f32 0.0, %v4022
        %v4024 = vpop.f32.mrb[0].mxu0
        %4025 = vdwg.mxu0
        %4026 = vmatprep.subr.mxu0 0.0
        %v4027 = vand.u32 %v1316, 4294901760
        %v4028 = vsub.f32 %v1316, %v4027
        %v4029 = vand.u32 %v4028, 4294901760
        %v4030 = vsub.f32 %v4028, %v4029
        %v4031 = vand.u32 %v4030, 4294901760
        %4032 = vmatpush1.msra.mxu0 %v4031
        %4033 = vmatprep.subr.mxu0 0.0
        %4034 = vmatpush1.msra.mxu0 0.0
        %4035 = vmatprep.subr.mxu0 0.0
        %4036 = vmatpush1.msra.mxu0 0.0
        %4037 = vmatprep.subr.mxu0 0.0
        %4038 = vmatpush1.msra.mxu0 0.0
        %4039 = vmatprep.subr.mxu0 0.0
        %4040 = vmatpush1.msra.mxu0 0.0
        %4041 = vmatprep.subr.mxu0 0.0
        %4042 = vmatpush1.msra.mxu0 0.0
        %4043 = vmatprep.subr.mxu0 0.0
        %4044 = vmatpush1.msra.mxu0 0.0
        %4045 = vmatprep.subr.mxu0 0.0
        %4046 = vmatpush1.msra.mxu0 0.0
        %4047 = vmatprep.subr.mxu0 0.0
        %4048 = vmatpush1.msra.mxu0 0.0
        %4049 = vmatprep.subr.mxu0 0.0
        %4050 = vmatpush1.msra.mxu0 0.0
        %4051 = vmatprep.subr.mxu0 0.0
        %4052 = vmatpush1.msra.mxu0 0.0
        %4053 = vmatprep.subr.mxu0 0.0
        %4054 = vmatpush1.msra.mxu0 0.0
        %4055 = vmatprep.subr.mxu0 0.0
        %4056 = vmatpush1.msra.mxu0 0.0
        %4057 = vmatprep.subr.mxu0 0.0
        %4058 = vmatpush1.msra.mxu0 0.0
        %4059 = vmatprep.subr.mxu0 0.0
        %4060 = vmatpush1.msra.mxu0 0.0
        %4061 = vmatprep.subr.mxu0 0.0
        %4062 = vmatpush1.msra.mxu0 0.0
        %4063 = vmatprep.subr.mxu0 0.0
        %4064 = vmatpush1.msra.mxu0 0.0
        %4065 = vmatprep.subr.mxu0 0.0
        %4066 = vmatpush1.msra.mxu0 0.0
        %4067 = vmatprep.subr.mxu0 0.0
        %4068 = vmatpush1.msra.mxu0 0.0
        %4069 = vmatprep.subr.mxu0 0.0
        %4070 = vmatpush1.msra.mxu0 0.0
        %4071 = vmatprep.subr.mxu0 0.0
        %4072 = vmatpush1.msra.mxu0 0.0
        %4073 = vmatprep.subr.mxu0 0.0
        %4074 = vmatpush1.msra.mxu0 0.0
        %4075 = vmatprep.subr.mxu0 0.0
        %4076 = vmatpush1.msra.mxu0 0.0
        %4077 = vmatprep.subr.mxu0 0.0
        %4078 = vmatpush1.msra.mxu0 0.0
        %4079 = vmatprep.subr.mxu0 0.0
        %4080 = vmatpush1.msra.mxu0 0.0
        %4081 = vmatprep.subr.mxu0 0.0
        %4082 = vmatpush1.msra.mxu0 0.0
        %4083 = vmatprep.subr.mxu0 0.0
        %4084 = vmatpush1.msra.mxu0 0.0
        %4085 = vmatprep.subr.mxu0 0.0
        %4086 = vmatpush1.msra.mxu0 0.0
        %4087 = vmatprep.subr.mxu0 0.0
        %4088 = vmatpush1.msra.mxu0 0.0
        %4089 = vmatprep.subr.mxu0 0.0
        %4090 = vmatpush1.msra.mxu0 0.0
        %4091 = vmatprep.subr.mxu0 0.0
        %4092 = vmatpush1.msra.mxu0 0.0
        %4093 = vmatprep.subr.mxu0 0.0
        %4094 = vmatpush1.msra.mxu0 0.0
        %4095 = vmatprep.mubr.f32.mxu0 0.0
        %v4096 = vand.u32 %v3948, 4294901760
        %4097 = vmatmul.mubr.f32.gmra.mrb[0].mxu0 %v4096
        %v4098 = vpop.f32.mrb[0].mxu0
        %v4099 = vadd.f32 %v4023, %v4098
        %v4100 = vpop.f32.mrb[0].mxu0
        %4101 = vdwg.mxu0
        %4102 = vmatprep.subr.mxu0 0.0
        %v4103 = vand.u32 %v1316, 4294901760
        %v4104 = vsub.f32 %v1316, %v4103
        %4105 = vmatpush1.msra.mxu0 %v4104
        %4106 = vmatprep.subr.mxu0 0.0
        %4107 = vmatpush1.msra.mxu0 0.0
        %4108 = vmatprep.subr.mxu0 0.0
        %4109 = vmatpush1.msra.mxu0 0.0
        %4110 = vmatprep.subr.mxu0 0.0
        %4111 = vmatpush1.msra.mxu0 0.0
        %4112 = vmatprep.subr.mxu0 0.0
        %4113 = vmatpush1.msra.mxu0 0.0
        %4114 = vmatprep.subr.mxu0 0.0
        %4115 = vmatpush1.msra.mxu0 0.0
        %4116 = vmatprep.subr.mxu0 0.0
        %4117 = vmatpush1.msra.mxu0 0.0
        %4118 = vmatprep.subr.mxu0 0.0
        %4119 = vmatpush1.msra.mxu0 0.0
        %4120 = vmatprep.subr.mxu0 0.0
        %4121 = vmatpush1.msra.mxu0 0.0
        %4122 = vmatprep.subr.mxu0 0.0
        %4123 = vmatpush1.msra.mxu0 0.0
        %4124 = vmatprep.subr.mxu0 0.0
        %4125 = vmatpush1.msra.mxu0 0.0
        %4126 = vmatprep.subr.mxu0 0.0
        %4127 = vmatpush1.msra.mxu0 0.0
        %4128 = vmatprep.subr.mxu0 0.0
        %4129 = vmatpush1.msra.mxu0 0.0
        %4130 = vmatprep.subr.mxu0 0.0
        %4131 = vmatpush1.msra.mxu0 0.0
        %4132 = vmatprep.subr.mxu0 0.0
        %4133 = vmatpush1.msra.mxu0 0.0
        %4134 = vmatprep.subr.mxu0 0.0
        %4135 = vmatpush1.msra.mxu0 0.0
        %4136 = vmatprep.subr.mxu0 0.0
        %4137 = vmatpush1.msra.mxu0 0.0
        %4138 = vmatprep.subr.mxu0 0.0
        %4139 = vmatpush1.msra.mxu0 0.0
        %4140 = vmatprep.subr.mxu0 0.0
        %4141 = vmatpush1.msra.mxu0 0.0
        %4142 = vmatprep.subr.mxu0 0.0
        %4143 = vmatpush1.msra.mxu0 0.0
        %4144 = vmatprep.subr.mxu0 0.0
        %4145 = vmatpush1.msra.mxu0 0.0
        %4146 = vmatprep.subr.mxu0 0.0
        %4147 = vmatpush1.msra.mxu0 0.0
        %4148 = vmatprep.subr.mxu0 0.0
        %4149 = vmatpush1.msra.mxu0 0.0
        %4150 = vmatprep.subr.mxu0 0.0
        %4151 = vmatpush1.msra.mxu0 0.0
        %4152 = vmatprep.subr.mxu0 0.0
        %4153 = vmatpush1.msra.mxu0 0.0
        %4154 = vmatprep.subr.mxu0 0.0
        %4155 = vmatpush1.msra.mxu0 0.0
        %4156 = vmatprep.subr.mxu0 0.0
        %4157 = vmatpush1.msra.mxu0 0.0
        %4158 = vmatprep.subr.mxu0 0.0
        %4159 = vmatpush1.msra.mxu0 0.0
        %4160 = vmatprep.subr.mxu0 0.0
        %4161 = vmatpush1.msra.mxu0 0.0
        %4162 = vmatprep.subr.mxu0 0.0
        %4163 = vmatpush1.msra.mxu0 0.0
        %4164 = vmatprep.subr.mxu0 0.0
        %4165 = vmatpush1.msra.mxu0 0.0
        %4166 = vmatprep.subr.mxu0 0.0
        %4167 = vmatpush1.msra.mxu0 0.0
        %4168 = vmatprep.mubr.f32.mxu0 0.0
        %v4169 = vand.u32 %v3948, 4294901760
        %v4170 = vsub.f32 %v3948, %v4169
        %4171 = vmatmul.mubr.f32.gmra.mrb[0].mxu0 %v4170
        %v4172 = vpop.f32.mrb[0].mxu0
        %v4173 = vadd.f32 %v4099, %v4172
        %v4174 = vpop.f32.mrb[0].mxu0
        %4175 = vdwg.mxu0
        %4176 = vmatprep.subr.mxu0 0.0
        %v4177 = vand.u32 %v1316, 4294901760
        %4178 = vmatpush1.msra.mxu0 %v4177
        %4179 = vmatprep.subr.mxu0 0.0
        %4180 = vmatpush1.msra.mxu0 0.0
        %4181 = vmatprep.subr.mxu0 0.0
        %4182 = vmatpush1.msra.mxu0 0.0
        %4183 = vmatprep.subr.mxu0 0.0
        %4184 = vmatpush1.msra.mxu0 0.0
        %4185 = vmatprep.subr.mxu0 0.0
        %4186 = vmatpush1.msra.mxu0 0.0
        %4187 = vmatprep.subr.mxu0 0.0
        %4188 = vmatpush1.msra.mxu0 0.0
        %4189 = vmatprep.subr.mxu0 0.0
        %4190 = vmatpush1.msra.mxu0 0.0
        %4191 = vmatprep.subr.mxu0 0.0
        %4192 = vmatpush1.msra.mxu0 0.0
        %4193 = vmatprep.subr.mxu0 0.0
        %4194 = vmatpush1.msra.mxu0 0.0
        %4195 = vmatprep.subr.mxu0 0.0
        %4196 = vmatpush1.msra.mxu0 0.0
        %4197 = vmatprep.subr.mxu0 0.0
        %4198 = vmatpush1.msra.mxu0 0.0
        %4199 = vmatprep.subr.mxu0 0.0
        %4200 = vmatpush1.msra.mxu0 0.0
        %4201 = vmatprep.subr.mxu0 0.0
        %4202 = vmatpush1.msra.mxu0 0.0
        %4203 = vmatprep.subr.mxu0 0.0
        %4204 = vmatpush1.msra.mxu0 0.0
        %4205 = vmatprep.subr.mxu0 0.0
        %4206 = vmatpush1.msra.mxu0 0.0
        %4207 = vmatprep.subr.mxu0 0.0
        %4208 = vmatpush1.msra.mxu0 0.0
        %4209 = vmatprep.subr.mxu0 0.0
        %4210 = vmatpush1.msra.mxu0 0.0
        %4211 = vmatprep.subr.mxu0 0.0
        %4212 = vmatpush1.msra.mxu0 0.0
        %4213 = vmatprep.subr.mxu0 0.0
        %4214 = vmatpush1.msra.mxu0 0.0
        %4215 = vmatprep.subr.mxu0 0.0
        %4216 = vmatpush1.msra.mxu0 0.0
        %4217 = vmatprep.subr.mxu0 0.0
        %4218 = vmatpush1.msra.mxu0 0.0
        %4219 = vmatprep.subr.mxu0 0.0
        %4220 = vmatpush1.msra.mxu0 0.0
        %4221 = vmatprep.subr.mxu0 0.0
        %4222 = vmatpush1.msra.mxu0 0.0
        %4223 = vmatprep.subr.mxu0 0.0
        %4224 = vmatpush1.msra.mxu0 0.0
        %4225 = vmatprep.subr.mxu0 0.0
        %4226 = vmatpush1.msra.mxu0 0.0
        %4227 = vmatprep.subr.mxu0 0.0
        %4228 = vmatpush1.msra.mxu0 0.0
        %4229 = vmatprep.subr.mxu0 0.0
        %4230 = vmatpush1.msra.mxu0 0.0
        %4231 = vmatprep.subr.mxu0 0.0
        %4232 = vmatpush1.msra.mxu0 0.0
        %4233 = vmatprep.subr.mxu0 0.0
        %4234 = vmatpush1.msra.mxu0 0.0
        %4235 = vmatprep.subr.mxu0 0.0
        %4236 = vmatpush1.msra.mxu0 0.0
        %4237 = vmatprep.subr.mxu0 0.0
        %4238 = vmatpush1.msra.mxu0 0.0
        %4239 = vmatprep.subr.mxu0 0.0
        %4240 = vmatpush1.msra.mxu0 0.0
        %4241 = vmatprep.mubr.f32.mxu0 0.0
        %v4242 = vand.u32 %v3948, 4294901760
        %v4243 = vsub.f32 %v3948, %v4242
        %v4244 = vand.u32 %v4243, 4294901760
        %4245 = vmatmul.mubr.f32.gmra.mrb[0].mxu0 %v4244
        %v4246 = vpop.f32.mrb[0].mxu0
        %v4247 = vadd.f32 %v4173, %v4246
        %v4248 = vpop.f32.mrb[0].mxu0
        %4249 = vdwg.mxu0
        %4250 = vmatprep.subr.mxu0 0.0
        %v4251 = vand.u32 %v1316, 4294901760
        %v4252 = vsub.f32 %v1316, %v4251
        %v4253 = vand.u32 %v4252, 4294901760
        %4254 = vmatpush1.msra.mxu0 %v4253
        %4255 = vmatprep.subr.mxu0 0.0
        %4256 = vmatpush1.msra.mxu0 0.0
        %4257 = vmatprep.subr.mxu0 0.0
        %4258 = vmatpush1.msra.mxu0 0.0
        %4259 = vmatprep.subr.mxu0 0.0
        %4260 = vmatpush1.msra.mxu0 0.0
        %4261 = vmatprep.subr.mxu0 0.0
        %4262 = vmatpush1.msra.mxu0 0.0
        %4263 = vmatprep.subr.mxu0 0.0
        %4264 = vmatpush1.msra.mxu0 0.0
        %4265 = vmatprep.subr.mxu0 0.0
        %4266 = vmatpush1.msra.mxu0 0.0
        %4267 = vmatprep.subr.mxu0 0.0
        %4268 = vmatpush1.msra.mxu0 0.0
        %4269 = vmatprep.subr.mxu0 0.0
        %4270 = vmatpush1.msra.mxu0 0.0
        %4271 = vmatprep.subr.mxu0 0.0
        %4272 = vmatpush1.msra.mxu0 0.0
        %4273 = vmatprep.subr.mxu0 0.0
        %4274 = vmatpush1.msra.mxu0 0.0
        %4275 = vmatprep.subr.mxu0 0.0
        %4276 = vmatpush1.msra.mxu0 0.0
        %4277 = vmatprep.subr.mxu0 0.0
        %4278 = vmatpush1.msra.mxu0 0.0
        %4279 = vmatprep.subr.mxu0 0.0
        %4280 = vmatpush1.msra.mxu0 0.0
        %4281 = vmatprep.subr.mxu0 0.0
        %4282 = vmatpush1.msra.mxu0 0.0
        %4283 = vmatprep.subr.mxu0 0.0
        %4284 = vmatpush1.msra.mxu0 0.0
        %4285 = vmatprep.subr.mxu0 0.0
        %4286 = vmatpush1.msra.mxu0 0.0
        %4287 = vmatprep.subr.mxu0 0.0
        %4288 = vmatpush1.msra.mxu0 0.0
        %4289 = vmatprep.subr.mxu0 0.0
        %4290 = vmatpush1.msra.mxu0 0.0
        %4291 = vmatprep.subr.mxu0 0.0
        %4292 = vmatpush1.msra.mxu0 0.0
        %4293 = vmatprep.subr.mxu0 0.0
        %4294 = vmatpush1.msra.mxu0 0.0
        %4295 = vmatprep.subr.mxu0 0.0
        %4296 = vmatpush1.msra.mxu0 0.0
        %4297 = vmatprep.subr.mxu0 0.0
        %4298 = vmatpush1.msra.mxu0 0.0
        %4299 = vmatprep.subr.mxu0 0.0
        %4300 = vmatpush1.msra.mxu0 0.0
        %4301 = vmatprep.subr.mxu0 0.0
        %4302 = vmatpush1.msra.mxu0 0.0
        %4303 = vmatprep.subr.mxu0 0.0
        %4304 = vmatpush1.msra.mxu0 0.0
        %4305 = vmatprep.subr.mxu0 0.0
        %4306 = vmatpush1.msra.mxu0 0.0
        %4307 = vmatprep.subr.mxu0 0.0
        %4308 = vmatpush1.msra.mxu0 0.0
        %4309 = vmatprep.subr.mxu0 0.0
        %4310 = vmatpush1.msra.mxu0 0.0
        %4311 = vmatprep.subr.mxu0 0.0
        %4312 = vmatpush1.msra.mxu0 0.0
        %4313 = vmatprep.subr.mxu0 0.0
        %4314 = vmatpush1.msra.mxu0 0.0
        %4315 = vmatprep.subr.mxu0 0.0
        %4316 = vmatpush1.msra.mxu0 0.0
        %4317 = vmatprep.mubr.f32.mxu0 0.0
        %v4318 = vand.u32 %v3948, 4294901760
        %4319 = vmatmul.mubr.f32.gmra.mrb[0].mxu0 %v4318
        %v4320 = vpop.f32.mrb[0].mxu0
        %v4321 = vadd.f32 %v4247, %v4320
        %v4322 = vpop.f32.mrb[0].mxu0
        %4323 = vdwg.mxu0
        %4324 = vmatprep.subr.mxu0 0.0
        %v4325 = vand.u32 %v1316, 4294901760
        %4326 = vmatpush1.msra.mxu0 %v4325
        %4327 = vmatprep.subr.mxu0 0.0
        %4328 = vmatpush1.msra.mxu0 0.0
        %4329 = vmatprep.subr.mxu0 0.0
        %4330 = vmatpush1.msra.mxu0 0.0
        %4331 = vmatprep.subr.mxu0 0.0
        %4332 = vmatpush1.msra.mxu0 0.0
        %4333 = vmatprep.subr.mxu0 0.0
        %4334 = vmatpush1.msra.mxu0 0.0
        %4335 = vmatprep.subr.mxu0 0.0
        %4336 = vmatpush1.msra.mxu0 0.0
        %4337 = vmatprep.subr.mxu0 0.0
        %4338 = vmatpush1.msra.mxu0 0.0
        %4339 = vmatprep.subr.mxu0 0.0
        %4340 = vmatpush1.msra.mxu0 0.0
        %4341 = vmatprep.subr.mxu0 0.0
        %4342 = vmatpush1.msra.mxu0 0.0
        %4343 = vmatprep.subr.mxu0 0.0
        %4344 = vmatpush1.msra.mxu0 0.0
        %4345 = vmatprep.subr.mxu0 0.0
        %4346 = vmatpush1.msra.mxu0 0.0
        %4347 = vmatprep.subr.mxu0 0.0
        %4348 = vmatpush1.msra.mxu0 0.0
        %4349 = vmatprep.subr.mxu0 0.0
        %4350 = vmatpush1.msra.mxu0 0.0
        %4351 = vmatprep.subr.mxu0 0.0
        %4352 = vmatpush1.msra.mxu0 0.0
        %4353 = vmatprep.subr.mxu0 0.0
        %4354 = vmatpush1.msra.mxu0 0.0
        %4355 = vmatprep.subr.mxu0 0.0
        %4356 = vmatpush1.msra.mxu0 0.0
        %4357 = vmatprep.subr.mxu0 0.0
        %4358 = vmatpush1.msra.mxu0 0.0
        %4359 = vmatprep.subr.mxu0 0.0
        %4360 = vmatpush1.msra.mxu0 0.0
        %4361 = vmatprep.subr.mxu0 0.0
        %4362 = vmatpush1.msra.mxu0 0.0
        %4363 = vmatprep.subr.mxu0 0.0
        %4364 = vmatpush1.msra.mxu0 0.0
        %4365 = vmatprep.subr.mxu0 0.0
        %4366 = vmatpush1.msra.mxu0 0.0
        %4367 = vmatprep.subr.mxu0 0.0
        %4368 = vmatpush1.msra.mxu0 0.0
        %4369 = vmatprep.subr.mxu0 0.0
        %4370 = vmatpush1.msra.mxu0 0.0
        %4371 = vmatprep.subr.mxu0 0.0
        %4372 = vmatpush1.msra.mxu0 0.0
        %4373 = vmatprep.subr.mxu0 0.0
        %4374 = vmatpush1.msra.mxu0 0.0
        %4375 = vmatprep.subr.mxu0 0.0
        %4376 = vmatpush1.msra.mxu0 0.0
        %4377 = vmatprep.subr.mxu0 0.0
        %4378 = vmatpush1.msra.mxu0 0.0
        %4379 = vmatprep.subr.mxu0 0.0
        %4380 = vmatpush1.msra.mxu0 0.0
        %4381 = vmatprep.subr.mxu0 0.0
        %4382 = vmatpush1.msra.mxu0 0.0
        %4383 = vmatprep.subr.mxu0 0.0
        %4384 = vmatpush1.msra.mxu0 0.0
        %4385 = vmatprep.subr.mxu0 0.0
        %4386 = vmatpush1.msra.mxu0 0.0
        %4387 = vmatprep.subr.mxu0 0.0
        %4388 = vmatpush1.msra.mxu0 0.0
        %4389 = vmatprep.mubr.f32.mxu0 0.0
        %v4390 = vand.u32 %v3948, 4294901760
        %4391 = vmatmul.mubr.f32.gmra.mrb[0].mxu0 %v4390
        %v4392 = vpop.f32.mrb[0].mxu0
        %v4393 = vadd.f32 %v4321, %v4392
        %v4394 = vpop.f32.mrb[0].mxu0
        %4395 = vdwg.mxu0
        %v4396 = vlaneseq
        %v4397 = vshrl.u32 %v4396, 7
        %v4398 = vsub.s32 0, %v4397
        %v4399 = vrot.slane %v4393, %v4398
        %v4400 = vsub.f32 %v3295, %v4399
        %v4401 = vsub.f32 %v3296, %v4399
        %v4402 = vmul.f32 %v4400, %v4400
        %v4403 = vmul.f32 %v4401, %v4401
        %v4404 = vadd.f32 %v4402, %v4403
        %v4405 = vrot.slane %v4404, 4
        %v4406 = vadd.f32 %v4404, %v4405
        %v4407 = vrot.slane %v4406, 2
        %v4408 = vadd.f32 %v4406, %v4407
        %v4409 = vrot.slane %v4408, 1
        %v4410 = vadd.f32 %v4408, %v4409
        %4411 = vmatprep.subr.mxu0 0.0
        %v4412 = vand.u32 %v356, 4294901760
        %4413 = vmatpush1.msra.mxu0 %v4412
        %4414 = vmatprep.subr.mxu0 0.0
        %v4415 = vand.u32 %v357, 4294901760
        %4416 = vmatpush1.msra.mxu0 %v4415
        %4417 = vmatprep.subr.mxu0 0.0
        %v4418 = vand.u32 %v358, 4294901760
        %4419 = vmatpush1.msra.mxu0 %v4418
        %4420 = vmatprep.subr.mxu0 0.0
        %v4421 = vand.u32 %v359, 4294901760
        %4422 = vmatpush1.msra.mxu0 %v4421
        %4423 = vmatprep.subr.mxu0 0.0
        %v4424 = vand.u32 %v360, 4294901760
        %4425 = vmatpush1.msra.mxu0 %v4424
        %4426 = vmatprep.subr.mxu0 0.0
        %v4427 = vand.u32 %v361, 4294901760
        %4428 = vmatpush1.msra.mxu0 %v4427
        %4429 = vmatprep.subr.mxu0 0.0
        %v4430 = vand.u32 %v362, 4294901760
        %4431 = vmatpush1.msra.mxu0 %v4430
        %4432 = vmatprep.subr.mxu0 0.0
        %v4433 = vand.u32 %v363, 4294901760
        %4434 = vmatpush1.msra.mxu0 %v4433
        %4435 = vmatprep.subr.mxu0 0.0
        %v4436 = vand.u32 %v364, 4294901760
        %4437 = vmatpush1.msra.mxu0 %v4436
        %4438 = vmatprep.subr.mxu0 0.0
        %v4439 = vand.u32 %v365, 4294901760
        %4440 = vmatpush1.msra.mxu0 %v4439
        %4441 = vmatprep.subr.mxu0 0.0
        %v4442 = vand.u32 %v366, 4294901760
        %4443 = vmatpush1.msra.mxu0 %v4442
        %4444 = vmatprep.subr.mxu0 0.0
        %v4445 = vand.u32 %v367, 4294901760
        %4446 = vmatpush1.msra.mxu0 %v4445
        %4447 = vmatprep.subr.mxu0 0.0
        %v4448 = vand.u32 %v368, 4294901760
        %4449 = vmatpush1.msra.mxu0 %v4448
        %4450 = vmatprep.subr.mxu0 0.0
        %v4451 = vand.u32 %v369, 4294901760
        %4452 = vmatpush1.msra.mxu0 %v4451
        %4453 = vmatprep.subr.mxu0 0.0
        %v4454 = vand.u32 %v370, 4294901760
        %4455 = vmatpush1.msra.mxu0 %v4454
        %4456 = vmatprep.subr.mxu0 0.0
        %v4457 = vand.u32 %v371, 4294901760
        %4458 = vmatpush1.msra.mxu0 %v4457
        %4459 = vmatprep.subr.mxu0 0.0
        %4460 = vmatpush1.msra.mxu0 0.0
        %4461 = vmatprep.subr.mxu0 0.0
        %4462 = vmatpush1.msra.mxu0 0.0
        %4463 = vmatprep.subr.mxu0 0.0
        %4464 = vmatpush1.msra.mxu0 0.0
        %4465 = vmatprep.subr.mxu0 0.0
        %4466 = vmatpush1.msra.mxu0 0.0
        %4467 = vmatprep.subr.mxu0 0.0
        %4468 = vmatpush1.msra.mxu0 0.0
        %4469 = vmatprep.subr.mxu0 0.0
        %4470 = vmatpush1.msra.mxu0 0.0
        %4471 = vmatprep.subr.mxu0 0.0
        %4472 = vmatpush1.msra.mxu0 0.0
        %4473 = vmatprep.subr.mxu0 0.0
        %4474 = vmatpush1.msra.mxu0 0.0
        %4475 = vmatprep.subr.mxu0 0.0
        %4476 = vmatpush1.msra.mxu0 0.0
        %4477 = vmatprep.subr.mxu0 0.0
        %4478 = vmatpush1.msra.mxu0 0.0
        %4479 = vmatprep.subr.mxu0 0.0
        %4480 = vmatpush1.msra.mxu0 0.0
        %4481 = vmatprep.subr.mxu0 0.0
        %4482 = vmatpush1.msra.mxu0 0.0
        %4483 = vmatprep.subr.mxu0 0.0
        %4484 = vmatpush1.msra.mxu0 0.0
        %4485 = vmatprep.subr.mxu0 0.0
        %4486 = vmatpush1.msra.mxu0 0.0
        %4487 = vmatprep.subr.mxu0 0.0
        %4488 = vmatpush1.msra.mxu0 0.0
        %4489 = vmatprep.subr.mxu0 0.0
        %4490 = vmatpush1.msra.mxu0 0.0
        %4491 = vmatprep.mubr.f32.mxu0 0.0
        %v4492 = vand.u32 %v4410, 4294901760
        %v4493 = vsub.f32 %v4410, %v4492
        %v4494 = vand.u32 %v4493, 4294901760
        %v4495 = vsub.f32 %v4493, %v4494
        %v4496 = vand.u32 %v4495, 4294901760
        %4497 = vmatmul.mubr.f32.gmra.mrb[0].mxu0 %v4496
        %v4498 = vpop.f32.mrb[0].mxu0
        %v4499 = vadd.f32 0.0, %v4498
        %v4500 = vpop.f32.mrb[0].mxu0
        %4501 = vdwg.mxu0
        %4502 = vmatprep.subr.mxu0 0.0
        %v4503 = vand.u32 %v356, 4294901760
        %v4504 = vsub.f32 %v356, %v4503
        %v4505 = vand.u32 %v4504, 4294901760
        %v4506 = vsub.f32 %v4504, %v4505
        %v4507 = vand.u32 %v4506, 4294901760
        %4508 = vmatpush1.msra.mxu0 %v4507
        %4509 = vmatprep.subr.mxu0 0.0
        %v4510 = vand.u32 %v357, 4294901760
        %v4511 = vsub.f32 %v357, %v4510
        %v4512 = vand.u32 %v4511, 4294901760
        %v4513 = vsub.f32 %v4511, %v4512
        %v4514 = vand.u32 %v4513, 4294901760
        %4515 = vmatpush1.msra.mxu0 %v4514
        %4516 = vmatprep.subr.mxu0 0.0
        %v4517 = vand.u32 %v358, 4294901760
        %v4518 = vsub.f32 %v358, %v4517
        %v4519 = vand.u32 %v4518, 4294901760
        %v4520 = vsub.f32 %v4518, %v4519
        %v4521 = vand.u32 %v4520, 4294901760
        %4522 = vmatpush1.msra.mxu0 %v4521
        %4523 = vmatprep.subr.mxu0 0.0
        %v4524 = vand.u32 %v359, 4294901760
        %v4525 = vsub.f32 %v359, %v4524
        %v4526 = vand.u32 %v4525, 4294901760
        %v4527 = vsub.f32 %v4525, %v4526
        %v4528 = vand.u32 %v4527, 4294901760
        %4529 = vmatpush1.msra.mxu0 %v4528
        %4530 = vmatprep.subr.mxu0 0.0
        %v4531 = vand.u32 %v360, 4294901760
        %v4532 = vsub.f32 %v360, %v4531
        %v4533 = vand.u32 %v4532, 4294901760
        %v4534 = vsub.f32 %v4532, %v4533
        %v4535 = vand.u32 %v4534, 4294901760
        %4536 = vmatpush1.msra.mxu0 %v4535
        %4537 = vmatprep.subr.mxu0 0.0
        %v4538 = vand.u32 %v361, 4294901760
        %v4539 = vsub.f32 %v361, %v4538
        %v4540 = vand.u32 %v4539, 4294901760
        %v4541 = vsub.f32 %v4539, %v4540
        %v4542 = vand.u32 %v4541, 4294901760
        %4543 = vmatpush1.msra.mxu0 %v4542
        %4544 = vmatprep.subr.mxu0 0.0
        %v4545 = vand.u32 %v362, 4294901760
        %v4546 = vsub.f32 %v362, %v4545
        %v4547 = vand.u32 %v4546, 4294901760
        %v4548 = vsub.f32 %v4546, %v4547
        %v4549 = vand.u32 %v4548, 4294901760
        %4550 = vmatpush1.msra.mxu0 %v4549
        %4551 = vmatprep.subr.mxu0 0.0
        %v4552 = vand.u32 %v363, 4294901760
        %v4553 = vsub.f32 %v363, %v4552
        %v4554 = vand.u32 %v4553, 4294901760
        %v4555 = vsub.f32 %v4553, %v4554
        %v4556 = vand.u32 %v4555, 4294901760
        %4557 = vmatpush1.msra.mxu0 %v4556
        %4558 = vmatprep.subr.mxu0 0.0
        %v4559 = vand.u32 %v364, 4294901760
        %v4560 = vsub.f32 %v364, %v4559
        %v4561 = vand.u32 %v4560, 4294901760
        %v4562 = vsub.f32 %v4560, %v4561
        %v4563 = vand.u32 %v4562, 4294901760
        %4564 = vmatpush1.msra.mxu0 %v4563
        %4565 = vmatprep.subr.mxu0 0.0
        %v4566 = vand.u32 %v365, 4294901760
        %v4567 = vsub.f32 %v365, %v4566
        %v4568 = vand.u32 %v4567, 4294901760
        %v4569 = vsub.f32 %v4567, %v4568
        %v4570 = vand.u32 %v4569, 4294901760
        %4571 = vmatpush1.msra.mxu0 %v4570
        %4572 = vmatprep.subr.mxu0 0.0
        %v4573 = vand.u32 %v366, 4294901760
        %v4574 = vsub.f32 %v366, %v4573
        %v4575 = vand.u32 %v4574, 4294901760
        %v4576 = vsub.f32 %v4574, %v4575
        %v4577 = vand.u32 %v4576, 4294901760
        %4578 = vmatpush1.msra.mxu0 %v4577
        %4579 = vmatprep.subr.mxu0 0.0
        %v4580 = vand.u32 %v367, 4294901760
        %v4581 = vsub.f32 %v367, %v4580
        %v4582 = vand.u32 %v4581, 4294901760
        %v4583 = vsub.f32 %v4581, %v4582
        %v4584 = vand.u32 %v4583, 4294901760
        %4585 = vmatpush1.msra.mxu0 %v4584
        %4586 = vmatprep.subr.mxu0 0.0
        %v4587 = vand.u32 %v368, 4294901760
        %v4588 = vsub.f32 %v368, %v4587
        %v4589 = vand.u32 %v4588, 4294901760
        %v4590 = vsub.f32 %v4588, %v4589
        %v4591 = vand.u32 %v4590, 4294901760
        %4592 = vmatpush1.msra.mxu0 %v4591
        %4593 = vmatprep.subr.mxu0 0.0
        %v4594 = vand.u32 %v369, 4294901760
        %v4595 = vsub.f32 %v369, %v4594
        %v4596 = vand.u32 %v4595, 4294901760
        %v4597 = vsub.f32 %v4595, %v4596
        %v4598 = vand.u32 %v4597, 4294901760
        %4599 = vmatpush1.msra.mxu0 %v4598
        %4600 = vmatprep.subr.mxu0 0.0
        %v4601 = vand.u32 %v370, 4294901760
        %v4602 = vsub.f32 %v370, %v4601
        %v4603 = vand.u32 %v4602, 4294901760
        %v4604 = vsub.f32 %v4602, %v4603
        %v4605 = vand.u32 %v4604, 4294901760
        %4606 = vmatpush1.msra.mxu0 %v4605
        %4607 = vmatprep.subr.mxu0 0.0
        %v4608 = vand.u32 %v371, 4294901760
        %v4609 = vsub.f32 %v371, %v4608
        %v4610 = vand.u32 %v4609, 4294901760
        %v4611 = vsub.f32 %v4609, %v4610
        %v4612 = vand.u32 %v4611, 4294901760
        %4613 = vmatpush1.msra.mxu0 %v4612
        %4614 = vmatprep.subr.mxu0 0.0
        %4615 = vmatpush1.msra.mxu0 0.0
        %4616 = vmatprep.subr.mxu0 0.0
        %4617 = vmatpush1.msra.mxu0 0.0
        %4618 = vmatprep.subr.mxu0 0.0
        %4619 = vmatpush1.msra.mxu0 0.0
        %4620 = vmatprep.subr.mxu0 0.0
        %4621 = vmatpush1.msra.mxu0 0.0
        %4622 = vmatprep.subr.mxu0 0.0
        %4623 = vmatpush1.msra.mxu0 0.0
        %4624 = vmatprep.subr.mxu0 0.0
        %4625 = vmatpush1.msra.mxu0 0.0
        %4626 = vmatprep.subr.mxu0 0.0
        %4627 = vmatpush1.msra.mxu0 0.0
        %4628 = vmatprep.subr.mxu0 0.0
        %4629 = vmatpush1.msra.mxu0 0.0
        %4630 = vmatprep.subr.mxu0 0.0
        %4631 = vmatpush1.msra.mxu0 0.0
        %4632 = vmatprep.subr.mxu0 0.0
        %4633 = vmatpush1.msra.mxu0 0.0
        %4634 = vmatprep.subr.mxu0 0.0
        %4635 = vmatpush1.msra.mxu0 0.0
        %4636 = vmatprep.subr.mxu0 0.0
        %4637 = vmatpush1.msra.mxu0 0.0
        %4638 = vmatprep.subr.mxu0 0.0
        %4639 = vmatpush1.msra.mxu0 0.0
        %4640 = vmatprep.subr.mxu0 0.0
        %4641 = vmatpush1.msra.mxu0 0.0
        %4642 = vmatprep.subr.mxu0 0.0
        %4643 = vmatpush1.msra.mxu0 0.0
        %4644 = vmatprep.subr.mxu0 0.0
        %4645 = vmatpush1.msra.mxu0 0.0
        %4646 = vmatprep.mubr.f32.mxu0 0.0
        %v4647 = vand.u32 %v4410, 4294901760
        %4648 = vmatmul.mubr.f32.gmra.mrb[0].mxu0 %v4647
        %v4649 = vpop.f32.mrb[0].mxu0
        %v4650 = vadd.f32 %v4499, %v4649
        %v4651 = vpop.f32.mrb[0].mxu0
        %4652 = vdwg.mxu0
        %4653 = vmatprep.subr.mxu0 0.0
        %v4654 = vand.u32 %v356, 4294901760
        %v4655 = vsub.f32 %v356, %v4654
        %4656 = vmatpush1.msra.mxu0 %v4655
        %4657 = vmatprep.subr.mxu0 0.0
        %v4658 = vand.u32 %v357, 4294901760
        %v4659 = vsub.f32 %v357, %v4658
        %4660 = vmatpush1.msra.mxu0 %v4659
        %4661 = vmatprep.subr.mxu0 0.0
        %v4662 = vand.u32 %v358, 4294901760
        %v4663 = vsub.f32 %v358, %v4662
        %4664 = vmatpush1.msra.mxu0 %v4663
        %4665 = vmatprep.subr.mxu0 0.0
        %v4666 = vand.u32 %v359, 4294901760
        %v4667 = vsub.f32 %v359, %v4666
        %4668 = vmatpush1.msra.mxu0 %v4667
        %4669 = vmatprep.subr.mxu0 0.0
        %v4670 = vand.u32 %v360, 4294901760
        %v4671 = vsub.f32 %v360, %v4670
        %4672 = vmatpush1.msra.mxu0 %v4671
        %4673 = vmatprep.subr.mxu0 0.0
        %v4674 = vand.u32 %v361, 4294901760
        %v4675 = vsub.f32 %v361, %v4674
        %4676 = vmatpush1.msra.mxu0 %v4675
        %4677 = vmatprep.subr.mxu0 0.0
        %v4678 = vand.u32 %v362, 4294901760
        %v4679 = vsub.f32 %v362, %v4678
        %4680 = vmatpush1.msra.mxu0 %v4679
        %4681 = vmatprep.subr.mxu0 0.0
        %v4682 = vand.u32 %v363, 4294901760
        %v4683 = vsub.f32 %v363, %v4682
        %4684 = vmatpush1.msra.mxu0 %v4683
        %4685 = vmatprep.subr.mxu0 0.0
        %v4686 = vand.u32 %v364, 4294901760
        %v4687 = vsub.f32 %v364, %v4686
        %4688 = vmatpush1.msra.mxu0 %v4687
        %4689 = vmatprep.subr.mxu0 0.0
        %v4690 = vand.u32 %v365, 4294901760
        %v4691 = vsub.f32 %v365, %v4690
        %4692 = vmatpush1.msra.mxu0 %v4691
        %4693 = vmatprep.subr.mxu0 0.0
        %v4694 = vand.u32 %v366, 4294901760
        %v4695 = vsub.f32 %v366, %v4694
        %4696 = vmatpush1.msra.mxu0 %v4695
        %4697 = vmatprep.subr.mxu0 0.0
        %v4698 = vand.u32 %v367, 4294901760
        %v4699 = vsub.f32 %v367, %v4698
        %4700 = vmatpush1.msra.mxu0 %v4699
        %4701 = vmatprep.subr.mxu0 0.0
        %v4702 = vand.u32 %v368, 4294901760
        %v4703 = vsub.f32 %v368, %v4702
        %4704 = vmatpush1.msra.mxu0 %v4703
        %4705 = vmatprep.subr.mxu0 0.0
        %v4706 = vand.u32 %v369, 4294901760
        %v4707 = vsub.f32 %v369, %v4706
        %4708 = vmatpush1.msra.mxu0 %v4707
        %4709 = vmatprep.subr.mxu0 0.0
        %v4710 = vand.u32 %v370, 4294901760
        %v4711 = vsub.f32 %v370, %v4710
        %4712 = vmatpush1.msra.mxu0 %v4711
        %4713 = vmatprep.subr.mxu0 0.0
        %v4714 = vand.u32 %v371, 4294901760
        %v4715 = vsub.f32 %v371, %v4714
        %4716 = vmatpush1.msra.mxu0 %v4715
        %4717 = vmatprep.subr.mxu0 0.0
        %4718 = vmatpush1.msra.mxu0 0.0
        %4719 = vmatprep.subr.mxu0 0.0
        %4720 = vmatpush1.msra.mxu0 0.0
        %4721 = vmatprep.subr.mxu0 0.0
        %4722 = vmatpush1.msra.mxu0 0.0
        %4723 = vmatprep.subr.mxu0 0.0
        %4724 = vmatpush1.msra.mxu0 0.0
        %4725 = vmatprep.subr.mxu0 0.0
        %4726 = vmatpush1.msra.mxu0 0.0
        %4727 = vmatprep.subr.mxu0 0.0
        %4728 = vmatpush1.msra.mxu0 0.0
        %4729 = vmatprep.subr.mxu0 0.0
        %4730 = vmatpush1.msra.mxu0 0.0
        %4731 = vmatprep.subr.mxu0 0.0
        %4732 = vmatpush1.msra.mxu0 0.0
        %4733 = vmatprep.subr.mxu0 0.0
        %4734 = vmatpush1.msra.mxu0 0.0
        %4735 = vmatprep.subr.mxu0 0.0
        %4736 = vmatpush1.msra.mxu0 0.0
        %4737 = vmatprep.subr.mxu0 0.0
        %4738 = vmatpush1.msra.mxu0 0.0
        %4739 = vmatprep.subr.mxu0 0.0
        %4740 = vmatpush1.msra.mxu0 0.0
        %4741 = vmatprep.subr.mxu0 0.0
        %4742 = vmatpush1.msra.mxu0 0.0
        %4743 = vmatprep.subr.mxu0 0.0
        %4744 = vmatpush1.msra.mxu0 0.0
        %4745 = vmatprep.subr.mxu0 0.0
        %4746 = vmatpush1.msra.mxu0 0.0
        %4747 = vmatprep.subr.mxu0 0.0
        %4748 = vmatpush1.msra.mxu0 0.0
        %4749 = vmatprep.mubr.f32.mxu0 0.0
        %v4750 = vand.u32 %v4410, 4294901760
        %v4751 = vsub.f32 %v4410, %v4750
        %4752 = vmatmul.mubr.f32.gmra.mrb[0].mxu0 %v4751
        %v4753 = vpop.f32.mrb[0].mxu0
        %v4754 = vadd.f32 %v4650, %v4753
        %v4755 = vpop.f32.mrb[0].mxu0
        %4756 = vdwg.mxu0
        %4757 = vmatprep.subr.mxu0 0.0
        %v4758 = vand.u32 %v356, 4294901760
        %4759 = vmatpush1.msra.mxu0 %v4758
        %4760 = vmatprep.subr.mxu0 0.0
        %v4761 = vand.u32 %v357, 4294901760
        %4762 = vmatpush1.msra.mxu0 %v4761
        %4763 = vmatprep.subr.mxu0 0.0
        %v4764 = vand.u32 %v358, 4294901760
        %4765 = vmatpush1.msra.mxu0 %v4764
        %4766 = vmatprep.subr.mxu0 0.0
        %v4767 = vand.u32 %v359, 4294901760
        %4768 = vmatpush1.msra.mxu0 %v4767
        %4769 = vmatprep.subr.mxu0 0.0
        %v4770 = vand.u32 %v360, 4294901760
        %4771 = vmatpush1.msra.mxu0 %v4770
        %4772 = vmatprep.subr.mxu0 0.0
        %v4773 = vand.u32 %v361, 4294901760
        %4774 = vmatpush1.msra.mxu0 %v4773
        %4775 = vmatprep.subr.mxu0 0.0
        %v4776 = vand.u32 %v362, 4294901760
        %4777 = vmatpush1.msra.mxu0 %v4776
        %4778 = vmatprep.subr.mxu0 0.0
        %v4779 = vand.u32 %v363, 4294901760
        %4780 = vmatpush1.msra.mxu0 %v4779
        %4781 = vmatprep.subr.mxu0 0.0
        %v4782 = vand.u32 %v364, 4294901760
        %4783 = vmatpush1.msra.mxu0 %v4782
        %4784 = vmatprep.subr.mxu0 0.0
        %v4785 = vand.u32 %v365, 4294901760
        %4786 = vmatpush1.msra.mxu0 %v4785
        %4787 = vmatprep.subr.mxu0 0.0
        %v4788 = vand.u32 %v366, 4294901760
        %4789 = vmatpush1.msra.mxu0 %v4788
        %4790 = vmatprep.subr.mxu0 0.0
        %v4791 = vand.u32 %v367, 4294901760
        %4792 = vmatpush1.msra.mxu0 %v4791
        %4793 = vmatprep.subr.mxu0 0.0
        %v4794 = vand.u32 %v368, 4294901760
        %4795 = vmatpush1.msra.mxu0 %v4794
        %4796 = vmatprep.subr.mxu0 0.0
        %v4797 = vand.u32 %v369, 4294901760
        %4798 = vmatpush1.msra.mxu0 %v4797
        %4799 = vmatprep.subr.mxu0 0.0
        %v4800 = vand.u32 %v370, 4294901760
        %4801 = vmatpush1.msra.mxu0 %v4800
        %4802 = vmatprep.subr.mxu0 0.0
        %v4803 = vand.u32 %v371, 4294901760
        %4804 = vmatpush1.msra.mxu0 %v4803
        %4805 = vmatprep.subr.mxu0 0.0
        %4806 = vmatpush1.msra.mxu0 0.0
        %4807 = vmatprep.subr.mxu0 0.0
        %4808 = vmatpush1.msra.mxu0 0.0
        %4809 = vmatprep.subr.mxu0 0.0
        %4810 = vmatpush1.msra.mxu0 0.0
        %4811 = vmatprep.subr.mxu0 0.0
        %4812 = vmatpush1.msra.mxu0 0.0
        %4813 = vmatprep.subr.mxu0 0.0
        %4814 = vmatpush1.msra.mxu0 0.0
        %4815 = vmatprep.subr.mxu0 0.0
        %4816 = vmatpush1.msra.mxu0 0.0
        %4817 = vmatprep.subr.mxu0 0.0
        %4818 = vmatpush1.msra.mxu0 0.0
        %4819 = vmatprep.subr.mxu0 0.0
        %4820 = vmatpush1.msra.mxu0 0.0
        %4821 = vmatprep.subr.mxu0 0.0
        %4822 = vmatpush1.msra.mxu0 0.0
        %4823 = vmatprep.subr.mxu0 0.0
        %4824 = vmatpush1.msra.mxu0 0.0
        %4825 = vmatprep.subr.mxu0 0.0
        %4826 = vmatpush1.msra.mxu0 0.0
        %4827 = vmatprep.subr.mxu0 0.0
        %4828 = vmatpush1.msra.mxu0 0.0
        %4829 = vmatprep.subr.mxu0 0.0
        %4830 = vmatpush1.msra.mxu0 0.0
        %4831 = vmatprep.subr.mxu0 0.0
        %4832 = vmatpush1.msra.mxu0 0.0
        %4833 = vmatprep.subr.mxu0 0.0
        %4834 = vmatpush1.msra.mxu0 0.0
        %4835 = vmatprep.subr.mxu0 0.0
        %4836 = vmatpush1.msra.mxu0 0.0
        %4837 = vmatprep.mubr.f32.mxu0 0.0
        %v4838 = vand.u32 %v4410, 4294901760
        %v4839 = vsub.f32 %v4410, %v4838
        %v4840 = vand.u32 %v4839, 4294901760
        %4841 = vmatmul.mubr.f32.gmra.mrb[0].mxu0 %v4840
        %v4842 = vpop.f32.mrb[0].mxu0
        %v4843 = vadd.f32 %v4754, %v4842
        %v4844 = vpop.f32.mrb[0].mxu0
        %4845 = vdwg.mxu0
        %4846 = vmatprep.subr.mxu0 0.0
        %v4847 = vand.u32 %v356, 4294901760
        %v4848 = vsub.f32 %v356, %v4847
        %v4849 = vand.u32 %v4848, 4294901760
        %4850 = vmatpush1.msra.mxu0 %v4849
        %4851 = vmatprep.subr.mxu0 0.0
        %v4852 = vand.u32 %v357, 4294901760
        %v4853 = vsub.f32 %v357, %v4852
        %v4854 = vand.u32 %v4853, 4294901760
        %4855 = vmatpush1.msra.mxu0 %v4854
        %4856 = vmatprep.subr.mxu0 0.0
        %v4857 = vand.u32 %v358, 4294901760
        %v4858 = vsub.f32 %v358, %v4857
        %v4859 = vand.u32 %v4858, 4294901760
        %4860 = vmatpush1.msra.mxu0 %v4859
        %4861 = vmatprep.subr.mxu0 0.0
        %v4862 = vand.u32 %v359, 4294901760
        %v4863 = vsub.f32 %v359, %v4862
        %v4864 = vand.u32 %v4863, 4294901760
        %4865 = vmatpush1.msra.mxu0 %v4864
        %4866 = vmatprep.subr.mxu0 0.0
        %v4867 = vand.u32 %v360, 4294901760
        %v4868 = vsub.f32 %v360, %v4867
        %v4869 = vand.u32 %v4868, 4294901760
        %4870 = vmatpush1.msra.mxu0 %v4869
        %4871 = vmatprep.subr.mxu0 0.0
        %v4872 = vand.u32 %v361, 4294901760
        %v4873 = vsub.f32 %v361, %v4872
        %v4874 = vand.u32 %v4873, 4294901760
        %4875 = vmatpush1.msra.mxu0 %v4874
        %4876 = vmatprep.subr.mxu0 0.0
        %v4877 = vand.u32 %v362, 4294901760
        %v4878 = vsub.f32 %v362, %v4877
        %v4879 = vand.u32 %v4878, 4294901760
        %4880 = vmatpush1.msra.mxu0 %v4879
        %4881 = vmatprep.subr.mxu0 0.0
        %v4882 = vand.u32 %v363, 4294901760
        %v4883 = vsub.f32 %v363, %v4882
        %v4884 = vand.u32 %v4883, 4294901760
        %4885 = vmatpush1.msra.mxu0 %v4884
        %4886 = vmatprep.subr.mxu0 0.0
        %v4887 = vand.u32 %v364, 4294901760
        %v4888 = vsub.f32 %v364, %v4887
        %v4889 = vand.u32 %v4888, 4294901760
        %4890 = vmatpush1.msra.mxu0 %v4889
        %4891 = vmatprep.subr.mxu0 0.0
        %v4892 = vand.u32 %v365, 4294901760
        %v4893 = vsub.f32 %v365, %v4892
        %v4894 = vand.u32 %v4893, 4294901760
        %4895 = vmatpush1.msra.mxu0 %v4894
        %4896 = vmatprep.subr.mxu0 0.0
        %v4897 = vand.u32 %v366, 4294901760
        %v4898 = vsub.f32 %v366, %v4897
        %v4899 = vand.u32 %v4898, 4294901760
        %4900 = vmatpush1.msra.mxu0 %v4899
        %4901 = vmatprep.subr.mxu0 0.0
        %v4902 = vand.u32 %v367, 4294901760
        %v4903 = vsub.f32 %v367, %v4902
        %v4904 = vand.u32 %v4903, 4294901760
        %4905 = vmatpush1.msra.mxu0 %v4904
        %4906 = vmatprep.subr.mxu0 0.0
        %v4907 = vand.u32 %v368, 4294901760
        %v4908 = vsub.f32 %v368, %v4907
        %v4909 = vand.u32 %v4908, 4294901760
        %4910 = vmatpush1.msra.mxu0 %v4909
        %4911 = vmatprep.subr.mxu0 0.0
        %v4912 = vand.u32 %v369, 4294901760
        %v4913 = vsub.f32 %v369, %v4912
        %v4914 = vand.u32 %v4913, 4294901760
        %4915 = vmatpush1.msra.mxu0 %v4914
        %4916 = vmatprep.subr.mxu0 0.0
        %v4917 = vand.u32 %v370, 4294901760
        %v4918 = vsub.f32 %v370, %v4917
        %v4919 = vand.u32 %v4918, 4294901760
        %4920 = vmatpush1.msra.mxu0 %v4919
        %4921 = vmatprep.subr.mxu0 0.0
        %v4922 = vand.u32 %v371, 4294901760
        %v4923 = vsub.f32 %v371, %v4922
        %v4924 = vand.u32 %v4923, 4294901760
        %4925 = vmatpush1.msra.mxu0 %v4924
        %4926 = vmatprep.subr.mxu0 0.0
        %4927 = vmatpush1.msra.mxu0 0.0
        %4928 = vmatprep.subr.mxu0 0.0
        %4929 = vmatpush1.msra.mxu0 0.0
        %4930 = vmatprep.subr.mxu0 0.0
        %4931 = vmatpush1.msra.mxu0 0.0
        %4932 = vmatprep.subr.mxu0 0.0
        %4933 = vmatpush1.msra.mxu0 0.0
        %4934 = vmatprep.subr.mxu0 0.0
        %4935 = vmatpush1.msra.mxu0 0.0
        %4936 = vmatprep.subr.mxu0 0.0
        %4937 = vmatpush1.msra.mxu0 0.0
        %4938 = vmatprep.subr.mxu0 0.0
        %4939 = vmatpush1.msra.mxu0 0.0
        %4940 = vmatprep.subr.mxu0 0.0
        %4941 = vmatpush1.msra.mxu0 0.0
        %4942 = vmatprep.subr.mxu0 0.0
        %4943 = vmatpush1.msra.mxu0 0.0
        %4944 = vmatprep.subr.mxu0 0.0
        %4945 = vmatpush1.msra.mxu0 0.0
        %4946 = vmatprep.subr.mxu0 0.0
        %4947 = vmatpush1.msra.mxu0 0.0
        %4948 = vmatprep.subr.mxu0 0.0
        %4949 = vmatpush1.msra.mxu0 0.0
        %4950 = vmatprep.subr.mxu0 0.0
        %4951 = vmatpush1.msra.mxu0 0.0
        %4952 = vmatprep.subr.mxu0 0.0
        %4953 = vmatpush1.msra.mxu0 0.0
        %4954 = vmatprep.subr.mxu0 0.0
        %4955 = vmatpush1.msra.mxu0 0.0
        %4956 = vmatprep.subr.mxu0 0.0
        %4957 = vmatpush1.msra.mxu0 0.0
        %4958 = vmatprep.mubr.f32.mxu0 0.0
        %v4959 = vand.u32 %v4410, 4294901760
        %4960 = vmatmul.mubr.f32.gmra.mrb[0].mxu0 %v4959
        %v4961 = vpop.f32.mrb[0].mxu0
        %v4962 = vadd.f32 %v4843, %v4961
        %v4963 = vpop.f32.mrb[0].mxu0
        %4964 = vdwg.mxu0
        %4965 = vmatprep.subr.mxu0 0.0
        %v4966 = vand.u32 %v356, 4294901760
        %4967 = vmatpush1.msra.mxu0 %v4966
        %4968 = vmatprep.subr.mxu0 0.0
        %v4969 = vand.u32 %v357, 4294901760
        %4970 = vmatpush1.msra.mxu0 %v4969
        %4971 = vmatprep.subr.mxu0 0.0
        %v4972 = vand.u32 %v358, 4294901760
        %4973 = vmatpush1.msra.mxu0 %v4972
        %4974 = vmatprep.subr.mxu0 0.0
        %v4975 = vand.u32 %v359, 4294901760
        %4976 = vmatpush1.msra.mxu0 %v4975
        %4977 = vmatprep.subr.mxu0 0.0
        %v4978 = vand.u32 %v360, 4294901760
        %4979 = vmatpush1.msra.mxu0 %v4978
        %4980 = vmatprep.subr.mxu0 0.0
        %v4981 = vand.u32 %v361, 4294901760
        %4982 = vmatpush1.msra.mxu0 %v4981
        %4983 = vmatprep.subr.mxu0 0.0
        %v4984 = vand.u32 %v362, 4294901760
        %4985 = vmatpush1.msra.mxu0 %v4984
        %4986 = vmatprep.subr.mxu0 0.0
        %v4987 = vand.u32 %v363, 4294901760
        %4988 = vmatpush1.msra.mxu0 %v4987
        %4989 = vmatprep.subr.mxu0 0.0
        %v4990 = vand.u32 %v364, 4294901760
        %4991 = vmatpush1.msra.mxu0 %v4990
        %4992 = vmatprep.subr.mxu0 0.0
        %v4993 = vand.u32 %v365, 4294901760
        %4994 = vmatpush1.msra.mxu0 %v4993
        %4995 = vmatprep.subr.mxu0 0.0
        %v4996 = vand.u32 %v366, 4294901760
        %4997 = vmatpush1.msra.mxu0 %v4996
        %4998 = vmatprep.subr.mxu0 0.0
        %v4999 = vand.u32 %v367, 4294901760
        %5000 = vmatpush1.msra.mxu0 %v4999
        %5001 = vmatprep.subr.mxu0 0.0
        %v5002 = vand.u32 %v368, 4294901760
        %5003 = vmatpush1.msra.mxu0 %v5002
        %5004 = vmatprep.subr.mxu0 0.0
        %v5005 = vand.u32 %v369, 4294901760
        %5006 = vmatpush1.msra.mxu0 %v5005
        %5007 = vmatprep.subr.mxu0 0.0
        %v5008 = vand.u32 %v370, 4294901760
        %5009 = vmatpush1.msra.mxu0 %v5008
        %5010 = vmatprep.subr.mxu0 0.0
        %v5011 = vand.u32 %v371, 4294901760
        %5012 = vmatpush1.msra.mxu0 %v5011
        %5013 = vmatprep.subr.mxu0 0.0
        %5014 = vmatpush1.msra.mxu0 0.0
        %5015 = vmatprep.subr.mxu0 0.0
        %5016 = vmatpush1.msra.mxu0 0.0
        %5017 = vmatprep.subr.mxu0 0.0
        %5018 = vmatpush1.msra.mxu0 0.0
        %5019 = vmatprep.subr.mxu0 0.0
        %5020 = vmatpush1.msra.mxu0 0.0
        %5021 = vmatprep.subr.mxu0 0.0
        %5022 = vmatpush1.msra.mxu0 0.0
        %5023 = vmatprep.subr.mxu0 0.0
        %5024 = vmatpush1.msra.mxu0 0.0
        %5025 = vmatprep.subr.mxu0 0.0
        %5026 = vmatpush1.msra.mxu0 0.0
        %5027 = vmatprep.subr.mxu0 0.0
        %5028 = vmatpush1.msra.mxu0 0.0
        %5029 = vmatprep.subr.mxu0 0.0
        %5030 = vmatpush1.msra.mxu0 0.0
        %5031 = vmatprep.subr.mxu0 0.0
        %5032 = vmatpush1.msra.mxu0 0.0
        %5033 = vmatprep.subr.mxu0 0.0
        %5034 = vmatpush1.msra.mxu0 0.0
        %5035 = vmatprep.subr.mxu0 0.0
        %5036 = vmatpush1.msra.mxu0 0.0
        %5037 = vmatprep.subr.mxu0 0.0
        %5038 = vmatpush1.msra.mxu0 0.0
        %5039 = vmatprep.subr.mxu0 0.0
        %5040 = vmatpush1.msra.mxu0 0.0
        %5041 = vmatprep.subr.mxu0 0.0
        %5042 = vmatpush1.msra.mxu0 0.0
        %5043 = vmatprep.subr.mxu0 0.0
        %5044 = vmatpush1.msra.mxu0 0.0
        %5045 = vmatprep.mubr.f32.mxu0 0.0
        %v5046 = vand.u32 %v4410, 4294901760
        %5047 = vmatmul.mubr.f32.gmra.mrb[0].mxu0 %v5046
        %v5048 = vpop.f32.mrb[0].mxu0
        %v5049 = vadd.f32 %v4962, %v5048
        %v5050 = vpop.f32.mrb[0].mxu0
        %5051 = vdwg.mxu0
        %v5053 = vsel %vm1310, %v5049, 0
        %5055 = vmatprep.subr.mxu0 0.0
        %v5056 = vand.u32 %v1316, 4294901760
        %5057 = vmatpush1.msra.mxu0 %v5056
        %5058 = vmatprep.subr.mxu0 0.0
        %5059 = vmatpush1.msra.mxu0 0.0
        %5060 = vmatprep.subr.mxu0 0.0
        %5061 = vmatpush1.msra.mxu0 0.0
        %5062 = vmatprep.subr.mxu0 0.0
        %5063 = vmatpush1.msra.mxu0 0.0
        %5064 = vmatprep.subr.mxu0 0.0
        %5065 = vmatpush1.msra.mxu0 0.0
        %5066 = vmatprep.subr.mxu0 0.0
        %5067 = vmatpush1.msra.mxu0 0.0
        %5068 = vmatprep.subr.mxu0 0.0
        %5069 = vmatpush1.msra.mxu0 0.0
        %5070 = vmatprep.subr.mxu0 0.0
        %5071 = vmatpush1.msra.mxu0 0.0
        %5072 = vmatprep.subr.mxu0 0.0
        %5073 = vmatpush1.msra.mxu0 0.0
        %5074 = vmatprep.subr.mxu0 0.0
        %5075 = vmatpush1.msra.mxu0 0.0
        %5076 = vmatprep.subr.mxu0 0.0
        %5077 = vmatpush1.msra.mxu0 0.0
        %5078 = vmatprep.subr.mxu0 0.0
        %5079 = vmatpush1.msra.mxu0 0.0
        %5080 = vmatprep.subr.mxu0 0.0
        %5081 = vmatpush1.msra.mxu0 0.0
        %5082 = vmatprep.subr.mxu0 0.0
        %5083 = vmatpush1.msra.mxu0 0.0
        %5084 = vmatprep.subr.mxu0 0.0
        %5085 = vmatpush1.msra.mxu0 0.0
        %5086 = vmatprep.subr.mxu0 0.0
        %5087 = vmatpush1.msra.mxu0 0.0
        %5088 = vmatprep.subr.mxu0 0.0
        %5089 = vmatpush1.msra.mxu0 0.0
        %5090 = vmatprep.subr.mxu0 0.0
        %5091 = vmatpush1.msra.mxu0 0.0
        %5092 = vmatprep.subr.mxu0 0.0
        %5093 = vmatpush1.msra.mxu0 0.0
        %5094 = vmatprep.subr.mxu0 0.0
        %5095 = vmatpush1.msra.mxu0 0.0
        %5096 = vmatprep.subr.mxu0 0.0
        %5097 = vmatpush1.msra.mxu0 0.0
        %5098 = vmatprep.subr.mxu0 0.0
        %5099 = vmatpush1.msra.mxu0 0.0
        %5100 = vmatprep.subr.mxu0 0.0
        %5101 = vmatpush1.msra.mxu0 0.0
        %5102 = vmatprep.subr.mxu0 0.0
        %5103 = vmatpush1.msra.mxu0 0.0
        %5104 = vmatprep.subr.mxu0 0.0
        %5105 = vmatpush1.msra.mxu0 0.0
        %5106 = vmatprep.subr.mxu0 0.0
        %5107 = vmatpush1.msra.mxu0 0.0
        %5108 = vmatprep.subr.mxu0 0.0
        %5109 = vmatpush1.msra.mxu0 0.0
        %5110 = vmatprep.subr.mxu0 0.0
        %5111 = vmatpush1.msra.mxu0 0.0
        %5112 = vmatprep.subr.mxu0 0.0
        %5113 = vmatpush1.msra.mxu0 0.0
        %5114 = vmatprep.subr.mxu0 0.0
        %5115 = vmatpush1.msra.mxu0 0.0
        %5116 = vmatprep.subr.mxu0 0.0
        %5117 = vmatpush1.msra.mxu0 0.0
        %5118 = vmatprep.subr.mxu0 0.0
        %5119 = vmatpush1.msra.mxu0 0.0
        %5120 = vmatprep.mubr.f32.mxu0 0.0
        %v5121 = vand.u32 %v5053, 4294901760
        %v5122 = vsub.f32 %v5053, %v5121
        %v5123 = vand.u32 %v5122, 4294901760
        %v5124 = vsub.f32 %v5122, %v5123
        %v5125 = vand.u32 %v5124, 4294901760
        %5126 = vmatmul.mubr.f32.gmra.mrb[0].mxu0 %v5125
        %v5127 = vpop.f32.mrb[0].mxu0
        %v5128 = vadd.f32 1e-05, %v5127
        %v5129 = vpop.f32.mrb[0].mxu0
        %5130 = vdwg.mxu0
        %5131 = vmatprep.subr.mxu0 0.0
        %v5132 = vand.u32 %v1316, 4294901760
        %v5133 = vsub.f32 %v1316, %v5132
        %v5134 = vand.u32 %v5133, 4294901760
        %v5135 = vsub.f32 %v5133, %v5134
        %v5136 = vand.u32 %v5135, 4294901760
        %5137 = vmatpush1.msra.mxu0 %v5136
        %5138 = vmatprep.subr.mxu0 0.0
        %5139 = vmatpush1.msra.mxu0 0.0
        %5140 = vmatprep.subr.mxu0 0.0
        %5141 = vmatpush1.msra.mxu0 0.0
        %5142 = vmatprep.subr.mxu0 0.0
        %5143 = vmatpush1.msra.mxu0 0.0
        %5144 = vmatprep.subr.mxu0 0.0
        %5145 = vmatpush1.msra.mxu0 0.0
        %5146 = vmatprep.subr.mxu0 0.0
        %5147 = vmatpush1.msra.mxu0 0.0
        %5148 = vmatprep.subr.mxu0 0.0
        %5149 = vmatpush1.msra.mxu0 0.0
        %5150 = vmatprep.subr.mxu0 0.0
        %5151 = vmatpush1.msra.mxu0 0.0
        %5152 = vmatprep.subr.mxu0 0.0
        %5153 = vmatpush1.msra.mxu0 0.0
        %5154 = vmatprep.subr.mxu0 0.0
        %5155 = vmatpush1.msra.mxu0 0.0
        %5156 = vmatprep.subr.mxu0 0.0
        %5157 = vmatpush1.msra.mxu0 0.0
        %5158 = vmatprep.subr.mxu0 0.0
        %5159 = vmatpush1.msra.mxu0 0.0
        %5160 = vmatprep.subr.mxu0 0.0
        %5161 = vmatpush1.msra.mxu0 0.0
        %5162 = vmatprep.subr.mxu0 0.0
        %5163 = vmatpush1.msra.mxu0 0.0
        %5164 = vmatprep.subr.mxu0 0.0
        %5165 = vmatpush1.msra.mxu0 0.0
        %5166 = vmatprep.subr.mxu0 0.0
        %5167 = vmatpush1.msra.mxu0 0.0
        %5168 = vmatprep.subr.mxu0 0.0
        %5169 = vmatpush1.msra.mxu0 0.0
        %5170 = vmatprep.subr.mxu0 0.0
        %5171 = vmatpush1.msra.mxu0 0.0
        %5172 = vmatprep.subr.mxu0 0.0
        %5173 = vmatpush1.msra.mxu0 0.0
        %5174 = vmatprep.subr.mxu0 0.0
        %5175 = vmatpush1.msra.mxu0 0.0
        %5176 = vmatprep.subr.mxu0 0.0
        %5177 = vmatpush1.msra.mxu0 0.0
        %5178 = vmatprep.subr.mxu0 0.0
        %5179 = vmatpush1.msra.mxu0 0.0
        %5180 = vmatprep.subr.mxu0 0.0
        %5181 = vmatpush1.msra.mxu0 0.0
        %5182 = vmatprep.subr.mxu0 0.0
        %5183 = vmatpush1.msra.mxu0 0.0
        %5184 = vmatprep.subr.mxu0 0.0
        %5185 = vmatpush1.msra.mxu0 0.0
        %5186 = vmatprep.subr.mxu0 0.0
        %5187 = vmatpush1.msra.mxu0 0.0
        %5188 = vmatprep.subr.mxu0 0.0
        %5189 = vmatpush1.msra.mxu0 0.0
        %5190 = vmatprep.subr.mxu0 0.0
        %5191 = vmatpush1.msra.mxu0 0.0
        %5192 = vmatprep.subr.mxu0 0.0
        %5193 = vmatpush1.msra.mxu0 0.0
        %5194 = vmatprep.subr.mxu0 0.0
        %5195 = vmatpush1.msra.mxu0 0.0
        %5196 = vmatprep.subr.mxu0 0.0
        %5197 = vmatpush1.msra.mxu0 0.0
        %5198 = vmatprep.subr.mxu0 0.0
        %5199 = vmatpush1.msra.mxu0 0.0
        %5200 = vmatprep.mubr.f32.mxu0 0.0
        %v5201 = vand.u32 %v5053, 4294901760
        %5202 = vmatmul.mubr.f32.gmra.mrb[0].mxu0 %v5201
        %v5203 = vpop.f32.mrb[0].mxu0
        %v5204 = vadd.f32 %v5128, %v5203
        %v5205 = vpop.f32.mrb[0].mxu0
        %5206 = vdwg.mxu0
        %5207 = vmatprep.subr.mxu0 0.0
        %v5208 = vand.u32 %v1316, 4294901760
        %v5209 = vsub.f32 %v1316, %v5208
        %5210 = vmatpush1.msra.mxu0 %v5209
        %5211 = vmatprep.subr.mxu0 0.0
        %5212 = vmatpush1.msra.mxu0 0.0
        %5213 = vmatprep.subr.mxu0 0.0
        %5214 = vmatpush1.msra.mxu0 0.0
        %5215 = vmatprep.subr.mxu0 0.0
        %5216 = vmatpush1.msra.mxu0 0.0
        %5217 = vmatprep.subr.mxu0 0.0
        %5218 = vmatpush1.msra.mxu0 0.0
        %5219 = vmatprep.subr.mxu0 0.0
        %5220 = vmatpush1.msra.mxu0 0.0
        %5221 = vmatprep.subr.mxu0 0.0
        %5222 = vmatpush1.msra.mxu0 0.0
        %5223 = vmatprep.subr.mxu0 0.0
        %5224 = vmatpush1.msra.mxu0 0.0
        %5225 = vmatprep.subr.mxu0 0.0
        %5226 = vmatpush1.msra.mxu0 0.0
        %5227 = vmatprep.subr.mxu0 0.0
        %5228 = vmatpush1.msra.mxu0 0.0
        %5229 = vmatprep.subr.mxu0 0.0
        %5230 = vmatpush1.msra.mxu0 0.0
        %5231 = vmatprep.subr.mxu0 0.0
        %5232 = vmatpush1.msra.mxu0 0.0
        %5233 = vmatprep.subr.mxu0 0.0
        %5234 = vmatpush1.msra.mxu0 0.0
        %5235 = vmatprep.subr.mxu0 0.0
        %5236 = vmatpush1.msra.mxu0 0.0
        %5237 = vmatprep.subr.mxu0 0.0
        %5238 = vmatpush1.msra.mxu0 0.0
        %5239 = vmatprep.subr.mxu0 0.0
        %5240 = vmatpush1.msra.mxu0 0.0
        %5241 = vmatprep.subr.mxu0 0.0
        %5242 = vmatpush1.msra.mxu0 0.0
        %5243 = vmatprep.subr.mxu0 0.0
        %5244 = vmatpush1.msra.mxu0 0.0
        %5245 = vmatprep.subr.mxu0 0.0
        %5246 = vmatpush1.msra.mxu0 0.0
        %5247 = vmatprep.subr.mxu0 0.0
        %5248 = vmatpush1.msra.mxu0 0.0
        %5249 = vmatprep.subr.mxu0 0.0
        %5250 = vmatpush1.msra.mxu0 0.0
        %5251 = vmatprep.subr.mxu0 0.0
        %5252 = vmatpush1.msra.mxu0 0.0
        %5253 = vmatprep.subr.mxu0 0.0
        %5254 = vmatpush1.msra.mxu0 0.0
        %5255 = vmatprep.subr.mxu0 0.0
        %5256 = vmatpush1.msra.mxu0 0.0
        %5257 = vmatprep.subr.mxu0 0.0
        %5258 = vmatpush1.msra.mxu0 0.0
        %5259 = vmatprep.subr.mxu0 0.0
        %5260 = vmatpush1.msra.mxu0 0.0
        %5261 = vmatprep.subr.mxu0 0.0
        %5262 = vmatpush1.msra.mxu0 0.0
        %5263 = vmatprep.subr.mxu0 0.0
        %5264 = vmatpush1.msra.mxu0 0.0
        %5265 = vmatprep.subr.mxu0 0.0
        %5266 = vmatpush1.msra.mxu0 0.0
        %5267 = vmatprep.subr.mxu0 0.0
        %5268 = vmatpush1.msra.mxu0 0.0
        %5269 = vmatprep.subr.mxu0 0.0
        %5270 = vmatpush1.msra.mxu0 0.0
        %5271 = vmatprep.subr.mxu0 0.0
        %5272 = vmatpush1.msra.mxu0 0.0
        %5273 = vmatprep.mubr.f32.mxu0 0.0
        %v5274 = vand.u32 %v5053, 4294901760
        %v5275 = vsub.f32 %v5053, %v5274
        %5276 = vmatmul.mubr.f32.gmra.mrb[0].mxu0 %v5275
        %v5277 = vpop.f32.mrb[0].mxu0
        %v5278 = vadd.f32 %v5204, %v5277
        %v5279 = vpop.f32.mrb[0].mxu0
        %5280 = vdwg.mxu0
        %5281 = vmatprep.subr.mxu0 0.0
        %v5282 = vand.u32 %v1316, 4294901760
        %5283 = vmatpush1.msra.mxu0 %v5282
        %5284 = vmatprep.subr.mxu0 0.0
        %5285 = vmatpush1.msra.mxu0 0.0
        %5286 = vmatprep.subr.mxu0 0.0
        %5287 = vmatpush1.msra.mxu0 0.0
        %5288 = vmatprep.subr.mxu0 0.0
        %5289 = vmatpush1.msra.mxu0 0.0
        %5290 = vmatprep.subr.mxu0 0.0
        %5291 = vmatpush1.msra.mxu0 0.0
        %5292 = vmatprep.subr.mxu0 0.0
        %5293 = vmatpush1.msra.mxu0 0.0
        %5294 = vmatprep.subr.mxu0 0.0
        %5295 = vmatpush1.msra.mxu0 0.0
        %5296 = vmatprep.subr.mxu0 0.0
        %5297 = vmatpush1.msra.mxu0 0.0
        %5298 = vmatprep.subr.mxu0 0.0
        %5299 = vmatpush1.msra.mxu0 0.0
        %5300 = vmatprep.subr.mxu0 0.0
        %5301 = vmatpush1.msra.mxu0 0.0
        %5302 = vmatprep.subr.mxu0 0.0
        %5303 = vmatpush1.msra.mxu0 0.0
        %5304 = vmatprep.subr.mxu0 0.0
        %5305 = vmatpush1.msra.mxu0 0.0
        %5306 = vmatprep.subr.mxu0 0.0
        %5307 = vmatpush1.msra.mxu0 0.0
        %5308 = vmatprep.subr.mxu0 0.0
        %5309 = vmatpush1.msra.mxu0 0.0
        %5310 = vmatprep.subr.mxu0 0.0
        %5311 = vmatpush1.msra.mxu0 0.0
        %5312 = vmatprep.subr.mxu0 0.0
        %5313 = vmatpush1.msra.mxu0 0.0
        %5314 = vmatprep.subr.mxu0 0.0
        %5315 = vmatpush1.msra.mxu0 0.0
        %5316 = vmatprep.subr.mxu0 0.0
        %5317 = vmatpush1.msra.mxu0 0.0
        %5318 = vmatprep.subr.mxu0 0.0
        %5319 = vmatpush1.msra.mxu0 0.0
        %5320 = vmatprep.subr.mxu0 0.0
        %5321 = vmatpush1.msra.mxu0 0.0
        %5322 = vmatprep.subr.mxu0 0.0
        %5323 = vmatpush1.msra.mxu0 0.0
        %5324 = vmatprep.subr.mxu0 0.0
        %5325 = vmatpush1.msra.mxu0 0.0
        %5326 = vmatprep.subr.mxu0 0.0
        %5327 = vmatpush1.msra.mxu0 0.0
        %5328 = vmatprep.subr.mxu0 0.0
        %5329 = vmatpush1.msra.mxu0 0.0
        %5330 = vmatprep.subr.mxu0 0.0
        %5331 = vmatpush1.msra.mxu0 0.0
        %5332 = vmatprep.subr.mxu0 0.0
        %5333 = vmatpush1.msra.mxu0 0.0
        %5334 = vmatprep.subr.mxu0 0.0
        %5335 = vmatpush1.msra.mxu0 0.0
        %5336 = vmatprep.subr.mxu0 0.0
        %5337 = vmatpush1.msra.mxu0 0.0
        %5338 = vmatprep.subr.mxu0 0.0
        %5339 = vmatpush1.msra.mxu0 0.0
        %5340 = vmatprep.subr.mxu0 0.0
        %5341 = vmatpush1.msra.mxu0 0.0
        %5342 = vmatprep.subr.mxu0 0.0
        %5343 = vmatpush1.msra.mxu0 0.0
        %5344 = vmatprep.subr.mxu0 0.0
        %5345 = vmatpush1.msra.mxu0 0.0
        %5346 = vmatprep.mubr.f32.mxu0 0.0
        %v5347 = vand.u32 %v5053, 4294901760
        %v5348 = vsub.f32 %v5053, %v5347
        %v5349 = vand.u32 %v5348, 4294901760
        %5350 = vmatmul.mubr.f32.gmra.mrb[0].mxu0 %v5349
        %v5351 = vpop.f32.mrb[0].mxu0
        %v5352 = vadd.f32 %v5278, %v5351
        %v5353 = vpop.f32.mrb[0].mxu0
        %5354 = vdwg.mxu0
        %5355 = vmatprep.subr.mxu0 0.0
        %v5356 = vand.u32 %v1316, 4294901760
        %v5357 = vsub.f32 %v1316, %v5356
        %v5358 = vand.u32 %v5357, 4294901760
        %5359 = vmatpush1.msra.mxu0 %v5358
        %5360 = vmatprep.subr.mxu0 0.0
        %5361 = vmatpush1.msra.mxu0 0.0
        %5362 = vmatprep.subr.mxu0 0.0
        %5363 = vmatpush1.msra.mxu0 0.0
        %5364 = vmatprep.subr.mxu0 0.0
        %5365 = vmatpush1.msra.mxu0 0.0
        %5366 = vmatprep.subr.mxu0 0.0
        %5367 = vmatpush1.msra.mxu0 0.0
        %5368 = vmatprep.subr.mxu0 0.0
        %5369 = vmatpush1.msra.mxu0 0.0
        %5370 = vmatprep.subr.mxu0 0.0
        %5371 = vmatpush1.msra.mxu0 0.0
        %5372 = vmatprep.subr.mxu0 0.0
        %5373 = vmatpush1.msra.mxu0 0.0
        %5374 = vmatprep.subr.mxu0 0.0
        %5375 = vmatpush1.msra.mxu0 0.0
        %5376 = vmatprep.subr.mxu0 0.0
        %5377 = vmatpush1.msra.mxu0 0.0
        %5378 = vmatprep.subr.mxu0 0.0
        %5379 = vmatpush1.msra.mxu0 0.0
        %5380 = vmatprep.subr.mxu0 0.0
        %5381 = vmatpush1.msra.mxu0 0.0
        %5382 = vmatprep.subr.mxu0 0.0
        %5383 = vmatpush1.msra.mxu0 0.0
        %5384 = vmatprep.subr.mxu0 0.0
        %5385 = vmatpush1.msra.mxu0 0.0
        %5386 = vmatprep.subr.mxu0 0.0
        %5387 = vmatpush1.msra.mxu0 0.0
        %5388 = vmatprep.subr.mxu0 0.0
        %5389 = vmatpush1.msra.mxu0 0.0
        %5390 = vmatprep.subr.mxu0 0.0
        %5391 = vmatpush1.msra.mxu0 0.0
        %5392 = vmatprep.subr.mxu0 0.0
        %5393 = vmatpush1.msra.mxu0 0.0
        %5394 = vmatprep.subr.mxu0 0.0
        %5395 = vmatpush1.msra.mxu0 0.0
        %5396 = vmatprep.subr.mxu0 0.0
        %5397 = vmatpush1.msra.mxu0 0.0
        %5398 = vmatprep.subr.mxu0 0.0
        %5399 = vmatpush1.msra.mxu0 0.0
        %5400 = vmatprep.subr.mxu0 0.0
        %5401 = vmatpush1.msra.mxu0 0.0
        %5402 = vmatprep.subr.mxu0 0.0
        %5403 = vmatpush1.msra.mxu0 0.0
        %5404 = vmatprep.subr.mxu0 0.0
        %5405 = vmatpush1.msra.mxu0 0.0
        %5406 = vmatprep.subr.mxu0 0.0
        %5407 = vmatpush1.msra.mxu0 0.0
        %5408 = vmatprep.subr.mxu0 0.0
        %5409 = vmatpush1.msra.mxu0 0.0
        %5410 = vmatprep.subr.mxu0 0.0
        %5411 = vmatpush1.msra.mxu0 0.0
        %5412 = vmatprep.subr.mxu0 0.0
        %5413 = vmatpush1.msra.mxu0 0.0
        %5414 = vmatprep.subr.mxu0 0.0
        %5415 = vmatpush1.msra.mxu0 0.0
        %5416 = vmatprep.subr.mxu0 0.0
        %5417 = vmatpush1.msra.mxu0 0.0
        %5418 = vmatprep.subr.mxu0 0.0
        %5419 = vmatpush1.msra.mxu0 0.0
        %5420 = vmatprep.subr.mxu0 0.0
        %5421 = vmatpush1.msra.mxu0 0.0
        %5422 = vmatprep.mubr.f32.mxu0 0.0
        %v5423 = vand.u32 %v5053, 4294901760
        %5424 = vmatmul.mubr.f32.gmra.mrb[0].mxu0 %v5423
        %v5425 = vpop.f32.mrb[0].mxu0
        %v5426 = vadd.f32 %v5352, %v5425
        %v5427 = vpop.f32.mrb[0].mxu0
        %5428 = vdwg.mxu0
        %5429 = vmatprep.subr.mxu0 0.0
        %v5430 = vand.u32 %v1316, 4294901760
        %5431 = vmatpush1.msra.mxu0 %v5430
        %5432 = vmatprep.subr.mxu0 0.0
        %5433 = vmatpush1.msra.mxu0 0.0
        %5434 = vmatprep.subr.mxu0 0.0
        %5435 = vmatpush1.msra.mxu0 0.0
        %5436 = vmatprep.subr.mxu0 0.0
        %5437 = vmatpush1.msra.mxu0 0.0
        %5438 = vmatprep.subr.mxu0 0.0
        %5439 = vmatpush1.msra.mxu0 0.0
        %5440 = vmatprep.subr.mxu0 0.0
        %5441 = vmatpush1.msra.mxu0 0.0
        %5442 = vmatprep.subr.mxu0 0.0
        %5443 = vmatpush1.msra.mxu0 0.0
        %5444 = vmatprep.subr.mxu0 0.0
        %5445 = vmatpush1.msra.mxu0 0.0
        %5446 = vmatprep.subr.mxu0 0.0
        %5447 = vmatpush1.msra.mxu0 0.0
        %5448 = vmatprep.subr.mxu0 0.0
        %5449 = vmatpush1.msra.mxu0 0.0
        %5450 = vmatprep.subr.mxu0 0.0
        %5451 = vmatpush1.msra.mxu0 0.0
        %5452 = vmatprep.subr.mxu0 0.0
        %5453 = vmatpush1.msra.mxu0 0.0
        %5454 = vmatprep.subr.mxu0 0.0
        %5455 = vmatpush1.msra.mxu0 0.0
        %5456 = vmatprep.subr.mxu0 0.0
        %5457 = vmatpush1.msra.mxu0 0.0
        %5458 = vmatprep.subr.mxu0 0.0
        %5459 = vmatpush1.msra.mxu0 0.0
        %5460 = vmatprep.subr.mxu0 0.0
        %5461 = vmatpush1.msra.mxu0 0.0
        %5462 = vmatprep.subr.mxu0 0.0
        %5463 = vmatpush1.msra.mxu0 0.0
        %5464 = vmatprep.subr.mxu0 0.0
        %5465 = vmatpush1.msra.mxu0 0.0
        %5466 = vmatprep.subr.mxu0 0.0
        %5467 = vmatpush1.msra.mxu0 0.0
        %5468 = vmatprep.subr.mxu0 0.0
        %5469 = vmatpush1.msra.mxu0 0.0
        %5470 = vmatprep.subr.mxu0 0.0
        %5471 = vmatpush1.msra.mxu0 0.0
        %5472 = vmatprep.subr.mxu0 0.0
        %5473 = vmatpush1.msra.mxu0 0.0
        %5474 = vmatprep.subr.mxu0 0.0
        %5475 = vmatpush1.msra.mxu0 0.0
        %5476 = vmatprep.subr.mxu0 0.0
        %5477 = vmatpush1.msra.mxu0 0.0
        %5478 = vmatprep.subr.mxu0 0.0
        %5479 = vmatpush1.msra.mxu0 0.0
        %5480 = vmatprep.subr.mxu0 0.0
        %5481 = vmatpush1.msra.mxu0 0.0
        %5482 = vmatprep.subr.mxu0 0.0
        %5483 = vmatpush1.msra.mxu0 0.0
        %5484 = vmatprep.subr.mxu0 0.0
        %5485 = vmatpush1.msra.mxu0 0.0
        %5486 = vmatprep.subr.mxu0 0.0
        %5487 = vmatpush1.msra.mxu0 0.0
        %5488 = vmatprep.subr.mxu0 0.0
        %5489 = vmatpush1.msra.mxu0 0.0
        %5490 = vmatprep.subr.mxu0 0.0
        %5491 = vmatpush1.msra.mxu0 0.0
        %5492 = vmatprep.subr.mxu0 0.0
        %5493 = vmatpush1.msra.mxu0 0.0
        %5494 = vmatprep.mubr.f32.mxu0 0.0
        %v5495 = vand.u32 %v5053, 4294901760
        %5496 = vmatmul.mubr.f32.gmra.mrb[0].mxu0 %v5495
        %v5497 = vpop.f32.mrb[0].mxu0
        %v5498 = vadd.f32 %v5426, %v5497
        %v5499 = vpop.f32.mrb[0].mxu0
        %5500 = vdwg.mxu0
        %v5501 = vrsqrt.pop %v5498
        %v5502 = vmul.f32 %v5501, %v3297
        %v5503 = vlaneseq
        %v5504 = vshrl.u32 %v5503, 7
        %v5505 = vsub.s32 0, %v5504
        %v5506 = vrot.slane %v5502, %v5505
        %v5507 = vmul.f32 %v4400, %v5506
        %v5508 = vmul.f32 %v4401, %v5506
        %v5509 = vlaneseq
        %v5510 = vshrl.u32 %v5509, 7
        %v5511 = vsub.s32 0, %v5510
        %v5512 = vrot.slane %v3298, %v5511
        %v5513 = vadd.f32 %v5507, %v5512
        %v5514 = vadd.f32 %v5508, %v5512
        %v5515 = vxor.u32 %v5513, 2147483648
        %v5516 = vxor.u32 %v5514, 2147483648
        %v5517 = vmul.f32 %v5515, 1.442695
        %v5518 = vpow.pop %v5517
        %v5519 = vmul.f32 %v5516, 1.442695
        %v5520 = vpow.pop %v5519
        %v5521 = vadd.f32 %v5518, 1.0
        %v5522 = vadd.f32 %v5520, 1.0
        %v5523 = vrcp.pop %v5521
        %v5524 = vmul.f32 1.0, %v5523
        %v5525 = vrcp.pop %v5522
        %v5526 = vmul.f32 1.0, %v5525
        %v5527 = vmul.f32 %v5513, %v5524
        %v5528 = vmul.f32 %v5514, %v5526
        %v5529 = vadd.f32 %v5527, %v2991
        %v5530 = vadd.f32 %v5528, %v2996
        %5531 = vst [vmem:[%s341] sm:$0xff] %v5529
        %5532 = vst [vmem:[%s341 + $0x8] sm:$0xff] %v5530
        %s5533 = sand.u32 %s210, 1
        %s5534 = scalar_lea.sflag [#allocation4], %s5533
        %s5535 = sand.u32 %s210, 1
        %s5536 = smul.addr %s5535, 16
        %s5537 = scalar_lea.vmem [#allocation7], %s5536
        // Predicated region
        $region61: #{tpu_custom_call.1} parent=51 // pred_check
          %p5538 = pneg %p220
        $region62: #{tpu_custom_call.1} parent=51 // pred_check_branch
          %5540 = sbr.rel (%p5538) target = $region64
        $region63: #{tpu_custom_call.1} parent=51 // pred_region
          %s5542 = ssub.s32 256, 256
          %5543 = vsyncadd %s5534, %s5542
          %s5544 = smul.addr %s24, 2
          %s5545 = smul.addr %s5544, 128
          %s5546 = scalar_lea.hbm %s8, %s5545
          %s5547 = sshll.u32 %s5537, 4
          %s5548 = int_to_ptr.vmem [resolvable:$true] %s5547
          %5553 = dma.vmem_to_hbm [thread:$0]  %s5548, 256, %s5546, %s5534, 128, 128, 8
        $region64: #{tpu_custom_call.1} parent=51 // pred_fallthru
          _
      $region52: #{tpu_custom_call.1} parent=5 // pred_fallthru
        _
      %p5554 = scmp.le.s32.totalorder 2, %s19
      // Predicated region
      $region65: #{tpu_custom_call.1} parent=5 // pred_check
        %p5555 = pneg %p5554
      $region66: #{tpu_custom_call.1} parent=5 // pred_check_branch
        %5557 = sbr.rel (%p5555) target = $region68
      $region67: #{tpu_custom_call.1} parent=5 // pred_region
        %s5558 = ssub.s32 %s19, 2
        // Predicated region
        $region69: #{tpu_custom_call.1} parent=67 // pred_check
          %p5559 = pneg %p226
        $region70: #{tpu_custom_call.1} parent=67 // pred_check_branch
          %5561 = sbr.rel (%p5559) target = $region72
        $region71: #{tpu_custom_call.1} parent=67 // pred_region
          %s5562 = sand.u32 %s211, 1
          %s5563 = scalar_lea.sflag [#allocation4], %s5562
          %s5564 = sand.u32 %s211, 1
          %s5565 = smul.addr %s5564, 16
          %s5566 = scalar_lea.vmem [#allocation7], %s5565
          %5567 = dma.done %s5563, 256
        $region72: #{tpu_custom_call.1} parent=67 // pred_fallthru
          _
      $region68: #{tpu_custom_call.1} parent=5 // pred_fallthru
        _
    $region6: #{tpu_custom_call.1} parent=1 // loop_footer
      %s23 = sadd.s32 1, %s19
    $region7: #{tpu_custom_call.1} parent=1 // loop_footer_branch
      %18 = sbr.rel target = $region3
    $region8: #{tpu_custom_call.1} parent=1 // loop_exit
      _
    %5568 = vsyncpa [#allocation3], 1
    %s5569 = scalar_lea.sflag [#allocation3], 1
    %5570 = vsyncpa %s5569, 1
    %5571 = vsyncpa [#allocation6], 1
    %5572 = vsyncpa [#allocation4], 1
    %s5573 = scalar_lea.sflag [#allocation4], 1
    %5574 = vsyncpa %s5573, 1

</llo_original>
